<compile_context>
chip_gen: v5e
topology: v5e:2x2
jax: 0.10.0
libtpu: 0.0.40
codegen_flags: <defaults>
</compile_context>

<pallas_src>
import jax
import jax.numpy as jnp
from jax import lax
from jax.experimental import pallas as pl
from jax.experimental.pallas import tpu as pltpu

H = W = 28                     # image size
HP, WP = H + 2, W + 2          # zero-padded ("SAME") extents
C_HID = 16                     # hidden channels
C_GRP = 8                      # channels per sublane group
N_GRP = C_HID // C_GRP         # 2 channel groups
BLOCK_N = 128                  # batch tile -> 128-wide lane axis


def autoenc_kernel(x_ref, w1_ref, b1_ref, w2_ref, b2_ref, out_ref, enc_ref):
    """Fused Conv2d(1,16,3,1,1)+ReLU -> ConvTranspose2d(16,1,3,1,1)+ReLU.

    x_ref  : (HP, WP, 8, B)   padded input, value replicated over 8 sublanes
    w1_ref : (9, 2, 8, B)     conv1 weights  [tap, ch_group, ch_in_group, lane]
    b1_ref : (2, 8, B)        conv1 bias
    w2_ref : (9, 2, 8, B)     flipped / (in,out)-swapped conv-transpose weights
    b2_ref : (1,)             conv2 bias (SMEM scalar)
    out_ref: (H, W, B)        decoder output block
    enc_ref: (HP, WP, 16, B)  scratch: padded encoder activations (ch on sublanes)
    """
    B = out_ref.shape[-1]
    b2v = b2_ref[0]

    # ---- zero only the 1-pixel halo of the encoder buffer --------------------
    zrow = jnp.zeros((WP, C_HID, B), jnp.float32)
    zcol = jnp.zeros((HP, C_HID, B), jnp.float32)
    enc_ref[0, :, :, :] = zrow
    enc_ref[HP - 1, :, :, :] = zrow
    enc_ref[:, 0, :, :] = zcol
    enc_ref[:, WP - 1, :, :] = zcol

    # ---- encoder: Conv2d(1,16,3,1,1) + ReLU ----------------------------------
    # One output row at a time, 8 channels (one sublane group) per pass.
    # Accumulator (W, 8, B) = 28 vregs stays register-resident over the 9 taps.
    def enc_row(r, carry):
        for hf in range(N_GRP):                                   # static
            # tap (0,0) peeled: init accumulator with its product (no zero/bias fill)
            acc = x_ref[r, pl.ds(0, W), :, :] * w1_ref[0, hf]
            for t in range(1, 9):                                 # static unroll
                dh, dw = t // 3, t % 3
                acc = acc + x_ref[r + dh, pl.ds(dw, W), :, :] * w1_ref[t, hf]
            # bias + ReLU fused into the single aligned store of the row
            enc_ref[r + 1, pl.ds(1, W), pl.ds(hf * C_GRP, C_GRP), :] = jnp.maximum(
                acc + b1_ref[hf], 0.0)
        return carry

    lax.fori_loop(0, H, enc_row, 0)

    # ---- decoder: ConvTranspose2d(16,1,3,1,1) + ReLU (as flipped conv) -------
    # Accumulator (W, 8, B) = 28 vregs register-resident over all 18
    # (tap, channel-group) products; one sublane reduce per output row.
    def dec_row(r, carry):
        acc = enc_ref[r, pl.ds(0, W), pl.ds(0, C_GRP), :] * w2_ref[0, 0]  # peeled
        for t in range(9):                                        # static unroll
            dh, dw = t // 3, t % 3
            for hf in range(N_GRP):
                if t == 0 and hf == 0:
                    continue
                patch = enc_ref[r + dh, pl.ds(dw, W), pl.ds(hf * C_GRP, C_GRP), :]
                acc = acc + patch * w2_ref[t, hf]
        row = jnp.sum(acc, axis=1) + b2v                          # 8-wide sublane reduce
        out_ref[r, :, :] = jnp.maximum(row, 0.0)
        return carry

    lax.fori_loop(0, H, dec_row, 0)


def _pack_weights(w9x16):
    """(9, 16) tap-major weights -> (9, 2, 8, BLOCK_N) lane-broadcast vreg tiles."""
    return jnp.broadcast_to(
        w9x16.reshape(9, N_GRP, C_GRP, 1), (9, N_GRP, C_GRP, BLOCK_N)
    ).astype(jnp.float32)


@jax.jit
def neuralnet_forward(x, w1_hwio, b1, w2eq_hwio, b2):
    """x: (N, 784) f32 -> (N, 784) f32 (same semantics as NeuralNet.forward)."""
    n = x.shape[0]
    n_pad = ((n + BLOCK_N - 1) // BLOCK_N) * BLOCK_N

    # layout glue (plain XLA): (N,784) -> (28,28,N), zero-pad spatially and on
    # the batch tail, replicate the single input channel over 8 sublanes
    # -> (30, 30, 8, n_pad).  Every kernel load is then a dense aligned vreg.
    xt = jnp.transpose(x.reshape(n, H, W), (1, 2, 0))
    xt = jnp.pad(xt, ((1, 1), (1, 1), (0, n_pad - n)))
    xt = jnp.broadcast_to(xt[:, :, None, :], (HP, WP, C_GRP, n_pad)).astype(jnp.float32)

    # parameter glue: tap-major (9, 16) -> (9, 2, 8, BLOCK_N) weight vreg tiles
    w1t = _pack_weights(w1_hwio[:, :, 0, :].reshape(9, C_HID))
    w2t = _pack_weights(w2eq_hwio[:, :, :, 0].reshape(9, C_HID))
    b1t = jnp.broadcast_to(b1.reshape(N_GRP, C_GRP, 1),
                           (N_GRP, C_GRP, BLOCK_N)).astype(jnp.float32)
    b2s = b2.reshape(1).astype(jnp.float32)

    out = pl.pallas_call(
        autoenc_kernel,
        out_shape=jax.ShapeDtypeStruct((H, W, n_pad), jnp.float32),
        grid=(n_pad // BLOCK_N,),
        in_specs=[
            pl.BlockSpec((HP, WP, C_GRP, BLOCK_N), lambda i: (0, 0, 0, i)),
            pl.BlockSpec((9, N_GRP, C_GRP, BLOCK_N), lambda i: (0, 0, 0, 0)),
            pl.BlockSpec((N_GRP, C_GRP, BLOCK_N), lambda i: (0, 0, 0)),
            pl.BlockSpec((9, N_GRP, C_GRP, BLOCK_N), lambda i: (0, 0, 0, 0)),
            pl.BlockSpec(memory_space=pltpu.MemorySpace.SMEM),
        ],
        out_specs=pl.BlockSpec((H, W, BLOCK_N), lambda i: (0, 0, i)),
        scratch_shapes=[
            pltpu.VMEM((HP, WP, C_HID, BLOCK_N), jnp.float32),   # enc_ref
        ],
        compiler_params=pltpu.CompilerParams(
            dimension_semantics=("parallel",),
            vmem_limit_bytes=32 * 1024 * 1024),
    )(xt, w1t, b1t, w2t, b2s)

    # back to the PyTorch layout: (28, 28, n_pad) -> (N, 784)
    return jnp.transpose(out, (2, 0, 1))[:n].reshape(n, H * W)


def init_params(key):
    """Deterministic init matching the PyTorch layer shapes (not its RNG)."""
    k1, k2, k3, k4 = jax.random.split(key, 4)
    # Conv2d(1, 16, 3): weight OIHW = (16, 1, 3, 3), bias (16,)
    bound1 = 1.0 / jnp.sqrt(1.0 * 3 * 3)
    w1_oihw = jax.random.uniform(k1, (16, 1, 3, 3), jnp.float32, -bound1, bound1)
    b1 = jax.random.uniform(k2, (16,), jnp.float32, -bound1, bound1)
    # ConvTranspose2d(16, 1, 3): weight (in, out, kH, kW) = (16, 1, 3, 3), bias (1,)
    bound2 = 1.0 / jnp.sqrt(16.0 * 3 * 3)
    wt = jax.random.uniform(k3, (16, 1, 3, 3), jnp.float32, -bound2, bound2)
    b2 = jax.random.uniform(k4, (1,), jnp.float32, -bound2, bound2)

    # kernel layouts
    w1_hwio = jnp.transpose(w1_oihw, (2, 3, 1, 0))                      # (3,3,1,16)
    # conv_transpose(stride=1, pad=1) == conv(flip(W), pad=1) with (in,out) swapped
    w2eq_hwio = jnp.transpose(jnp.flip(wt, axis=(2, 3)), (2, 3, 0, 1))  # (3,3,16,1)
    return w1_hwio, b1, w2eq_hwio, b2


def reference_forward(x, w1_hwio, b1, w2eq_hwio, b2):
    """Plain-JAX reference (lax.conv) for correctness checking."""
    n = x.shape[0]
    x_nhwc = x.reshape(n, H, W, 1)
    dn = ("NHWC", "HWIO", "NHWC")
    enc = jax.lax.conv_general_dilated(x_nhwc, w1_hwio, (1, 1), "SAME",
                                       dimension_numbers=dn) + b1
    enc = jnp.maximum(enc, 0.0)
    dec = jax.lax.conv_general_dilated(enc, w2eq_hwio, (1, 1), "SAME",
                                       dimension_numbers=dn) + b2
    dec = jnp.maximum(dec, 0.0)
    return dec.reshape(n, H * W)


if __name__ == "__main__":
    key = jax.random.PRNGKey(0)
    kx, kp = jax.random.split(key)

    N = 8
    x = jax.random.uniform(kx, (N, H * W), jnp.float32)    # (N, 784), like MNIST in [0,1]
    params = init_params(kp)

    y = neuralnet_forward(x, *params)
    y = jax.block_until_ready(y)

    y_ref = reference_forward(x, *params)
    assert y.shape == (N, H * W)
    assert jnp.allclose(y, y_ref, atol=1e-4, rtol=1e-4), "mismatch vs JAX reference"

    print("KERNEL_OK")
</pallas_src>

<mosaic_0001>
module attributes {stable_mosaic.version = 11 : i64} {
  func.func @autoenc_kernel(%arg0: i32, %arg1: memref<30x30x8x128xf32, #tpu.memory_space<vmem>>, %arg2: memref<9x2x8x128xf32, #tpu.memory_space<vmem>>, %arg3: memref<2x8x128xf32, #tpu.memory_space<vmem>>, %arg4: memref<9x2x8x128xf32, #tpu.memory_space<vmem>>, %arg5: memref<1xf32, #tpu.memory_space<smem>>, %arg6: memref<28x28x128xf32, #tpu.memory_space<vmem>>, %arg7: memref<30x30x16x128xf32, #tpu.memory_space<vmem>>) attributes {dimension_semantics = [#tpu.dimension_semantics<parallel>], iteration_bounds = array<i64: 1>, scalar_prefetch = 0 : i64, scratch_operands = 1 : i64, tpu.core_type = #tpu.core_type<tc>, window_params = [{transform_indices = @transform_0, window_bounds = array<i64: 30, 30, 8, 128>}, {pipeline_mode = #tpu.pipeline_mode<synchronous>, transform_indices = @transform_1, window_bounds = array<i64: 9, 2, 8, 128>}, {pipeline_mode = #tpu.pipeline_mode<synchronous>, transform_indices = @transform_2, window_bounds = array<i64: 2, 8, 128>}, {pipeline_mode = #tpu.pipeline_mode<synchronous>, transform_indices = @transform_3, window_bounds = array<i64: 9, 2, 8, 128>}, {transform_indices = @transform_4, window_bounds = array<i64: 1>}, {transform_indices = @transform_5, window_bounds = array<i64: 28, 28, 128>}]} {
    %c0 = arith.constant 0 : index
    %0 = memref.load %arg5[%c0] : memref<1xf32, #tpu.memory_space<smem>>
    %cst = arith.constant 0.000000e+00 : f32
    %1 = vector.broadcast %cst : f32 to vector<30x16x128xf32>
    %cst_0 = arith.constant 0.000000e+00 : f32
    %2 = vector.broadcast %cst_0 : f32 to vector<30x16x128xf32>
    %c0_1 = arith.constant 0 : index
    %c0_2 = arith.constant 0 : index
    %c0_3 = arith.constant 0 : index
    %c0_4 = arith.constant 0 : index
    %3 = vector.load %arg7[%c0_1, %c0_2, %c0_3, %c0_4] : memref<30x30x16x128xf32, #tpu.memory_space<vmem>>, vector<1x30x16x128xf32>
    %4 = vector.shape_cast %3 : vector<1x30x16x128xf32> to vector<30x16x128xf32>
    %5 = vector.shape_cast %1 : vector<30x16x128xf32> to vector<1x30x16x128xf32>
    tpu.vector_store %arg7[%c0_1, %c0_2, %c0_3, %c0_4], %5 {strides = array<i32>} : memref<30x30x16x128xf32, #tpu.memory_space<vmem>>, vector<1x30x16x128xf32>,
    %c29 = arith.constant 29 : index
    %c0_5 = arith.constant 0 : index
    %c0_6 = arith.constant 0 : index
    %c0_7 = arith.constant 0 : index
    %6 = vector.load %arg7[%c29, %c0_5, %c0_6, %c0_7] : memref<30x30x16x128xf32, #tpu.memory_space<vmem>>, vector<1x30x16x128xf32>
    %7 = vector.shape_cast %6 : vector<1x30x16x128xf32> to vector<30x16x128xf32>
    %8 = vector.shape_cast %1 : vector<30x16x128xf32> to vector<1x30x16x128xf32>
    tpu.vector_store %arg7[%c29, %c0_5, %c0_6, %c0_7], %8 {strides = array<i32>} : memref<30x30x16x128xf32, #tpu.memory_space<vmem>>, vector<1x30x16x128xf32>,
    %c0_8 = arith.constant 0 : index
    %c0_9 = arith.constant 0 : index
    %c0_10 = arith.constant 0 : index
    %c0_11 = arith.constant 0 : index
    %9 = vector.load %arg7[%c0_8, %c0_9, %c0_10, %c0_11] : memref<30x30x16x128xf32, #tpu.memory_space<vmem>>, vector<30x1x16x128xf32>
    %10 = vector.shape_cast %9 : vector<30x1x16x128xf32> to vector<30x16x128xf32>
    %11 = vector.shape_cast %2 : vector<30x16x128xf32> to vector<30x1x16x128xf32>
    tpu.vector_store %arg7[%c0_8, %c0_9, %c0_10, %c0_11], %11 {strides = array<i32>} : memref<30x30x16x128xf32, #tpu.memory_space<vmem>>, vector<30x1x16x128xf32>,
    %c0_12 = arith.constant 0 : index
    %c29_13 = arith.constant 29 : index
    %c0_14 = arith.constant 0 : index
    %c0_15 = arith.constant 0 : index
    %12 = vector.load %arg7[%c0_12, %c29_13, %c0_14, %c0_15] : memref<30x30x16x128xf32, #tpu.memory_space<vmem>>, vector<30x1x16x128xf32>
    %13 = vector.shape_cast %12 : vector<30x1x16x128xf32> to vector<30x16x128xf32>
    %14 = vector.shape_cast %2 : vector<30x16x128xf32> to vector<30x1x16x128xf32>
    tpu.vector_store %arg7[%c0_12, %c29_13, %c0_14, %c0_15], %14 {strides = array<i32>} : memref<30x30x16x128xf32, #tpu.memory_space<vmem>>, vector<30x1x16x128xf32>,
    %c0_i32 = arith.constant 0 : i32
    %c28_i32 = arith.constant 28 : i32
    %15 = arith.addi %c0_i32, %c28_i32 : i32
    %c1_i32 = arith.constant 1 : i32
    scf.for %arg8 = %c0_i32 to %15 step %c1_i32  : i32 {
      %17 = arith.index_cast %arg8 : i32 to index
      %c0_21 = arith.constant 0 : index
      %c0_22 = arith.constant 0 : index
      %c0_23 = arith.constant 0 : index
      %18 = vector.load %arg1[%17, %c0_21, %c0_22, %c0_23] : memref<30x30x8x128xf32, #tpu.memory_space<vmem>>, vector<1x28x8x128xf32>
      %19 = vector.shape_cast %18 : vector<1x28x8x128xf32> to vector<28x8x128xf32>
      %c0_24 = arith.constant 0 : index
      %c0_25 = arith.constant 0 : index
      %c0_26 = arith.constant 0 : index
      %c0_27 = arith.constant 0 : index
      %20 = vector.load %arg2[%c0_24, %c0_25, %c0_26, %c0_27] : memref<9x2x8x128xf32, #tpu.memory_space<vmem>>, vector<1x1x8x128xf32>
      %21 = vector.shape_cast %20 : vector<1x1x8x128xf32> to vector<8x128xf32>
      %22 = vector.shape_cast %21 : vector<8x128xf32> to vector<1x8x128xf32>
      %23 = vector.broadcast %22 : vector<1x8x128xf32> to vector<28x8x128xf32>
      %24 = arith.mulf %19, %23 : vector<28x8x128xf32>
      %c0_i32_28 = arith.constant 0 : i32
      %25 = arith.addi %arg8, %c0_i32_28 : i32
      %26 = arith.index_cast %25 : i32 to index
      %c1 = arith.constant 1 : index
      %c0_29 = arith.constant 0 : index
      %c0_30 = arith.constant 0 : index
      %27 = vector.load %arg1[%26, %c1, %c0_29, %c0_30] : memref<30x30x8x128xf32, #tpu.memory_space<vmem>>, vector<1x28x8x128xf32>
      %28 = vector.shape_cast %27 : vector<1x28x8x128xf32> to vector<28x8x128xf32>
      %c1_31 = arith.constant 1 : index
      %c0_32 = arith.constant 0 : index
      %c0_33 = arith.constant 0 : index
      %c0_34 = arith.constant 0 : index
      %29 = vector.load %arg2[%c1_31, %c0_32, %c0_33, %c0_34] : memref<9x2x8x128xf32, #tpu.memory_space<vmem>>, vector<1x1x8x128xf32>
      %30 = vector.shape_cast %29 : vector<1x1x8x128xf32> to vector<8x128xf32>
      %31 = vector.shape_cast %30 : vector<8x128xf32> to vector<1x8x128xf32>
      %32 = vector.broadcast %31 : vector<1x8x128xf32> to vector<28x8x128xf32>
      %33 = arith.mulf %28, %32 : vector<28x8x128xf32>
      %34 = arith.addf %24, %33 : vector<28x8x128xf32>
      %c0_i32_35 = arith.constant 0 : i32
      %35 = arith.addi %arg8, %c0_i32_35 : i32
      %36 = arith.index_cast %35 : i32 to index
      %c2 = arith.constant 2 : index
      %c0_36 = arith.constant 0 : index
      %c0_37 = arith.constant 0 : index
      %37 = vector.load %arg1[%36, %c2, %c0_36, %c0_37] : memref<30x30x8x128xf32, #tpu.memory_space<vmem>>, vector<1x28x8x128xf32>
      %38 = vector.shape_cast %37 : vector<1x28x8x128xf32> to vector<28x8x128xf32>
      %c2_38 = arith.constant 2 : index
      %c0_39 = arith.constant 0 : index
      %c0_40 = arith.constant 0 : index
      %c0_41 = arith.constant 0 : index
      %39 = vector.load %arg2[%c2_38, %c0_39, %c0_40, %c0_41] : memref<9x2x8x128xf32, #tpu.memory_space<vmem>>, vector<1x1x8x128xf32>
      %40 = vector.shape_cast %39 : vector<1x1x8x128xf32> to vector<8x128xf32>
      %41 = vector.shape_cast %40 : vector<8x128xf32> to vector<1x8x128xf32>
      %42 = vector.broadcast %41 : vector<1x8x128xf32> to vector<28x8x128xf32>
      %43 = arith.mulf %38, %42 : vector<28x8x128xf32>
      %44 = arith.addf %34, %43 : vector<28x8x128xf32>
      %c1_i32_42 = arith.constant 1 : i32
      %45 = arith.addi %arg8, %c1_i32_42 : i32
      %46 = arith.index_cast %45 : i32 to index
      %c0_43 = arith.constant 0 : index
      %c0_44 = arith.constant 0 : index
      %c0_45 = arith.constant 0 : index
      %47 = vector.load %arg1[%46, %c0_43, %c0_44, %c0_45] : memref<30x30x8x128xf32, #tpu.memory_space<vmem>>, vector<1x28x8x128xf32>
      %48 = vector.shape_cast %47 : vector<1x28x8x128xf32> to vector<28x8x128xf32>
      %c3 = arith.constant 3 : index
      %c0_46 = arith.constant 0 : index
      %c0_47 = arith.constant 0 : index
      %c0_48 = arith.constant 0 : index
      %49 = vector.load %arg2[%c3, %c0_46, %c0_47, %c0_48] : memref<9x2x8x128xf32, #tpu.memory_space<vmem>>, vector<1x1x8x128xf32>
      %50 = vector.shape_cast %49 : vector<1x1x8x128xf32> to vector<8x128xf32>
      %51 = vector.shape_cast %50 : vector<8x128xf32> to vector<1x8x128xf32>
      %52 = vector.broadcast %51 : vector<1x8x128xf32> to vector<28x8x128xf32>
      %53 = arith.mulf %48, %52 : vector<28x8x128xf32>
      %54 = arith.addf %44, %53 : vector<28x8x128xf32>
      %c1_i32_49 = arith.constant 1 : i32
      %55 = arith.addi %arg8, %c1_i32_49 : i32
      %56 = arith.index_cast %55 : i32 to index
      %c1_50 = arith.constant 1 : index
      %c0_51 = arith.constant 0 : index
      %c0_52 = arith.constant 0 : index
      %57 = vector.load %arg1[%56, %c1_50, %c0_51, %c0_52] : memref<30x30x8x128xf32, #tpu.memory_space<vmem>>, vector<1x28x8x128xf32>
      %58 = vector.shape_cast %57 : vector<1x28x8x128xf32> to vector<28x8x128xf32>
      %c4 = arith.constant 4 : index
      %c0_53 = arith.constant 0 : index
      %c0_54 = arith.constant 0 : index
      %c0_55 = arith.constant 0 : index
      %59 = vector.load %arg2[%c4, %c0_53, %c0_54, %c0_55] : memref<9x2x8x128xf32, #tpu.memory_space<vmem>>, vector<1x1x8x128xf32>
      %60 = vector.shape_cast %59 : vector<1x1x8x128xf32> to vector<8x128xf32>
      %61 = vector.shape_cast %60 : vector<8x128xf32> to vector<1x8x128xf32>
      %62 = vector.broadcast %61 : vector<1x8x128xf32> to vector<28x8x128xf32>
      %63 = arith.mulf %58, %62 : vector<28x8x128xf32>
      %64 = arith.addf %54, %63 : vector<28x8x128xf32>
      %c1_i32_56 = arith.constant 1 : i32
      %65 = arith.addi %arg8, %c1_i32_56 : i32
      %66 = arith.index_cast %65 : i32 to index
      %c2_57 = arith.constant 2 : index
      %c0_58 = arith.constant 0 : index
      %c0_59 = arith.constant 0 : index
      %67 = vector.load %arg1[%66, %c2_57, %c0_58, %c0_59] : memref<30x30x8x128xf32, #tpu.memory_space<vmem>>, vector<1x28x8x128xf32>
      %68 = vector.shape_cast %67 : vector<1x28x8x128xf32> to vector<28x8x128xf32>
      %c5 = arith.constant 5 : index
      %c0_60 = arith.constant 0 : index
      %c0_61 = arith.constant 0 : index
      %c0_62 = arith.constant 0 : index
      %69 = vector.load %arg2[%c5, %c0_60, %c0_61, %c0_62] : memref<9x2x8x128xf32, #tpu.memory_space<vmem>>, vector<1x1x8x128xf32>
      %70 = vector.shape_cast %69 : vector<1x1x8x128xf32> to vector<8x128xf32>
      %71 = vector.shape_cast %70 : vector<8x128xf32> to vector<1x8x128xf32>
      %72 = vector.broadcast %71 : vector<1x8x128xf32> to vector<28x8x128xf32>
      %73 = arith.mulf %68, %72 : vector<28x8x128xf32>
      %74 = arith.addf %64, %73 : vector<28x8x128xf32>
      %c2_i32 = arith.constant 2 : i32
      %75 = arith.addi %arg8, %c2_i32 : i32
      %76 = arith.index_cast %75 : i32 to index
      %c0_63 = arith.constant 0 : index
      %c0_64 = arith.constant 0 : index
      %c0_65 = arith.constant 0 : index
      %77 = vector.load %arg1[%76, %c0_63, %c0_64, %c0_65] : memref<30x30x8x128xf32, #tpu.memory_space<vmem>>, vector<1x28x8x128xf32>
      %78 = vector.shape_cast %77 : vector<1x28x8x128xf32> to vector<28x8x128xf32>
      %c6 = arith.constant 6 : index
      %c0_66 = arith.constant 0 : index
      %c0_67 = arith.constant 0 : index
      %c0_68 = arith.constant 0 : index
      %79 = vector.load %arg2[%c6, %c0_66, %c0_67, %c0_68] : memref<9x2x8x128xf32, #tpu.memory_space<vmem>>, vector<1x1x8x128xf32>
      %80 = vector.shape_cast %79 : vector<1x1x8x128xf32> to vector<8x128xf32>
      %81 = vector.shape_cast %80 : vector<8x128xf32> to vector<1x8x128xf32>
      %82 = vector.broadcast %81 : vector<1x8x128xf32> to vector<28x8x128xf32>
      %83 = arith.mulf %78, %82 : vector<28x8x128xf32>
      %84 = arith.addf %74, %83 : vector<28x8x128xf32>
      %c2_i32_69 = arith.constant 2 : i32
      %85 = arith.addi %arg8, %c2_i32_69 : i32
      %86 = arith.index_cast %85 : i32 to index
      %c1_70 = arith.constant 1 : index
      %c0_71 = arith.constant 0 : index
      %c0_72 = arith.constant 0 : index
      %87 = vector.load %arg1[%86, %c1_70, %c0_71, %c0_72] : memref<30x30x8x128xf32, #tpu.memory_space<vmem>>, vector<1x28x8x128xf32>
      %88 = vector.shape_cast %87 : vector<1x28x8x128xf32> to vector<28x8x128xf32>
      %c7 = arith.constant 7 : index
      %c0_73 = arith.constant 0 : index
      %c0_74 = arith.constant 0 : index
      %c0_75 = arith.constant 0 : index
      %89 = vector.load %arg2[%c7, %c0_73, %c0_74, %c0_75] : memref<9x2x8x128xf32, #tpu.memory_space<vmem>>, vector<1x1x8x128xf32>
      %90 = vector.shape_cast %89 : vector<1x1x8x128xf32> to vector<8x128xf32>
      %91 = vector.shape_cast %90 : vector<8x128xf32> to vector<1x8x128xf32>
      %92 = vector.broadcast %91 : vector<1x8x128xf32> to vector<28x8x128xf32>
      %93 = arith.mulf %88, %92 : vector<28x8x128xf32>
      %94 = arith.addf %84, %93 : vector<28x8x128xf32>
      %c2_i32_76 = arith.constant 2 : i32
      %95 = arith.addi %arg8, %c2_i32_76 : i32
      %96 = arith.index_cast %95 : i32 to index
      %c2_77 = arith.constant 2 : index
      %c0_78 = arith.constant 0 : index
      %c0_79 = arith.constant 0 : index
      %97 = vector.load %arg1[%96, %c2_77, %c0_78, %c0_79] : memref<30x30x8x128xf32, #tpu.memory_space<vmem>>, vector<1x28x8x128xf32>
      %98 = vector.shape_cast %97 : vector<1x28x8x128xf32> to vector<28x8x128xf32>
      %c8 = arith.constant 8 : index
      %c0_80 = arith.constant 0 : index
      %c0_81 = arith.constant 0 : index
      %c0_82 = arith.constant 0 : index
      %99 = vector.load %arg2[%c8, %c0_80, %c0_81, %c0_82] : memref<9x2x8x128xf32, #tpu.memory_space<vmem>>, vector<1x1x8x128xf32>
      %100 = vector.shape_cast %99 : vector<1x1x8x128xf32> to vector<8x128xf32>
      %101 = vector.shape_cast %100 : vector<8x128xf32> to vector<1x8x128xf32>
      %102 = vector.broadcast %101 : vector<1x8x128xf32> to vector<28x8x128xf32>
      %103 = arith.mulf %98, %102 : vector<28x8x128xf32>
      %104 = arith.addf %94, %103 : vector<28x8x128xf32>
      %c0_83 = arith.constant 0 : index
      %c0_84 = arith.constant 0 : index
      %c0_85 = arith.constant 0 : index
      %105 = vector.load %arg3[%c0_83, %c0_84, %c0_85] : memref<2x8x128xf32, #tpu.memory_space<vmem>>, vector<1x8x128xf32>
      %106 = vector.shape_cast %105 : vector<1x8x128xf32> to vector<8x128xf32>
      %107 = vector.shape_cast %106 : vector<8x128xf32> to vector<1x8x128xf32>
      %108 = vector.broadcast %107 : vector<1x8x128xf32> to vector<28x8x128xf32>
      %109 = arith.addf %104, %108 : vector<28x8x128xf32>
      %cst_86 = arith.constant 0.000000e+00 : f32
      %110 = vector.broadcast %cst_86 : f32 to vector<28x8x128xf32>
      %111 = arith.maximumf %109, %110 : vector<28x8x128xf32>
      %c1_i32_87 = arith.constant 1 : i32
      %112 = arith.addi %arg8, %c1_i32_87 : i32
      %113 = arith.index_cast %112 : i32 to index
      %c1_88 = arith.constant 1 : index
      %c0_89 = arith.constant 0 : index
      %c0_90 = arith.constant 0 : index
      %114 = vector.load %arg7[%113, %c1_88, %c0_89, %c0_90] : memref<30x30x16x128xf32, #tpu.memory_space<vmem>>, vector<1x28x8x128xf32>
      %115 = vector.shape_cast %114 : vector<1x28x8x128xf32> to vector<28x8x128xf32>
      %116 = vector.shape_cast %111 : vector<28x8x128xf32> to vector<1x28x8x128xf32>
      tpu.vector_store %arg7[%113, %c1_88, %c0_89, %c0_90], %116 {strides = array<i32>} : memref<30x30x16x128xf32, #tpu.memory_space<vmem>>, vector<1x28x8x128xf32>,
      %117 = arith.index_cast %arg8 : i32 to index
      %c0_91 = arith.constant 0 : index
      %c0_92 = arith.constant 0 : index
      %c0_93 = arith.constant 0 : index
      %118 = vector.load %arg1[%117, %c0_91, %c0_92, %c0_93] : memref<30x30x8x128xf32, #tpu.memory_space<vmem>>, vector<1x28x8x128xf32>
      %119 = vector.shape_cast %118 : vector<1x28x8x128xf32> to vector<28x8x128xf32>
      %c0_94 = arith.constant 0 : index
      %c1_95 = arith.constant 1 : index
      %c0_96 = arith.constant 0 : index
      %c0_97 = arith.constant 0 : index
      %120 = vector.load %arg2[%c0_94, %c1_95, %c0_96, %c0_97] : memref<9x2x8x128xf32, #tpu.memory_space<vmem>>, vector<1x1x8x128xf32>
      %121 = vector.shape_cast %120 : vector<1x1x8x128xf32> to vector<8x128xf32>
      %122 = vector.shape_cast %121 : vector<8x128xf32> to vector<1x8x128xf32>
      %123 = vector.broadcast %122 : vector<1x8x128xf32> to vector<28x8x128xf32>
      %124 = arith.mulf %119, %123 : vector<28x8x128xf32>
      %c0_i32_98 = arith.constant 0 : i32
      %125 = arith.addi %arg8, %c0_i32_98 : i32
      %126 = arith.index_cast %125 : i32 to index
      %c1_99 = arith.constant 1 : index
      %c0_100 = arith.constant 0 : index
      %c0_101 = arith.constant 0 : index
      %127 = vector.load %arg1[%126, %c1_99, %c0_100, %c0_101] : memref<30x30x8x128xf32, #tpu.memory_space<vmem>>, vector<1x28x8x128xf32>
      %128 = vector.shape_cast %127 : vector<1x28x8x128xf32> to vector<28x8x128xf32>
      %c1_102 = arith.constant 1 : index
      %c1_103 = arith.constant 1 : index
      %c0_104 = arith.constant 0 : index
      %c0_105 = arith.constant 0 : index
      %129 = vector.load %arg2[%c1_102, %c1_103, %c0_104, %c0_105] : memref<9x2x8x128xf32, #tpu.memory_space<vmem>>, vector<1x1x8x128xf32>
      %130 = vector.shape_cast %129 : vector<1x1x8x128xf32> to vector<8x128xf32>
      %131 = vector.shape_cast %130 : vector<8x128xf32> to vector<1x8x128xf32>
      %132 = vector.broadcast %131 : vector<1x8x128xf32> to vector<28x8x128xf32>
      %133 = arith.mulf %128, %132 : vector<28x8x128xf32>
      %134 = arith.addf %124, %133 : vector<28x8x128xf32>
      %c0_i32_106 = arith.constant 0 : i32
      %135 = arith.addi %arg8, %c0_i32_106 : i32
      %136 = arith.index_cast %135 : i32 to index
      %c2_107 = arith.constant 2 : index
      %c0_108 = arith.constant 0 : index
      %c0_109 = arith.constant 0 : index
      %137 = vector.load %arg1[%136, %c2_107, %c0_108, %c0_109] : memref<30x30x8x128xf32, #tpu.memory_space<vmem>>, vector<1x28x8x128xf32>
      %138 = vector.shape_cast %137 : vector<1x28x8x128xf32> to vector<28x8x128xf32>
      %c2_110 = arith.constant 2 : index
      %c1_111 = arith.constant 1 : index
      %c0_112 = arith.constant 0 : index
      %c0_113 = arith.constant 0 : index
      %139 = vector.load %arg2[%c2_110, %c1_111, %c0_112, %c0_113] : memref<9x2x8x128xf32, #tpu.memory_space<vmem>>, vector<1x1x8x128xf32>
      %140 = vector.shape_cast %139 : vector<1x1x8x128xf32> to vector<8x128xf32>
      %141 = vector.shape_cast %140 : vector<8x128xf32> to vector<1x8x128xf32>
      %142 = vector.broadcast %141 : vector<1x8x128xf32> to vector<28x8x128xf32>
      %143 = arith.mulf %138, %142 : vector<28x8x128xf32>
      %144 = arith.addf %134, %143 : vector<28x8x128xf32>
      %c1_i32_114 = arith.constant 1 : i32
      %145 = arith.addi %arg8, %c1_i32_114 : i32
      %146 = arith.index_cast %145 : i32 to index
      %c0_115 = arith.constant 0 : index
      %c0_116 = arith.constant 0 : index
      %c0_117 = arith.constant 0 : index
      %147 = vector.load %arg1[%146, %c0_115, %c0_116, %c0_117] : memref<30x30x8x128xf32, #tpu.memory_space<vmem>>, vector<1x28x8x128xf32>
      %148 = vector.shape_cast %147 : vector<1x28x8x128xf32> to vector<28x8x128xf32>
      %c3_118 = arith.constant 3 : index
      %c1_119 = arith.constant 1 : index
      %c0_120 = arith.constant 0 : index
      %c0_121 = arith.constant 0 : index
      %149 = vector.load %arg2[%c3_118, %c1_119, %c0_120, %c0_121] : memref<9x2x8x128xf32, #tpu.memory_space<vmem>>, vector<1x1x8x128xf32>
      %150 = vector.shape_cast %149 : vector<1x1x8x128xf32> to vector<8x128xf32>
      %151 = vector.shape_cast %150 : vector<8x128xf32> to vector<1x8x128xf32>
      %152 = vector.broadcast %151 : vector<1x8x128xf32> to vector<28x8x128xf32>
      %153 = arith.mulf %148, %152 : vector<28x8x128xf32>
      %154 = arith.addf %144, %153 : vector<28x8x128xf32>
      %c1_i32_122 = arith.constant 1 : i32
      %155 = arith.addi %arg8, %c1_i32_122 : i32
      %156 = arith.index_cast %155 : i32 to index
      %c1_123 = arith.constant 1 : index
      %c0_124 = arith.constant 0 : index
      %c0_125 = arith.constant 0 : index
      %157 = vector.load %arg1[%156, %c1_123, %c0_124, %c0_125] : memref<30x30x8x128xf32, #tpu.memory_space<vmem>>, vector<1x28x8x128xf32>
      %158 = vector.shape_cast %157 : vector<1x28x8x128xf32> to vector<28x8x128xf32>
      %c4_126 = arith.constant 4 : index
      %c1_127 = arith.constant 1 : index
      %c0_128 = arith.constant 0 : index
      %c0_129 = arith.constant 0 : index
      %159 = vector.load %arg2[%c4_126, %c1_127, %c0_128, %c0_129] : memref<9x2x8x128xf32, #tpu.memory_space<vmem>>, vector<1x1x8x128xf32>
      %160 = vector.shape_cast %159 : vector<1x1x8x128xf32> to vector<8x128xf32>
      %161 = vector.shape_cast %160 : vector<8x128xf32> to vector<1x8x128xf32>
      %162 = vector.broadcast %161 : vector<1x8x128xf32> to vector<28x8x128xf32>
      %163 = arith.mulf %158, %162 : vector<28x8x128xf32>
      %164 = arith.addf %154, %163 : vector<28x8x128xf32>
      %c1_i32_130 = arith.constant 1 : i32
      %165 = arith.addi %arg8, %c1_i32_130 : i32
      %166 = arith.index_cast %165 : i32 to index
      %c2_131 = arith.constant 2 : index
      %c0_132 = arith.constant 0 : index
      %c0_133 = arith.constant 0 : index
      %167 = vector.load %arg1[%166, %c2_131, %c0_132, %c0_133] : memref<30x30x8x128xf32, #tpu.memory_space<vmem>>, vector<1x28x8x128xf32>
      %168 = vector.shape_cast %167 : vector<1x28x8x128xf32> to vector<28x8x128xf32>
      %c5_134 = arith.constant 5 : index
      %c1_135 = arith.constant 1 : index
      %c0_136 = arith.constant 0 : index
      %c0_137 = arith.constant 0 : index
      %169 = vector.load %arg2[%c5_134, %c1_135, %c0_136, %c0_137] : memref<9x2x8x128xf32, #tpu.memory_space<vmem>>, vector<1x1x8x128xf32>
      %170 = vector.shape_cast %169 : vector<1x1x8x128xf32> to vector<8x128xf32>
      %171 = vector.shape_cast %170 : vector<8x128xf32> to vector<1x8x128xf32>
      %172 = vector.broadcast %171 : vector<1x8x128xf32> to vector<28x8x128xf32>
      %173 = arith.mulf %168, %172 : vector<28x8x128xf32>
      %174 = arith.addf %164, %173 : vector<28x8x128xf32>
      %c2_i32_138 = arith.constant 2 : i32
      %175 = arith.addi %arg8, %c2_i32_138 : i32
      %176 = arith.index_cast %175 : i32 to index
      %c0_139 = arith.constant 0 : index
      %c0_140 = arith.constant 0 : index
      %c0_141 = arith.constant 0 : index
      %177 = vector.load %arg1[%176, %c0_139, %c0_140, %c0_141] : memref<30x30x8x128xf32, #tpu.memory_space<vmem>>, vector<1x28x8x128xf32>
      %178 = vector.shape_cast %177 : vector<1x28x8x128xf32> to vector<28x8x128xf32>
      %c6_142 = arith.constant 6 : index
      %c1_143 = arith.constant 1 : index
      %c0_144 = arith.constant 0 : index
      %c0_145 = arith.constant 0 : index
      %179 = vector.load %arg2[%c6_142, %c1_143, %c0_144, %c0_145] : memref<9x2x8x128xf32, #tpu.memory_space<vmem>>, vector<1x1x8x128xf32>
      %180 = vector.shape_cast %179 : vector<1x1x8x128xf32> to vector<8x128xf32>
      %181 = vector.shape_cast %180 : vector<8x128xf32> to vector<1x8x128xf32>
      %182 = vector.broadcast %181 : vector<1x8x128xf32> to vector<28x8x128xf32>
      %183 = arith.mulf %178, %182 : vector<28x8x128xf32>
      %184 = arith.addf %174, %183 : vector<28x8x128xf32>
      %c2_i32_146 = arith.constant 2 : i32
      %185 = arith.addi %arg8, %c2_i32_146 : i32
      %186 = arith.index_cast %185 : i32 to index
      %c1_147 = arith.constant 1 : index
      %c0_148 = arith.constant 0 : index
      %c0_149 = arith.constant 0 : index
      %187 = vector.load %arg1[%186, %c1_147, %c0_148, %c0_149] : memref<30x30x8x128xf32, #tpu.memory_space<vmem>>, vector<1x28x8x128xf32>
      %188 = vector.shape_cast %187 : vector<1x28x8x128xf32> to vector<28x8x128xf32>
      %c7_150 = arith.constant 7 : index
      %c1_151 = arith.constant 1 : index
      %c0_152 = arith.constant 0 : index
      %c0_153 = arith.constant 0 : index
      %189 = vector.load %arg2[%c7_150, %c1_151, %c0_152, %c0_153] : memref<9x2x8x128xf32, #tpu.memory_space<vmem>>, vector<1x1x8x128xf32>
      %190 = vector.shape_cast %189 : vector<1x1x8x128xf32> to vector<8x128xf32>
      %191 = vector.shape_cast %190 : vector<8x128xf32> to vector<1x8x128xf32>
      %192 = vector.broadcast %191 : vector<1x8x128xf32> to vector<28x8x128xf32>
      %193 = arith.mulf %188, %192 : vector<28x8x128xf32>
      %194 = arith.addf %184, %193 : vector<28x8x128xf32>
      %c2_i32_154 = arith.constant 2 : i32
      %195 = arith.addi %arg8, %c2_i32_154 : i32
      %196 = arith.index_cast %195 : i32 to index
      %c2_155 = arith.constant 2 : index
      %c0_156 = arith.constant 0 : index
      %c0_157 = arith.constant 0 : index
      %197 = vector.load %arg1[%196, %c2_155, %c0_156, %c0_157] : memref<30x30x8x128xf32, #tpu.memory_space<vmem>>, vector<1x28x8x128xf32>
      %198 = vector.shape_cast %197 : vector<1x28x8x128xf32> to vector<28x8x128xf32>
      %c8_158 = arith.constant 8 : index
      %c1_159 = arith.constant 1 : index
      %c0_160 = arith.constant 0 : index
      %c0_161 = arith.constant 0 : index
      %199 = vector.load %arg2[%c8_158, %c1_159, %c0_160, %c0_161] : memref<9x2x8x128xf32, #tpu.memory_space<vmem>>, vector<1x1x8x128xf32>
      %200 = vector.shape_cast %199 : vector<1x1x8x128xf32> to vector<8x128xf32>
      %201 = vector.shape_cast %200 : vector<8x128xf32> to vector<1x8x128xf32>
      %202 = vector.broadcast %201 : vector<1x8x128xf32> to vector<28x8x128xf32>
      %203 = arith.mulf %198, %202 : vector<28x8x128xf32>
      %204 = arith.addf %194, %203 : vector<28x8x128xf32>
      %c1_162 = arith.constant 1 : index
      %c0_163 = arith.constant 0 : index
      %c0_164 = arith.constant 0 : index
      %205 = vector.load %arg3[%c1_162, %c0_163, %c0_164] : memref<2x8x128xf32, #tpu.memory_space<vmem>>, vector<1x8x128xf32>
      %206 = vector.shape_cast %205 : vector<1x8x128xf32> to vector<8x128xf32>
      %207 = vector.shape_cast %206 : vector<8x128xf32> to vector<1x8x128xf32>
      %208 = vector.broadcast %207 : vector<1x8x128xf32> to vector<28x8x128xf32>
      %209 = arith.addf %204, %208 : vector<28x8x128xf32>
      %cst_165 = arith.constant 0.000000e+00 : f32
      %210 = vector.broadcast %cst_165 : f32 to vector<28x8x128xf32>
      %211 = arith.maximumf %209, %210 : vector<28x8x128xf32>
      %c1_i32_166 = arith.constant 1 : i32
      %212 = arith.addi %arg8, %c1_i32_166 : i32
      %213 = arith.index_cast %212 : i32 to index
      %c1_167 = arith.constant 1 : index
      %c8_168 = arith.constant 8 : index
      %c0_169 = arith.constant 0 : index
      %214 = vector.load %arg7[%213, %c1_167, %c8_168, %c0_169] : memref<30x30x16x128xf32, #tpu.memory_space<vmem>>, vector<1x28x8x128xf32>
      %215 = vector.shape_cast %214 : vector<1x28x8x128xf32> to vector<28x8x128xf32>
      %216 = vector.shape_cast %211 : vector<28x8x128xf32> to vector<1x28x8x128xf32>
      tpu.vector_store %arg7[%213, %c1_167, %c8_168, %c0_169], %216 {strides = array<i32>} : memref<30x30x16x128xf32, #tpu.memory_space<vmem>>, vector<1x28x8x128xf32>,
    }
    %c28_i32_16 = arith.constant 28 : i32
    %c0_i32_17 = arith.constant 0 : i32
    %c28_i32_18 = arith.constant 28 : i32
    %16 = arith.addi %c0_i32_17, %c28_i32_18 : i32
    %c1_i32_19 = arith.constant 1 : i32
    scf.for %arg8 = %c0_i32_17 to %16 step %c1_i32_19  : i32 {
      %17 = arith.index_cast %arg8 : i32 to index
      %c0_21 = arith.constant 0 : index
      %c0_22 = arith.constant 0 : index
      %c0_23 = arith.constant 0 : index
      %18 = vector.load %arg7[%17, %c0_21, %c0_22, %c0_23] : memref<30x30x16x128xf32, #tpu.memory_space<vmem>>, vector<1x28x8x128xf32>
      %19 = vector.shape_cast %18 : vector<1x28x8x128xf32> to vector<28x8x128xf32>
      %c0_24 = arith.constant 0 : index
      %c0_25 = arith.constant 0 : index
      %c0_26 = arith.constant 0 : index
      %c0_27 = arith.constant 0 : index
      %20 = vector.load %arg4[%c0_24, %c0_25, %c0_26, %c0_27] : memref<9x2x8x128xf32, #tpu.memory_space<vmem>>, vector<1x1x8x128xf32>
      %21 = vector.shape_cast %20 : vector<1x1x8x128xf32> to vector<8x128xf32>
      %22 = vector.shape_cast %21 : vector<8x128xf32> to vector<1x8x128xf32>
      %23 = vector.broadcast %22 : vector<1x8x128xf32> to vector<28x8x128xf32>
      %24 = arith.mulf %19, %23 : vector<28x8x128xf32>
      %c0_i32_28 = arith.constant 0 : i32
      %25 = arith.addi %arg8, %c0_i32_28 : i32
      %26 = arith.index_cast %25 : i32 to index
      %c0_29 = arith.constant 0 : index
      %c8 = arith.constant 8 : index
      %c0_30 = arith.constant 0 : index
      %27 = vector.load %arg7[%26, %c0_29, %c8, %c0_30] : memref<30x30x16x128xf32, #tpu.memory_space<vmem>>, vector<1x28x8x128xf32>
      %28 = vector.shape_cast %27 : vector<1x28x8x128xf32> to vector<28x8x128xf32>
      %c0_31 = arith.constant 0 : index
      %c1 = arith.constant 1 : index
      %c0_32 = arith.constant 0 : index
      %c0_33 = arith.constant 0 : index
      %29 = vector.load %arg4[%c0_31, %c1, %c0_32, %c0_33] : memref<9x2x8x128xf32, #tpu.memory_space<vmem>>, vector<1x1x8x128xf32>
      %30 = vector.shape_cast %29 : vector<1x1x8x128xf32> to vector<8x128xf32>
      %31 = vector.shape_cast %30 : vector<8x128xf32> to vector<1x8x128xf32>
      %32 = vector.broadcast %31 : vector<1x8x128xf32> to vector<28x8x128xf32>
      %33 = arith.mulf %28, %32 : vector<28x8x128xf32>
      %34 = arith.addf %24, %33 : vector<28x8x128xf32>
      %c0_i32_34 = arith.constant 0 : i32
      %35 = arith.addi %arg8, %c0_i32_34 : i32
      %36 = arith.index_cast %35 : i32 to index
      %c1_35 = arith.constant 1 : index
      %c0_36 = arith.constant 0 : index
      %c0_37 = arith.constant 0 : index
      %37 = vector.load %arg7[%36, %c1_35, %c0_36, %c0_37] : memref<30x30x16x128xf32, #tpu.memory_space<vmem>>, vector<1x28x8x128xf32>
      %38 = vector.shape_cast %37 : vector<1x28x8x128xf32> to vector<28x8x128xf32>
      %c1_38 = arith.constant 1 : index
      %c0_39 = arith.constant 0 : index
      %c0_40 = arith.constant 0 : index
      %c0_41 = arith.constant 0 : index
      %39 = vector.load %arg4[%c1_38, %c0_39, %c0_40, %c0_41] : memref<9x2x8x128xf32, #tpu.memory_space<vmem>>, vector<1x1x8x128xf32>
      %40 = vector.shape_cast %39 : vector<1x1x8x128xf32> to vector<8x128xf32>
      %41 = vector.shape_cast %40 : vector<8x128xf32> to vector<1x8x128xf32>
      %42 = vector.broadcast %41 : vector<1x8x128xf32> to vector<28x8x128xf32>
      %43 = arith.mulf %38, %42 : vector<28x8x128xf32>
      %44 = arith.addf %34, %43 : vector<28x8x128xf32>
      %c0_i32_42 = arith.constant 0 : i32
      %45 = arith.addi %arg8, %c0_i32_42 : i32
      %46 = arith.index_cast %45 : i32 to index
      %c1_43 = arith.constant 1 : index
      %c8_44 = arith.constant 8 : index
      %c0_45 = arith.constant 0 : index
      %47 = vector.load %arg7[%46, %c1_43, %c8_44, %c0_45] : memref<30x30x16x128xf32, #tpu.memory_space<vmem>>, vector<1x28x8x128xf32>
      %48 = vector.shape_cast %47 : vector<1x28x8x128xf32> to vector<28x8x128xf32>
      %c1_46 = arith.constant 1 : index
      %c1_47 = arith.constant 1 : index
      %c0_48 = arith.constant 0 : index
      %c0_49 = arith.constant 0 : index
      %49 = vector.load %arg4[%c1_46, %c1_47, %c0_48, %c0_49] : memref<9x2x8x128xf32, #tpu.memory_space<vmem>>, vector<1x1x8x128xf32>
      %50 = vector.shape_cast %49 : vector<1x1x8x128xf32> to vector<8x128xf32>
      %51 = vector.shape_cast %50 : vector<8x128xf32> to vector<1x8x128xf32>
      %52 = vector.broadcast %51 : vector<1x8x128xf32> to vector<28x8x128xf32>
      %53 = arith.mulf %48, %52 : vector<28x8x128xf32>
      %54 = arith.addf %44, %53 : vector<28x8x128xf32>
      %c0_i32_50 = arith.constant 0 : i32
      %55 = arith.addi %arg8, %c0_i32_50 : i32
      %56 = arith.index_cast %55 : i32 to index
      %c2 = arith.constant 2 : index
      %c0_51 = arith.constant 0 : index
      %c0_52 = arith.constant 0 : index
      %57 = vector.load %arg7[%56, %c2, %c0_51, %c0_52] : memref<30x30x16x128xf32, #tpu.memory_space<vmem>>, vector<1x28x8x128xf32>
      %58 = vector.shape_cast %57 : vector<1x28x8x128xf32> to vector<28x8x128xf32>
      %c2_53 = arith.constant 2 : index
      %c0_54 = arith.constant 0 : index
      %c0_55 = arith.constant 0 : index
      %c0_56 = arith.constant 0 : index
      %59 = vector.load %arg4[%c2_53, %c0_54, %c0_55, %c0_56] : memref<9x2x8x128xf32, #tpu.memory_space<vmem>>, vector<1x1x8x128xf32>
      %60 = vector.shape_cast %59 : vector<1x1x8x128xf32> to vector<8x128xf32>
      %61 = vector.shape_cast %60 : vector<8x128xf32> to vector<1x8x128xf32>
      %62 = vector.broadcast %61 : vector<1x8x128xf32> to vector<28x8x128xf32>
      %63 = arith.mulf %58, %62 : vector<28x8x128xf32>
      %64 = arith.addf %54, %63 : vector<28x8x128xf32>
      %c0_i32_57 = arith.constant 0 : i32
      %65 = arith.addi %arg8, %c0_i32_57 : i32
      %66 = arith.index_cast %65 : i32 to index
      %c2_58 = arith.constant 2 : index
      %c8_59 = arith.constant 8 : index
      %c0_60 = arith.constant 0 : index
      %67 = vector.load %arg7[%66, %c2_58, %c8_59, %c0_60] : memref<30x30x16x128xf32, #tpu.memory_space<vmem>>, vector<1x28x8x128xf32>
      %68 = vector.shape_cast %67 : vector<1x28x8x128xf32> to vector<28x8x128xf32>
      %c2_61 = arith.constant 2 : index
      %c1_62 = arith.constant 1 : index
      %c0_63 = arith.constant 0 : index
      %c0_64 = arith.constant 0 : index
      %69 = vector.load %arg4[%c2_61, %c1_62, %c0_63, %c0_64] : memref<9x2x8x128xf32, #tpu.memory_space<vmem>>, vector<1x1x8x128xf32>
      %70 = vector.shape_cast %69 : vector<1x1x8x128xf32> to vector<8x128xf32>
      %71 = vector.shape_cast %70 : vector<8x128xf32> to vector<1x8x128xf32>
      %72 = vector.broadcast %71 : vector<1x8x128xf32> to vector<28x8x128xf32>
      %73 = arith.mulf %68, %72 : vector<28x8x128xf32>
      %74 = arith.addf %64, %73 : vector<28x8x128xf32>
      %c1_i32_65 = arith.constant 1 : i32
      %75 = arith.addi %arg8, %c1_i32_65 : i32
      %76 = arith.index_cast %75 : i32 to index
      %c0_66 = arith.constant 0 : index
      %c0_67 = arith.constant 0 : index
      %c0_68 = arith.constant 0 : index
      %77 = vector.load %arg7[%76, %c0_66, %c0_67, %c0_68] : memref<30x30x16x128xf32, #tpu.memory_space<vmem>>, vector<1x28x8x128xf32>
      %78 = vector.shape_cast %77 : vector<1x28x8x128xf32> to vector<28x8x128xf32>
      %c3 = arith.constant 3 : index
      %c0_69 = arith.constant 0 : index
      %c0_70 = arith.constant 0 : index
      %c0_71 = arith.constant 0 : index
      %79 = vector.load %arg4[%c3, %c0_69, %c0_70, %c0_71] : memref<9x2x8x128xf32, #tpu.memory_space<vmem>>, vector<1x1x8x128xf32>
      %80 = vector.shape_cast %79 : vector<1x1x8x128xf32> to vector<8x128xf32>
      %81 = vector.shape_cast %80 : vector<8x128xf32> to vector<1x8x128xf32>
      %82 = vector.broadcast %81 : vector<1x8x128xf32> to vector<28x8x128xf32>
      %83 = arith.mulf %78, %82 : vector<28x8x128xf32>
      %84 = arith.addf %74, %83 : vector<28x8x128xf32>
      %c1_i32_72 = arith.constant 1 : i32
      %85 = arith.addi %arg8, %c1_i32_72 : i32
      %86 = arith.index_cast %85 : i32 to index
      %c0_73 = arith.constant 0 : index
      %c8_74 = arith.constant 8 : index
      %c0_75 = arith.constant 0 : index
      %87 = vector.load %arg7[%86, %c0_73, %c8_74, %c0_75] : memref<30x30x16x128xf32, #tpu.memory_space<vmem>>, vector<1x28x8x128xf32>
      %88 = vector.shape_cast %87 : vector<1x28x8x128xf32> to vector<28x8x128xf32>
      %c3_76 = arith.constant 3 : index
      %c1_77 = arith.constant 1 : index
      %c0_78 = arith.constant 0 : index
      %c0_79 = arith.constant 0 : index
      %89 = vector.load %arg4[%c3_76, %c1_77, %c0_78, %c0_79] : memref<9x2x8x128xf32, #tpu.memory_space<vmem>>, vector<1x1x8x128xf32>
      %90 = vector.shape_cast %89 : vector<1x1x8x128xf32> to vector<8x128xf32>
      %91 = vector.shape_cast %90 : vector<8x128xf32> to vector<1x8x128xf32>
      %92 = vector.broadcast %91 : vector<1x8x128xf32> to vector<28x8x128xf32>
      %93 = arith.mulf %88, %92 : vector<28x8x128xf32>
      %94 = arith.addf %84, %93 : vector<28x8x128xf32>
      %c1_i32_80 = arith.constant 1 : i32
      %95 = arith.addi %arg8, %c1_i32_80 : i32
      %96 = arith.index_cast %95 : i32 to index
      %c1_81 = arith.constant 1 : index
      %c0_82 = arith.constant 0 : index
      %c0_83 = arith.constant 0 : index
      %97 = vector.load %arg7[%96, %c1_81, %c0_82, %c0_83] : memref<30x30x16x128xf32, #tpu.memory_space<vmem>>, vector<1x28x8x128xf32>
      %98 = vector.shape_cast %97 : vector<1x28x8x128xf32> to vector<28x8x128xf32>
      %c4 = arith.constant 4 : index
      %c0_84 = arith.constant 0 : index
      %c0_85 = arith.constant 0 : index
      %c0_86 = arith.constant 0 : index
      %99 = vector.load %arg4[%c4, %c0_84, %c0_85, %c0_86] : memref<9x2x8x128xf32, #tpu.memory_space<vmem>>, vector<1x1x8x128xf32>
      %100 = vector.shape_cast %99 : vector<1x1x8x128xf32> to vector<8x128xf32>
      %101 = vector.shape_cast %100 : vector<8x128xf32> to vector<1x8x128xf32>
      %102 = vector.broadcast %101 : vector<1x8x128xf32> to vector<28x8x128xf32>
      %103 = arith.mulf %98, %102 : vector<28x8x128xf32>
      %104 = arith.addf %94, %103 : vector<28x8x128xf32>
      %c1_i32_87 = arith.constant 1 : i32
      %105 = arith.addi %arg8, %c1_i32_87 : i32
      %106 = arith.index_cast %105 : i32 to index
      %c1_88 = arith.constant 1 : index
      %c8_89 = arith.constant 8 : index
      %c0_90 = arith.constant 0 : index
      %107 = vector.load %arg7[%106, %c1_88, %c8_89, %c0_90] : memref<30x30x16x128xf32, #tpu.memory_space<vmem>>, vector<1x28x8x128xf32>
      %108 = vector.shape_cast %107 : vector<1x28x8x128xf32> to vector<28x8x128xf32>
      %c4_91 = arith.constant 4 : index
      %c1_92 = arith.constant 1 : index
      %c0_93 = arith.constant 0 : index
      %c0_94 = arith.constant 0 : index
      %109 = vector.load %arg4[%c4_91, %c1_92, %c0_93, %c0_94] : memref<9x2x8x128xf32, #tpu.memory_space<vmem>>, vector<1x1x8x128xf32>
      %110 = vector.shape_cast %109 : vector<1x1x8x128xf32> to vector<8x128xf32>
      %111 = vector.shape_cast %110 : vector<8x128xf32> to vector<1x8x128xf32>
      %112 = vector.broadcast %111 : vector<1x8x128xf32> to vector<28x8x128xf32>
      %113 = arith.mulf %108, %112 : vector<28x8x128xf32>
      %114 = arith.addf %104, %113 : vector<28x8x128xf32>
      %c1_i32_95 = arith.constant 1 : i32
      %115 = arith.addi %arg8, %c1_i32_95 : i32
      %116 = arith.index_cast %115 : i32 to index
      %c2_96 = arith.constant 2 : index
      %c0_97 = arith.constant 0 : index
      %c0_98 = arith.constant 0 : index
      %117 = vector.load %arg7[%116, %c2_96, %c0_97, %c0_98] : memref<30x30x16x128xf32, #tpu.memory_space<vmem>>, vector<1x28x8x128xf32>
      %118 = vector.shape_cast %117 : vector<1x28x8x128xf32> to vector<28x8x128xf32>
      %c5 = arith.constant 5 : index
      %c0_99 = arith.constant 0 : index
      %c0_100 = arith.constant 0 : index
      %c0_101 = arith.constant 0 : index
      %119 = vector.load %arg4[%c5, %c0_99, %c0_100, %c0_101] : memref<9x2x8x128xf32, #tpu.memory_space<vmem>>, vector<1x1x8x128xf32>
      %120 = vector.shape_cast %119 : vector<1x1x8x128xf32> to vector<8x128xf32>
      %121 = vector.shape_cast %120 : vector<8x128xf32> to vector<1x8x128xf32>
      %122 = vector.broadcast %121 : vector<1x8x128xf32> to vector<28x8x128xf32>
      %123 = arith.mulf %118, %122 : vector<28x8x128xf32>
      %124 = arith.addf %114, %123 : vector<28x8x128xf32>
      %c1_i32_102 = arith.constant 1 : i32
      %125 = arith.addi %arg8, %c1_i32_102 : i32
      %126 = arith.index_cast %125 : i32 to index
      %c2_103 = arith.constant 2 : index
      %c8_104 = arith.constant 8 : index
      %c0_105 = arith.constant 0 : index
      %127 = vector.load %arg7[%126, %c2_103, %c8_104, %c0_105] : memref<30x30x16x128xf32, #tpu.memory_space<vmem>>, vector<1x28x8x128xf32>
      %128 = vector.shape_cast %127 : vector<1x28x8x128xf32> to vector<28x8x128xf32>
      %c5_106 = arith.constant 5 : index
      %c1_107 = arith.constant 1 : index
      %c0_108 = arith.constant 0 : index
      %c0_109 = arith.constant 0 : index
      %129 = vector.load %arg4[%c5_106, %c1_107, %c0_108, %c0_109] : memref<9x2x8x128xf32, #tpu.memory_space<vmem>>, vector<1x1x8x128xf32>
      %130 = vector.shape_cast %129 : vector<1x1x8x128xf32> to vector<8x128xf32>
      %131 = vector.shape_cast %130 : vector<8x128xf32> to vector<1x8x128xf32>
      %132 = vector.broadcast %131 : vector<1x8x128xf32> to vector<28x8x128xf32>
      %133 = arith.mulf %128, %132 : vector<28x8x128xf32>
      %134 = arith.addf %124, %133 : vector<28x8x128xf32>
      %c2_i32 = arith.constant 2 : i32
      %135 = arith.addi %arg8, %c2_i32 : i32
      %136 = arith.index_cast %135 : i32 to index
      %c0_110 = arith.constant 0 : index
      %c0_111 = arith.constant 0 : index
      %c0_112 = arith.constant 0 : index
      %137 = vector.load %arg7[%136, %c0_110, %c0_111, %c0_112] : memref<30x30x16x128xf32, #tpu.memory_space<vmem>>, vector<1x28x8x128xf32>
      %138 = vector.shape_cast %137 : vector<1x28x8x128xf32> to vector<28x8x128xf32>
      %c6 = arith.constant 6 : index
      %c0_113 = arith.constant 0 : index
      %c0_114 = arith.constant 0 : index
      %c0_115 = arith.constant 0 : index
      %139 = vector.load %arg4[%c6, %c0_113, %c0_114, %c0_115] : memref<9x2x8x128xf32, #tpu.memory_space<vmem>>, vector<1x1x8x128xf32>
      %140 = vector.shape_cast %139 : vector<1x1x8x128xf32> to vector<8x128xf32>
      %141 = vector.shape_cast %140 : vector<8x128xf32> to vector<1x8x128xf32>
      %142 = vector.broadcast %141 : vector<1x8x128xf32> to vector<28x8x128xf32>
      %143 = arith.mulf %138, %142 : vector<28x8x128xf32>
      %144 = arith.addf %134, %143 : vector<28x8x128xf32>
      %c2_i32_116 = arith.constant 2 : i32
      %145 = arith.addi %arg8, %c2_i32_116 : i32
      %146 = arith.index_cast %145 : i32 to index
      %c0_117 = arith.constant 0 : index
      %c8_118 = arith.constant 8 : index
      %c0_119 = arith.constant 0 : index
      %147 = vector.load %arg7[%146, %c0_117, %c8_118, %c0_119] : memref<30x30x16x128xf32, #tpu.memory_space<vmem>>, vector<1x28x8x128xf32>
      %148 = vector.shape_cast %147 : vector<1x28x8x128xf32> to vector<28x8x128xf32>
      %c6_120 = arith.constant 6 : index
      %c1_121 = arith.constant 1 : index
      %c0_122 = arith.constant 0 : index
      %c0_123 = arith.constant 0 : index
      %149 = vector.load %arg4[%c6_120, %c1_121, %c0_122, %c0_123] : memref<9x2x8x128xf32, #tpu.memory_space<vmem>>, vector<1x1x8x128xf32>
      %150 = vector.shape_cast %149 : vector<1x1x8x128xf32> to vector<8x128xf32>
      %151 = vector.shape_cast %150 : vector<8x128xf32> to vector<1x8x128xf32>
      %152 = vector.broadcast %151 : vector<1x8x128xf32> to vector<28x8x128xf32>
      %153 = arith.mulf %148, %152 : vector<28x8x128xf32>
      %154 = arith.addf %144, %153 : vector<28x8x128xf32>
      %c2_i32_124 = arith.constant 2 : i32
      %155 = arith.addi %arg8, %c2_i32_124 : i32
      %156 = arith.index_cast %155 : i32 to index
      %c1_125 = arith.constant 1 : index
      %c0_126 = arith.constant 0 : index
      %c0_127 = arith.constant 0 : index
      %157 = vector.load %arg7[%156, %c1_125, %c0_126, %c0_127] : memref<30x30x16x128xf32, #tpu.memory_space<vmem>>, vector<1x28x8x128xf32>
      %158 = vector.shape_cast %157 : vector<1x28x8x128xf32> to vector<28x8x128xf32>
      %c7 = arith.constant 7 : index
      %c0_128 = arith.constant 0 : index
      %c0_129 = arith.constant 0 : index
      %c0_130 = arith.constant 0 : index
      %159 = vector.load %arg4[%c7, %c0_128, %c0_129, %c0_130] : memref<9x2x8x128xf32, #tpu.memory_space<vmem>>, vector<1x1x8x128xf32>
      %160 = vector.shape_cast %159 : vector<1x1x8x128xf32> to vector<8x128xf32>
      %161 = vector.shape_cast %160 : vector<8x128xf32> to vector<1x8x128xf32>
      %162 = vector.broadcast %161 : vector<1x8x128xf32> to vector<28x8x128xf32>
      %163 = arith.mulf %158, %162 : vector<28x8x128xf32>
      %164 = arith.addf %154, %163 : vector<28x8x128xf32>
      %c2_i32_131 = arith.constant 2 : i32
      %165 = arith.addi %arg8, %c2_i32_131 : i32
      %166 = arith.index_cast %165 : i32 to index
      %c1_132 = arith.constant 1 : index
      %c8_133 = arith.constant 8 : index
      %c0_134 = arith.constant 0 : index
      %167 = vector.load %arg7[%166, %c1_132, %c8_133, %c0_134] : memref<30x30x16x128xf32, #tpu.memory_space<vmem>>, vector<1x28x8x128xf32>
      %168 = vector.shape_cast %167 : vector<1x28x8x128xf32> to vector<28x8x128xf32>
      %c7_135 = arith.constant 7 : index
      %c1_136 = arith.constant 1 : index
      %c0_137 = arith.constant 0 : index
      %c0_138 = arith.constant 0 : index
      %169 = vector.load %arg4[%c7_135, %c1_136, %c0_137, %c0_138] : memref<9x2x8x128xf32, #tpu.memory_space<vmem>>, vector<1x1x8x128xf32>
      %170 = vector.shape_cast %169 : vector<1x1x8x128xf32> to vector<8x128xf32>
      %171 = vector.shape_cast %170 : vector<8x128xf32> to vector<1x8x128xf32>
      %172 = vector.broadcast %171 : vector<1x8x128xf32> to vector<28x8x128xf32>
      %173 = arith.mulf %168, %172 : vector<28x8x128xf32>
      %174 = arith.addf %164, %173 : vector<28x8x128xf32>
      %c2_i32_139 = arith.constant 2 : i32
      %175 = arith.addi %arg8, %c2_i32_139 : i32
      %176 = arith.index_cast %175 : i32 to index
      %c2_140 = arith.constant 2 : index
      %c0_141 = arith.constant 0 : index
      %c0_142 = arith.constant 0 : index
      %177 = vector.load %arg7[%176, %c2_140, %c0_141, %c0_142] : memref<30x30x16x128xf32, #tpu.memory_space<vmem>>, vector<1x28x8x128xf32>
      %178 = vector.shape_cast %177 : vector<1x28x8x128xf32> to vector<28x8x128xf32>
      %c8_143 = arith.constant 8 : index
      %c0_144 = arith.constant 0 : index
      %c0_145 = arith.constant 0 : index
      %c0_146 = arith.constant 0 : index
      %179 = vector.load %arg4[%c8_143, %c0_144, %c0_145, %c0_146] : memref<9x2x8x128xf32, #tpu.memory_space<vmem>>, vector<1x1x8x128xf32>
      %180 = vector.shape_cast %179 : vector<1x1x8x128xf32> to vector<8x128xf32>
      %181 = vector.shape_cast %180 : vector<8x128xf32> to vector<1x8x128xf32>
      %182 = vector.broadcast %181 : vector<1x8x128xf32> to vector<28x8x128xf32>
      %183 = arith.mulf %178, %182 : vector<28x8x128xf32>
      %184 = arith.addf %174, %183 : vector<28x8x128xf32>
      %c2_i32_147 = arith.constant 2 : i32
      %185 = arith.addi %arg8, %c2_i32_147 : i32
      %186 = arith.index_cast %185 : i32 to index
      %c2_148 = arith.constant 2 : index
      %c8_149 = arith.constant 8 : index
      %c0_150 = arith.constant 0 : index
      %187 = vector.load %arg7[%186, %c2_148, %c8_149, %c0_150] : memref<30x30x16x128xf32, #tpu.memory_space<vmem>>, vector<1x28x8x128xf32>
      %188 = vector.shape_cast %187 : vector<1x28x8x128xf32> to vector<28x8x128xf32>
      %c8_151 = arith.constant 8 : index
      %c1_152 = arith.constant 1 : index
      %c0_153 = arith.constant 0 : index
      %c0_154 = arith.constant 0 : index
      %189 = vector.load %arg4[%c8_151, %c1_152, %c0_153, %c0_154] : memref<9x2x8x128xf32, #tpu.memory_space<vmem>>, vector<1x1x8x128xf32>
      %190 = vector.shape_cast %189 : vector<1x1x8x128xf32> to vector<8x128xf32>
      %191 = vector.shape_cast %190 : vector<8x128xf32> to vector<1x8x128xf32>
      %192 = vector.broadcast %191 : vector<1x8x128xf32> to vector<28x8x128xf32>
      %193 = arith.mulf %188, %192 : vector<28x8x128xf32>
      %194 = arith.addf %184, %193 : vector<28x8x128xf32>
      %cst_155 = arith.constant dense<0.000000e+00> : vector<28x128xf32>
      %195 = vector.multi_reduction <add>, %194, %cst_155 [1] : vector<28x8x128xf32> to vector<28x128xf32>
      %196 = vector.broadcast %0 : f32 to vector<28x128xf32>
      %197 = arith.addf %195, %196 : vector<28x128xf32>
      %cst_156 = arith.constant 0.000000e+00 : f32
      %198 = vector.broadcast %cst_156 : f32 to vector<28x128xf32>
      %199 = arith.maximumf %197, %198 : vector<28x128xf32>
      %200 = arith.index_cast %arg8 : i32 to index
      %c0_157 = arith.constant 0 : index
      %c0_158 = arith.constant 0 : index
      %201 = vector.load %arg6[%200, %c0_157, %c0_158] : memref<28x28x128xf32, #tpu.memory_space<vmem>>, vector<1x28x128xf32>
      %202 = vector.shape_cast %201 : vector<1x28x128xf32> to vector<28x128xf32>
      %203 = vector.shape_cast %199 : vector<28x128xf32> to vector<1x28x128xf32>
      tpu.vector_store %arg6[%200, %c0_157, %c0_158], %203 {strides = array<i32>} : memref<28x28x128xf32, #tpu.memory_space<vmem>>, vector<1x28x128xf32>,
    }
    %c28_i32_20 = arith.constant 28 : i32
    return
  }
  func.func @transform_0(%arg0: i32) -> (i32, i32, i32, i32) {
    %c0_i32 = arith.constant 0 : i32
    %c0_i32_0 = arith.constant 0 : i32
    %c0_i32_1 = arith.constant 0 : i32
    %c0_i32_2 = arith.constant 0 : i32
    return %c0_i32, %c0_i32_0, %c0_i32_1, %arg0 : i32, i32, i32, i32
  }
  func.func @transform_1(%arg0: i32) -> (i32, i32, i32, i32) {
    %c0_i32 = arith.constant 0 : i32
    %c0_i32_0 = arith.constant 0 : i32
    %c0_i32_1 = arith.constant 0 : i32
    %c0_i32_2 = arith.constant 0 : i32
    %c0_i32_3 = arith.constant 0 : i32
    return %c0_i32, %c0_i32_0, %c0_i32_1, %c0_i32_2 : i32, i32, i32, i32
  }
  func.func @transform_2(%arg0: i32) -> (i32, i32, i32) {
    %c0_i32 = arith.constant 0 : i32
    %c0_i32_0 = arith.constant 0 : i32
    %c0_i32_1 = arith.constant 0 : i32
    %c0_i32_2 = arith.constant 0 : i32
    return %c0_i32, %c0_i32_0, %c0_i32_1 : i32, i32, i32
  }
  func.func @transform_3(%arg0: i32) -> (i32, i32, i32, i32) {
    %c0_i32 = arith.constant 0 : i32
    %c0_i32_0 = arith.constant 0 : i32
    %c0_i32_1 = arith.constant 0 : i32
    %c0_i32_2 = arith.constant 0 : i32
    %c0_i32_3 = arith.constant 0 : i32
    return %c0_i32, %c0_i32_0, %c0_i32_1, %c0_i32_2 : i32, i32, i32, i32
  }
  func.func @transform_4(%arg0: i32) -> i32 {
    %c0_i32 = arith.constant 0 : i32
    %c0_i32_0 = arith.constant 0 : i32
    return %c0_i32 : i32
  }
  func.func @transform_5(%arg0: i32) -> (i32, i32, i32) {
    %c0_i32 = arith.constant 0 : i32
    %c0_i32_0 = arith.constant 0 : i32
    %c0_i32_1 = arith.constant 0 : i32
    return %c0_i32, %c0_i32_0, %arg0 : i32, i32, i32
  }
}

</mosaic_0001>

<llo_original>
// kernel: neuralnet_forward.1
$region0: #{neuralnet_forward.1}
  #allocation0 [shape = 'u32[]', space=smem, size = 0x4, offset = 0x4, fixed_abs, tag = 'smem constant byte address 0x4 - core index']
  #allocation1 [shape = 'u32[72,128]{1,0:T(1,128)}', space=vmem, size = 0x9000, scoped, tag = 'internal scratch']
  #allocation2 [shape = 'f32[30,30,16,128]{3,2,1,0:T(8,128)}', space=vmem, size = 0x708000, scoped, tag = 'scratch operand']
  #allocation3 [shape = 'f32[1]{0:T(128)S(6)}', space=smem, size = 0x200, scoped, tag = 'scoped memory for neuralnet_forward.1']
  %s0 = inlined_call_operand.vmem [shape: f32[30,30,8,128], index: 0, kind: input, shape index: {}]
  %s1 = inlined_call_operand.vmem [shape: f32[9,2,8,128], index: 1, kind: input, shape index: {}]
  %s2 = inlined_call_operand.vmem [shape: f32[2,8,128], index: 2, kind: input, shape index: {}]
  %s3 = inlined_call_operand.vmem [shape: f32[9,2,8,128], index: 3, kind: input, shape index: {}]
  %s4 = inlined_call_operand.<no memory space> [shape: f32[1], index: 4, kind: input, shape index: {}]
  %s5 = inlined_call_operand.vmem [shape: f32[28,28,128], index: 5, kind: output, shape index: {}]
  %s6 = sld [smem:[#allocation0]]
  $region44: #{neuralnet_forward.1} parent=0
    _
  %s8 = ssub.s32 1, %s6
  %s9 = scalar_select 0, %s8, %s6
  %10 = sst [smem:[#allocation3]] %s4
  // Predicated region
  $region2: #{neuralnet_forward.1} parent=0 // pred_check
    _
  $region3: #{neuralnet_forward.1} parent=0 // pred_check_branch
    %12 = sbr.rel (0) target = $region5
  $region4: #{neuralnet_forward.1} parent=0 // pred_region
    _
  $region5: #{neuralnet_forward.1} parent=0 // pred_fallthru
    _
  // Predicated region
  $region6: #{neuralnet_forward.1} parent=0 // pred_check
    _
  $region7: #{neuralnet_forward.1} parent=0 // pred_check_branch
    %14 = sbr.rel (0) target = $region9
  $region8: #{neuralnet_forward.1} parent=0 // pred_region
    _
  $region9: #{neuralnet_forward.1} parent=0 // pred_fallthru
    _
  // Predicated region
  $region10: #{neuralnet_forward.1} parent=0 // pred_check
    _
  $region11: #{neuralnet_forward.1} parent=0 // pred_check_branch
    %16 = sbr.rel (0) target = $region13
  $region12: #{neuralnet_forward.1} parent=0 // pred_region
    _
  $region13: #{neuralnet_forward.1} parent=0 // pred_fallthru
    _
  // Predicated region
  $region14: #{neuralnet_forward.1} parent=0 // pred_check
    _
  $region15: #{neuralnet_forward.1} parent=0 // pred_check_branch
    %18 = sbr.rel (0) target = $region17
  $region16: #{neuralnet_forward.1} parent=0 // pred_region
    _
  $region17: #{neuralnet_forward.1} parent=0 // pred_fallthru
    _
  // Predicated region
  $region18: #{neuralnet_forward.1} parent=0 // pred_check
    _
  $region19: #{neuralnet_forward.1} parent=0 // pred_check_branch
    %20 = sbr.rel (0) target = $region21
  $region20: #{neuralnet_forward.1} parent=0 // pred_region
    _
  $region21: #{neuralnet_forward.1} parent=0 // pred_fallthru
    _
  %s21 = sld [smem:[#allocation3]]
  %22 = vst [vmem:[#allocation2] sm:$0xff] 0.0
  %23 = vst [vmem:[#allocation2 + $0x8] sm:$0xff] 0.0
  %24 = vst [vmem:[#allocation2 + $0x10] sm:$0xff] 0.0
  %25 = vst [vmem:[#allocation2 + $0x18] sm:$0xff] 0.0
  %26 = vst [vmem:[#allocation2 + $0x20] sm:$0xff] 0.0
  %27 = vst [vmem:[#allocation2 + $0x28] sm:$0xff] 0.0
  %28 = vst [vmem:[#allocation2 + $0x30] sm:$0xff] 0.0
  %29 = vst [vmem:[#allocation2 + $0x38] sm:$0xff] 0.0
  %30 = vst [vmem:[#allocation2 + $0x40] sm:$0xff] 0.0
  %31 = vst [vmem:[#allocation2 + $0x48] sm:$0xff] 0.0
  %32 = vst [vmem:[#allocation2 + $0x50] sm:$0xff] 0.0
  %33 = vst [vmem:[#allocation2 + $0x58] sm:$0xff] 0.0
  %34 = vst [vmem:[#allocation2 + $0x60] sm:$0xff] 0.0
  %35 = vst [vmem:[#allocation2 + $0x68] sm:$0xff] 0.0
  %36 = vst [vmem:[#allocation2 + $0x70] sm:$0xff] 0.0
  %37 = vst [vmem:[#allocation2 + $0x78] sm:$0xff] 0.0
  %38 = vst [vmem:[#allocation2 + $0x80] sm:$0xff] 0.0
  %39 = vst [vmem:[#allocation2 + $0x88] sm:$0xff] 0.0
  %40 = vst [vmem:[#allocation2 + $0x90] sm:$0xff] 0.0
  %41 = vst [vmem:[#allocation2 + $0x98] sm:$0xff] 0.0
  %42 = vst [vmem:[#allocation2 + $0xa0] sm:$0xff] 0.0
  %43 = vst [vmem:[#allocation2 + $0xa8] sm:$0xff] 0.0
  %44 = vst [vmem:[#allocation2 + $0xb0] sm:$0xff] 0.0
  %45 = vst [vmem:[#allocation2 + $0xb8] sm:$0xff] 0.0
  %46 = vst [vmem:[#allocation2 + $0xc0] sm:$0xff] 0.0
  %47 = vst [vmem:[#allocation2 + $0xc8] sm:$0xff] 0.0
  %48 = vst [vmem:[#allocation2 + $0xd0] sm:$0xff] 0.0
  %49 = vst [vmem:[#allocation2 + $0xd8] sm:$0xff] 0.0
  %50 = vst [vmem:[#allocation2 + $0xe0] sm:$0xff] 0.0
  %51 = vst [vmem:[#allocation2 + $0xe8] sm:$0xff] 0.0
  %52 = vst [vmem:[#allocation2 + $0xf0] sm:$0xff] 0.0
  %53 = vst [vmem:[#allocation2 + $0xf8] sm:$0xff] 0.0
  %54 = vst [vmem:[#allocation2 + $0x100] sm:$0xff] 0.0
  %55 = vst [vmem:[#allocation2 + $0x108] sm:$0xff] 0.0
  %56 = vst [vmem:[#allocation2 + $0x110] sm:$0xff] 0.0
  %57 = vst [vmem:[#allocation2 + $0x118] sm:$0xff] 0.0
  %58 = vst [vmem:[#allocation2 + $0x120] sm:$0xff] 0.0
  %59 = vst [vmem:[#allocation2 + $0x128] sm:$0xff] 0.0
  %60 = vst [vmem:[#allocation2 + $0x130] sm:$0xff] 0.0
  %61 = vst [vmem:[#allocation2 + $0x138] sm:$0xff] 0.0
  %62 = vst [vmem:[#allocation2 + $0x140] sm:$0xff] 0.0
  %63 = vst [vmem:[#allocation2 + $0x148] sm:$0xff] 0.0
  %64 = vst [vmem:[#allocation2 + $0x150] sm:$0xff] 0.0
  %65 = vst [vmem:[#allocation2 + $0x158] sm:$0xff] 0.0
  %66 = vst [vmem:[#allocation2 + $0x160] sm:$0xff] 0.0
  %67 = vst [vmem:[#allocation2 + $0x168] sm:$0xff] 0.0
  %68 = vst [vmem:[#allocation2 + $0x170] sm:$0xff] 0.0
  %69 = vst [vmem:[#allocation2 + $0x178] sm:$0xff] 0.0
  %70 = vst [vmem:[#allocation2 + $0x180] sm:$0xff] 0.0
  %71 = vst [vmem:[#allocation2 + $0x188] sm:$0xff] 0.0
  %72 = vst [vmem:[#allocation2 + $0x190] sm:$0xff] 0.0
  %73 = vst [vmem:[#allocation2 + $0x198] sm:$0xff] 0.0
  %74 = vst [vmem:[#allocation2 + $0x1a0] sm:$0xff] 0.0
  %75 = vst [vmem:[#allocation2 + $0x1a8] sm:$0xff] 0.0
  %76 = vst [vmem:[#allocation2 + $0x1b0] sm:$0xff] 0.0
  %77 = vst [vmem:[#allocation2 + $0x1b8] sm:$0xff] 0.0
  %78 = vst [vmem:[#allocation2 + $0x1c0] sm:$0xff] 0.0
  %79 = vst [vmem:[#allocation2 + $0x1c8] sm:$0xff] 0.0
  %80 = vst [vmem:[#allocation2 + $0x1d0] sm:$0xff] 0.0
  %81 = vst [vmem:[#allocation2 + $0x1d8] sm:$0xff] 0.0
  %s82 = scalar_lea.vmem [#allocation2], 13920
  %83 = vst [vmem:[%s82] sm:$0xff] 0.0
  %84 = vst [vmem:[%s82 + $0x8] sm:$0xff] 0.0
  %85 = vst [vmem:[%s82 + $0x10] sm:$0xff] 0.0
  %86 = vst [vmem:[%s82 + $0x18] sm:$0xff] 0.0
  %87 = vst [vmem:[%s82 + $0x20] sm:$0xff] 0.0
  %88 = vst [vmem:[%s82 + $0x28] sm:$0xff] 0.0
  %89 = vst [vmem:[%s82 + $0x30] sm:$0xff] 0.0
  %90 = vst [vmem:[%s82 + $0x38] sm:$0xff] 0.0
  %91 = vst [vmem:[%s82 + $0x40] sm:$0xff] 0.0
  %92 = vst [vmem:[%s82 + $0x48] sm:$0xff] 0.0
  %93 = vst [vmem:[%s82 + $0x50] sm:$0xff] 0.0
  %94 = vst [vmem:[%s82 + $0x58] sm:$0xff] 0.0
  %95 = vst [vmem:[%s82 + $0x60] sm:$0xff] 0.0
  %96 = vst [vmem:[%s82 + $0x68] sm:$0xff] 0.0
  %97 = vst [vmem:[%s82 + $0x70] sm:$0xff] 0.0
  %98 = vst [vmem:[%s82 + $0x78] sm:$0xff] 0.0
  %99 = vst [vmem:[%s82 + $0x80] sm:$0xff] 0.0
  %100 = vst [vmem:[%s82 + $0x88] sm:$0xff] 0.0
  %101 = vst [vmem:[%s82 + $0x90] sm:$0xff] 0.0
  %102 = vst [vmem:[%s82 + $0x98] sm:$0xff] 0.0
  %103 = vst [vmem:[%s82 + $0xa0] sm:$0xff] 0.0
  %104 = vst [vmem:[%s82 + $0xa8] sm:$0xff] 0.0
  %105 = vst [vmem:[%s82 + $0xb0] sm:$0xff] 0.0
  %106 = vst [vmem:[%s82 + $0xb8] sm:$0xff] 0.0
  %107 = vst [vmem:[%s82 + $0xc0] sm:$0xff] 0.0
  %108 = vst [vmem:[%s82 + $0xc8] sm:$0xff] 0.0
  %109 = vst [vmem:[%s82 + $0xd0] sm:$0xff] 0.0
  %110 = vst [vmem:[%s82 + $0xd8] sm:$0xff] 0.0
  %111 = vst [vmem:[%s82 + $0xe0] sm:$0xff] 0.0
  %112 = vst [vmem:[%s82 + $0xe8] sm:$0xff] 0.0
  %113 = vst [vmem:[%s82 + $0xf0] sm:$0xff] 0.0
  %114 = vst [vmem:[%s82 + $0xf8] sm:$0xff] 0.0
  %115 = vst [vmem:[%s82 + $0x100] sm:$0xff] 0.0
  %116 = vst [vmem:[%s82 + $0x108] sm:$0xff] 0.0
  %117 = vst [vmem:[%s82 + $0x110] sm:$0xff] 0.0
  %118 = vst [vmem:[%s82 + $0x118] sm:$0xff] 0.0
  %119 = vst [vmem:[%s82 + $0x120] sm:$0xff] 0.0
  %120 = vst [vmem:[%s82 + $0x128] sm:$0xff] 0.0
  %121 = vst [vmem:[%s82 + $0x130] sm:$0xff] 0.0
  %122 = vst [vmem:[%s82 + $0x138] sm:$0xff] 0.0
  %123 = vst [vmem:[%s82 + $0x140] sm:$0xff] 0.0
  %124 = vst [vmem:[%s82 + $0x148] sm:$0xff] 0.0
  %125 = vst [vmem:[%s82 + $0x150] sm:$0xff] 0.0
  %126 = vst [vmem:[%s82 + $0x158] sm:$0xff] 0.0
  %127 = vst [vmem:[%s82 + $0x160] sm:$0xff] 0.0
  %128 = vst [vmem:[%s82 + $0x168] sm:$0xff] 0.0
  %129 = vst [vmem:[%s82 + $0x170] sm:$0xff] 0.0
  %130 = vst [vmem:[%s82 + $0x178] sm:$0xff] 0.0
  %131 = vst [vmem:[%s82 + $0x180] sm:$0xff] 0.0
  %132 = vst [vmem:[%s82 + $0x188] sm:$0xff] 0.0
  %133 = vst [vmem:[%s82 + $0x190] sm:$0xff] 0.0
  %134 = vst [vmem:[%s82 + $0x198] sm:$0xff] 0.0
  %135 = vst [vmem:[%s82 + $0x1a0] sm:$0xff] 0.0
  %136 = vst [vmem:[%s82 + $0x1a8] sm:$0xff] 0.0
  %137 = vst [vmem:[%s82 + $0x1b0] sm:$0xff] 0.0
  %138 = vst [vmem:[%s82 + $0x1b8] sm:$0xff] 0.0
  %139 = vst [vmem:[%s82 + $0x1c0] sm:$0xff] 0.0
  %140 = vst [vmem:[%s82 + $0x1c8] sm:$0xff] 0.0
  %141 = vst [vmem:[%s82 + $0x1d0] sm:$0xff] 0.0
  %142 = vst [vmem:[%s82 + $0x1d8] sm:$0xff] 0.0
  %143 = vst [vmem:[#allocation2] sm:$0xff] 0.0
  %144 = vst [vmem:[#allocation2 + $0x8] sm:$0xff] 0.0
  %145 = vst [vmem:[#allocation2 + $0x1e0] sm:$0xff] 0.0
  %146 = vst [vmem:[#allocation2 + $0x1e8] sm:$0xff] 0.0
  %147 = vst [vmem:[#allocation2 + $0x3c0] sm:$0xff] 0.0
  %148 = vst [vmem:[#allocation2 + $0x3c8] sm:$0xff] 0.0
  %149 = vst [vmem:[#allocation2 + $0x5a0] sm:$0xff] 0.0
  %150 = vst [vmem:[#allocation2 + $0x5a8] sm:$0xff] 0.0
  %151 = vst [vmem:[#allocation2 + $0x780] sm:$0xff] 0.0
  %152 = vst [vmem:[#allocation2 + $0x788] sm:$0xff] 0.0
  %153 = vst [vmem:[#allocation2 + $0x960] sm:$0xff] 0.0
  %154 = vst [vmem:[#allocation2 + $0x968] sm:$0xff] 0.0
  %155 = vst [vmem:[#allocation2 + $0xb40] sm:$0xff] 0.0
  %156 = vst [vmem:[#allocation2 + $0xb48] sm:$0xff] 0.0
  %157 = vst [vmem:[#allocation2 + $0xd20] sm:$0xff] 0.0
  %158 = vst [vmem:[#allocation2 + $0xd28] sm:$0xff] 0.0
  %159 = vst [vmem:[#allocation2 + $0xf00] sm:$0xff] 0.0
  %160 = vst [vmem:[#allocation2 + $0xf08] sm:$0xff] 0.0
  %161 = vst [vmem:[#allocation2 + $0x10e0] sm:$0xff] 0.0
  %162 = vst [vmem:[#allocation2 + $0x10e8] sm:$0xff] 0.0
  %163 = vst [vmem:[#allocation2 + $0x12c0] sm:$0xff] 0.0
  %164 = vst [vmem:[#allocation2 + $0x12c8] sm:$0xff] 0.0
  %165 = vst [vmem:[#allocation2 + $0x14a0] sm:$0xff] 0.0
  %166 = vst [vmem:[#allocation2 + $0x14a8] sm:$0xff] 0.0
  %167 = vst [vmem:[#allocation2 + $0x1680] sm:$0xff] 0.0
  %168 = vst [vmem:[#allocation2 + $0x1688] sm:$0xff] 0.0
  %169 = vst [vmem:[#allocation2 + $0x1860] sm:$0xff] 0.0
  %170 = vst [vmem:[#allocation2 + $0x1868] sm:$0xff] 0.0
  %171 = vst [vmem:[#allocation2 + $0x1a40] sm:$0xff] 0.0
  %172 = vst [vmem:[#allocation2 + $0x1a48] sm:$0xff] 0.0
  %173 = vst [vmem:[#allocation2 + $0x1c20] sm:$0xff] 0.0
  %174 = vst [vmem:[#allocation2 + $0x1c28] sm:$0xff] 0.0
  %175 = vst [vmem:[#allocation2 + $0x1e00] sm:$0xff] 0.0
  %176 = vst [vmem:[#allocation2 + $0x1e08] sm:$0xff] 0.0
  %177 = vst [vmem:[#allocation2 + $0x1fe0] sm:$0xff] 0.0
  %178 = vst [vmem:[#allocation2 + $0x1fe8] sm:$0xff] 0.0
  %179 = vst [vmem:[#allocation2 + $0x21c0] sm:$0xff] 0.0
  %180 = vst [vmem:[#allocation2 + $0x21c8] sm:$0xff] 0.0
  %181 = vst [vmem:[#allocation2 + $0x23a0] sm:$0xff] 0.0
  %182 = vst [vmem:[#allocation2 + $0x23a8] sm:$0xff] 0.0
  %183 = vst [vmem:[#allocation2 + $0x2580] sm:$0xff] 0.0
  %184 = vst [vmem:[#allocation2 + $0x2588] sm:$0xff] 0.0
  %185 = vst [vmem:[#allocation2 + $0x2760] sm:$0xff] 0.0
  %186 = vst [vmem:[#allocation2 + $0x2768] sm:$0xff] 0.0
  %187 = vst [vmem:[#allocation2 + $0x2940] sm:$0xff] 0.0
  %188 = vst [vmem:[#allocation2 + $0x2948] sm:$0xff] 0.0
  %189 = vst [vmem:[#allocation2 + $0x2b20] sm:$0xff] 0.0
  %190 = vst [vmem:[#allocation2 + $0x2b28] sm:$0xff] 0.0
  %191 = vst [vmem:[#allocation2 + $0x2d00] sm:$0xff] 0.0
  %192 = vst [vmem:[#allocation2 + $0x2d08] sm:$0xff] 0.0
  %193 = vst [vmem:[#allocation2 + $0x2ee0] sm:$0xff] 0.0
  %194 = vst [vmem:[#allocation2 + $0x2ee8] sm:$0xff] 0.0
  %195 = vst [vmem:[#allocation2 + $0x30c0] sm:$0xff] 0.0
  %196 = vst [vmem:[#allocation2 + $0x30c8] sm:$0xff] 0.0
  %197 = vst [vmem:[#allocation2 + $0x32a0] sm:$0xff] 0.0
  %198 = vst [vmem:[#allocation2 + $0x32a8] sm:$0xff] 0.0
  %199 = vst [vmem:[#allocation2 + $0x3480] sm:$0xff] 0.0
  %200 = vst [vmem:[#allocation2 + $0x3488] sm:$0xff] 0.0
  %201 = vst [vmem:[#allocation2 + $0x3660] sm:$0xff] 0.0
  %202 = vst [vmem:[#allocation2 + $0x3668] sm:$0xff] 0.0
  %s203 = scalar_lea.vmem [#allocation2], 464
  %204 = vst [vmem:[%s203] sm:$0xff] 0.0
  %205 = vst [vmem:[%s203 + $0x8] sm:$0xff] 0.0
  %206 = vst [vmem:[%s203 + $0x1e0] sm:$0xff] 0.0
  %207 = vst [vmem:[%s203 + $0x1e8] sm:$0xff] 0.0
  %208 = vst [vmem:[%s203 + $0x3c0] sm:$0xff] 0.0
  %209 = vst [vmem:[%s203 + $0x3c8] sm:$0xff] 0.0
  %210 = vst [vmem:[%s203 + $0x5a0] sm:$0xff] 0.0
  %211 = vst [vmem:[%s203 + $0x5a8] sm:$0xff] 0.0
  %212 = vst [vmem:[%s203 + $0x780] sm:$0xff] 0.0
  %213 = vst [vmem:[%s203 + $0x788] sm:$0xff] 0.0
  %214 = vst [vmem:[%s203 + $0x960] sm:$0xff] 0.0
  %215 = vst [vmem:[%s203 + $0x968] sm:$0xff] 0.0
  %216 = vst [vmem:[%s203 + $0xb40] sm:$0xff] 0.0
  %217 = vst [vmem:[%s203 + $0xb48] sm:$0xff] 0.0
  %218 = vst [vmem:[%s203 + $0xd20] sm:$0xff] 0.0
  %219 = vst [vmem:[%s203 + $0xd28] sm:$0xff] 0.0
  %220 = vst [vmem:[%s203 + $0xf00] sm:$0xff] 0.0
  %221 = vst [vmem:[%s203 + $0xf08] sm:$0xff] 0.0
  %222 = vst [vmem:[%s203 + $0x10e0] sm:$0xff] 0.0
  %223 = vst [vmem:[%s203 + $0x10e8] sm:$0xff] 0.0
  %224 = vst [vmem:[%s203 + $0x12c0] sm:$0xff] 0.0
  %225 = vst [vmem:[%s203 + $0x12c8] sm:$0xff] 0.0
  %226 = vst [vmem:[%s203 + $0x14a0] sm:$0xff] 0.0
  %227 = vst [vmem:[%s203 + $0x14a8] sm:$0xff] 0.0
  %228 = vst [vmem:[%s203 + $0x1680] sm:$0xff] 0.0
  %229 = vst [vmem:[%s203 + $0x1688] sm:$0xff] 0.0
  %230 = vst [vmem:[%s203 + $0x1860] sm:$0xff] 0.0
  %231 = vst [vmem:[%s203 + $0x1868] sm:$0xff] 0.0
  %232 = vst [vmem:[%s203 + $0x1a40] sm:$0xff] 0.0
  %233 = vst [vmem:[%s203 + $0x1a48] sm:$0xff] 0.0
  %234 = vst [vmem:[%s203 + $0x1c20] sm:$0xff] 0.0
  %235 = vst [vmem:[%s203 + $0x1c28] sm:$0xff] 0.0
  %236 = vst [vmem:[%s203 + $0x1e00] sm:$0xff] 0.0
  %237 = vst [vmem:[%s203 + $0x1e08] sm:$0xff] 0.0
  %238 = vst [vmem:[%s203 + $0x1fe0] sm:$0xff] 0.0
  %239 = vst [vmem:[%s203 + $0x1fe8] sm:$0xff] 0.0
  %240 = vst [vmem:[%s203 + $0x21c0] sm:$0xff] 0.0
  %241 = vst [vmem:[%s203 + $0x21c8] sm:$0xff] 0.0
  %242 = vst [vmem:[%s203 + $0x23a0] sm:$0xff] 0.0
  %243 = vst [vmem:[%s203 + $0x23a8] sm:$0xff] 0.0
  %244 = vst [vmem:[%s203 + $0x2580] sm:$0xff] 0.0
  %245 = vst [vmem:[%s203 + $0x2588] sm:$0xff] 0.0
  %246 = vst [vmem:[%s203 + $0x2760] sm:$0xff] 0.0
  %247 = vst [vmem:[%s203 + $0x2768] sm:$0xff] 0.0
  %248 = vst [vmem:[%s203 + $0x2940] sm:$0xff] 0.0
  %249 = vst [vmem:[%s203 + $0x2948] sm:$0xff] 0.0
  %250 = vst [vmem:[%s203 + $0x2b20] sm:$0xff] 0.0
  %251 = vst [vmem:[%s203 + $0x2b28] sm:$0xff] 0.0
  %252 = vst [vmem:[%s203 + $0x2d00] sm:$0xff] 0.0
  %253 = vst [vmem:[%s203 + $0x2d08] sm:$0xff] 0.0
  %254 = vst [vmem:[%s203 + $0x2ee0] sm:$0xff] 0.0
  %255 = vst [vmem:[%s203 + $0x2ee8] sm:$0xff] 0.0
  %256 = vst [vmem:[%s203 + $0x30c0] sm:$0xff] 0.0
  %257 = vst [vmem:[%s203 + $0x30c8] sm:$0xff] 0.0
  %258 = vst [vmem:[%s203 + $0x32a0] sm:$0xff] 0.0
  %259 = vst [vmem:[%s203 + $0x32a8] sm:$0xff] 0.0
  %260 = vst [vmem:[%s203 + $0x3480] sm:$0xff] 0.0
  %261 = vst [vmem:[%s203 + $0x3488] sm:$0xff] 0.0
  %262 = vst [vmem:[%s203 + $0x3660] sm:$0xff] 0.0
  %263 = vst [vmem:[%s203 + $0x3668] sm:$0xff] 0.0
  loop: start=0, step=1, limit=28
  $region22: #{neuralnet_forward.1} parent=0 // loop_pre_header
    _
  $region23: #{neuralnet_forward.1} parent=0 // loop_header
    %s265 = sphi 0, %s269
    %p266 = scmp.ge.s32.totalorder %s265, 28
  $region24: #{neuralnet_forward.1} parent=0 // loop_header_branch
    %268 = sbr.rel (%p266) target = $region28
  $region25: #{neuralnet_forward.1} parent=0 // loop_body
    %s270 = smul.u32 %s265, 240
    %s271 = scalar_lea.vmem %s0, %s270
    %v272 = vld [vmem:[%s271] sm:$0xff]
    %v273 = vld [vmem:[%s271 + $0x8] sm:$0xff]
    %v274 = vld [vmem:[%s271 + $0x10] sm:$0xff]
    %v275 = vld [vmem:[%s271 + $0x18] sm:$0xff]
    %v276 = vld [vmem:[%s271 + $0x20] sm:$0xff]
    %v277 = vld [vmem:[%s271 + $0x28] sm:$0xff]
    %v278 = vld [vmem:[%s271 + $0x30] sm:$0xff]
    %v279 = vld [vmem:[%s271 + $0x38] sm:$0xff]
    %v280 = vld [vmem:[%s271 + $0x40] sm:$0xff]
    %v281 = vld [vmem:[%s271 + $0x48] sm:$0xff]
    %v282 = vld [vmem:[%s271 + $0x50] sm:$0xff]
    %v283 = vld [vmem:[%s271 + $0x58] sm:$0xff]
    %v284 = vld [vmem:[%s271 + $0x60] sm:$0xff]
    %v285 = vld [vmem:[%s271 + $0x68] sm:$0xff]
    %v286 = vld [vmem:[%s271 + $0x70] sm:$0xff]
    %v287 = vld [vmem:[%s271 + $0x78] sm:$0xff]
    %v288 = vld [vmem:[%s271 + $0x80] sm:$0xff]
    %v289 = vld [vmem:[%s271 + $0x88] sm:$0xff]
    %v290 = vld [vmem:[%s271 + $0x90] sm:$0xff]
    %v291 = vld [vmem:[%s271 + $0x98] sm:$0xff]
    %v292 = vld [vmem:[%s271 + $0xa0] sm:$0xff]
    %v293 = vld [vmem:[%s271 + $0xa8] sm:$0xff]
    %v294 = vld [vmem:[%s271 + $0xb0] sm:$0xff]
    %v295 = vld [vmem:[%s271 + $0xb8] sm:$0xff]
    %v296 = vld [vmem:[%s271 + $0xc0] sm:$0xff]
    %v297 = vld [vmem:[%s271 + $0xc8] sm:$0xff]
    %v298 = vld [vmem:[%s271 + $0xd0] sm:$0xff]
    %v299 = vld [vmem:[%s271 + $0xd8] sm:$0xff]
    %v300 = vld [vmem:[%s1] sm:$0xff]
    %v301 = vmul.f32 %v272, %v300
    %v302 = vmul.f32 %v273, %v300
    %v303 = vmul.f32 %v274, %v300
    %v304 = vmul.f32 %v275, %v300
    %v305 = vmul.f32 %v276, %v300
    %v306 = vmul.f32 %v277, %v300
    %v307 = vmul.f32 %v278, %v300
    %v308 = vmul.f32 %v279, %v300
    %v309 = vmul.f32 %v280, %v300
    %v310 = vmul.f32 %v281, %v300
    %v311 = vmul.f32 %v282, %v300
    %v312 = vmul.f32 %v283, %v300
    %v313 = vmul.f32 %v284, %v300
    %v314 = vmul.f32 %v285, %v300
    %v315 = vmul.f32 %v286, %v300
    %v316 = vmul.f32 %v287, %v300
    %v317 = vmul.f32 %v288, %v300
    %v318 = vmul.f32 %v289, %v300
    %v319 = vmul.f32 %v290, %v300
    %v320 = vmul.f32 %v291, %v300
    %v321 = vmul.f32 %v292, %v300
    %v322 = vmul.f32 %v293, %v300
    %v323 = vmul.f32 %v294, %v300
    %v324 = vmul.f32 %v295, %v300
    %v325 = vmul.f32 %v296, %v300
    %v326 = vmul.f32 %v297, %v300
    %v327 = vmul.f32 %v298, %v300
    %v328 = vmul.f32 %v299, %v300
    %s329 = sadd.s32 8, %s270
    %s330 = scalar_lea.vmem %s0, %s329
    %v331 = vld [vmem:[%s330] sm:$0xff]
    %v332 = vld [vmem:[%s330 + $0x8] sm:$0xff]
    %v333 = vld [vmem:[%s330 + $0x10] sm:$0xff]
    %v334 = vld [vmem:[%s330 + $0x18] sm:$0xff]
    %v335 = vld [vmem:[%s330 + $0x20] sm:$0xff]
    %v336 = vld [vmem:[%s330 + $0x28] sm:$0xff]
    %v337 = vld [vmem:[%s330 + $0x30] sm:$0xff]
    %v338 = vld [vmem:[%s330 + $0x38] sm:$0xff]
    %v339 = vld [vmem:[%s330 + $0x40] sm:$0xff]
    %v340 = vld [vmem:[%s330 + $0x48] sm:$0xff]
    %v341 = vld [vmem:[%s330 + $0x50] sm:$0xff]
    %v342 = vld [vmem:[%s330 + $0x58] sm:$0xff]
    %v343 = vld [vmem:[%s330 + $0x60] sm:$0xff]
    %v344 = vld [vmem:[%s330 + $0x68] sm:$0xff]
    %v345 = vld [vmem:[%s330 + $0x70] sm:$0xff]
    %v346 = vld [vmem:[%s330 + $0x78] sm:$0xff]
    %v347 = vld [vmem:[%s330 + $0x80] sm:$0xff]
    %v348 = vld [vmem:[%s330 + $0x88] sm:$0xff]
    %v349 = vld [vmem:[%s330 + $0x90] sm:$0xff]
    %v350 = vld [vmem:[%s330 + $0x98] sm:$0xff]
    %v351 = vld [vmem:[%s330 + $0xa0] sm:$0xff]
    %v352 = vld [vmem:[%s330 + $0xa8] sm:$0xff]
    %v353 = vld [vmem:[%s330 + $0xb0] sm:$0xff]
    %v354 = vld [vmem:[%s330 + $0xb8] sm:$0xff]
    %v355 = vld [vmem:[%s330 + $0xc0] sm:$0xff]
    %v356 = vld [vmem:[%s330 + $0xc8] sm:$0xff]
    %v357 = vld [vmem:[%s330 + $0xd0] sm:$0xff]
    %v358 = vld [vmem:[%s330 + $0xd8] sm:$0xff]
    %s359 = scalar_lea.vmem %s1, 16
    %v360 = vld [vmem:[%s359] sm:$0xff]
    %v361 = vmul.f32 %v331, %v360
    %v362 = vmul.f32 %v332, %v360
    %v363 = vmul.f32 %v333, %v360
    %v364 = vmul.f32 %v334, %v360
    %v365 = vmul.f32 %v335, %v360
    %v366 = vmul.f32 %v336, %v360
    %v367 = vmul.f32 %v337, %v360
    %v368 = vmul.f32 %v338, %v360
    %v369 = vmul.f32 %v339, %v360
    %v370 = vmul.f32 %v340, %v360
    %v371 = vmul.f32 %v341, %v360
    %v372 = vmul.f32 %v342, %v360
    %v373 = vmul.f32 %v343, %v360
    %v374 = vmul.f32 %v344, %v360
    %v375 = vmul.f32 %v345, %v360
    %v376 = vmul.f32 %v346, %v360
    %v377 = vmul.f32 %v347, %v360
    %v378 = vmul.f32 %v348, %v360
    %v379 = vmul.f32 %v349, %v360
    %v380 = vmul.f32 %v350, %v360
    %v381 = vmul.f32 %v351, %v360
    %v382 = vmul.f32 %v352, %v360
    %v383 = vmul.f32 %v353, %v360
    %v384 = vmul.f32 %v354, %v360
    %v385 = vmul.f32 %v355, %v360
    %v386 = vmul.f32 %v356, %v360
    %v387 = vmul.f32 %v357, %v360
    %v388 = vmul.f32 %v358, %v360
    %v389 = vadd.f32 %v301, %v361
    %v390 = vadd.f32 %v302, %v362
    %v391 = vadd.f32 %v303, %v363
    %v392 = vadd.f32 %v304, %v364
    %v393 = vadd.f32 %v305, %v365
    %v394 = vadd.f32 %v306, %v366
    %v395 = vadd.f32 %v307, %v367
    %v396 = vadd.f32 %v308, %v368
    %v397 = vadd.f32 %v309, %v369
    %v398 = vadd.f32 %v310, %v370
    %v399 = vadd.f32 %v311, %v371
    %v400 = vadd.f32 %v312, %v372
    %v401 = vadd.f32 %v313, %v373
    %v402 = vadd.f32 %v314, %v374
    %v403 = vadd.f32 %v315, %v375
    %v404 = vadd.f32 %v316, %v376
    %v405 = vadd.f32 %v317, %v377
    %v406 = vadd.f32 %v318, %v378
    %v407 = vadd.f32 %v319, %v379
    %v408 = vadd.f32 %v320, %v380
    %v409 = vadd.f32 %v321, %v381
    %v410 = vadd.f32 %v322, %v382
    %v411 = vadd.f32 %v323, %v383
    %v412 = vadd.f32 %v324, %v384
    %v413 = vadd.f32 %v325, %v385
    %v414 = vadd.f32 %v326, %v386
    %v415 = vadd.f32 %v327, %v387
    %v416 = vadd.f32 %v328, %v388
    %s417 = sadd.s32 16, %s270
    %s418 = scalar_lea.vmem %s0, %s417
    %v419 = vld [vmem:[%s418] sm:$0xff]
    %v420 = vld [vmem:[%s418 + $0x8] sm:$0xff]
    %v421 = vld [vmem:[%s418 + $0x10] sm:$0xff]
    %v422 = vld [vmem:[%s418 + $0x18] sm:$0xff]
    %v423 = vld [vmem:[%s418 + $0x20] sm:$0xff]
    %v424 = vld [vmem:[%s418 + $0x28] sm:$0xff]
    %v425 = vld [vmem:[%s418 + $0x30] sm:$0xff]
    %v426 = vld [vmem:[%s418 + $0x38] sm:$0xff]
    %v427 = vld [vmem:[%s418 + $0x40] sm:$0xff]
    %v428 = vld [vmem:[%s418 + $0x48] sm:$0xff]
    %v429 = vld [vmem:[%s418 + $0x50] sm:$0xff]
    %v430 = vld [vmem:[%s418 + $0x58] sm:$0xff]
    %v431 = vld [vmem:[%s418 + $0x60] sm:$0xff]
    %v432 = vld [vmem:[%s418 + $0x68] sm:$0xff]
    %v433 = vld [vmem:[%s418 + $0x70] sm:$0xff]
    %v434 = vld [vmem:[%s418 + $0x78] sm:$0xff]
    %v435 = vld [vmem:[%s418 + $0x80] sm:$0xff]
    %v436 = vld [vmem:[%s418 + $0x88] sm:$0xff]
    %v437 = vld [vmem:[%s418 + $0x90] sm:$0xff]
    %v438 = vld [vmem:[%s418 + $0x98] sm:$0xff]
    %v439 = vld [vmem:[%s418 + $0xa0] sm:$0xff]
    %v440 = vld [vmem:[%s418 + $0xa8] sm:$0xff]
    %v441 = vld [vmem:[%s418 + $0xb0] sm:$0xff]
    %v442 = vld [vmem:[%s418 + $0xb8] sm:$0xff]
    %v443 = vld [vmem:[%s418 + $0xc0] sm:$0xff]
    %v444 = vld [vmem:[%s418 + $0xc8] sm:$0xff]
    %v445 = vld [vmem:[%s418 + $0xd0] sm:$0xff]
    %v446 = vld [vmem:[%s418 + $0xd8] sm:$0xff]
    %s447 = scalar_lea.vmem %s1, 32
    %v448 = vld [vmem:[%s447] sm:$0xff]
    %v449 = vmul.f32 %v419, %v448
    %v450 = vmul.f32 %v420, %v448
    %v451 = vmul.f32 %v421, %v448
    %v452 = vmul.f32 %v422, %v448
    %v453 = vmul.f32 %v423, %v448
    %v454 = vmul.f32 %v424, %v448
    %v455 = vmul.f32 %v425, %v448
    %v456 = vmul.f32 %v426, %v448
    %v457 = vmul.f32 %v427, %v448
    %v458 = vmul.f32 %v428, %v448
    %v459 = vmul.f32 %v429, %v448
    %v460 = vmul.f32 %v430, %v448
    %v461 = vmul.f32 %v431, %v448
    %v462 = vmul.f32 %v432, %v448
    %v463 = vmul.f32 %v433, %v448
    %v464 = vmul.f32 %v434, %v448
    %v465 = vmul.f32 %v435, %v448
    %v466 = vmul.f32 %v436, %v448
    %v467 = vmul.f32 %v437, %v448
    %v468 = vmul.f32 %v438, %v448
    %v469 = vmul.f32 %v439, %v448
    %v470 = vmul.f32 %v440, %v448
    %v471 = vmul.f32 %v441, %v448
    %v472 = vmul.f32 %v442, %v448
    %v473 = vmul.f32 %v443, %v448
    %v474 = vmul.f32 %v444, %v448
    %v475 = vmul.f32 %v445, %v448
    %v476 = vmul.f32 %v446, %v448
    %v477 = vadd.f32 %v389, %v449
    %v478 = vadd.f32 %v390, %v450
    %v479 = vadd.f32 %v391, %v451
    %v480 = vadd.f32 %v392, %v452
    %v481 = vadd.f32 %v393, %v453
    %v482 = vadd.f32 %v394, %v454
    %v483 = vadd.f32 %v395, %v455
    %v484 = vadd.f32 %v396, %v456
    %v485 = vadd.f32 %v397, %v457
    %v486 = vadd.f32 %v398, %v458
    %v487 = vadd.f32 %v399, %v459
    %v488 = vadd.f32 %v400, %v460
    %v489 = vadd.f32 %v401, %v461
    %v490 = vadd.f32 %v402, %v462
    %v491 = vadd.f32 %v403, %v463
    %v492 = vadd.f32 %v404, %v464
    %v493 = vadd.f32 %v405, %v465
    %v494 = vadd.f32 %v406, %v466
    %v495 = vadd.f32 %v407, %v467
    %v496 = vadd.f32 %v408, %v468
    %v497 = vadd.f32 %v409, %v469
    %v498 = vadd.f32 %v410, %v470
    %v499 = vadd.f32 %v411, %v471
    %v500 = vadd.f32 %v412, %v472
    %v501 = vadd.f32 %v413, %v473
    %v502 = vadd.f32 %v414, %v474
    %v503 = vadd.f32 %v415, %v475
    %v504 = vadd.f32 %v416, %v476
    %s505 = sadd.s32 %s265, 1
    %s506 = smul.u32 %s505, 240
    %s507 = scalar_lea.vmem %s0, %s506
    %v508 = vld [vmem:[%s507] sm:$0xff]
    %v509 = vld [vmem:[%s507 + $0x8] sm:$0xff]
    %v510 = vld [vmem:[%s507 + $0x10] sm:$0xff]
    %v511 = vld [vmem:[%s507 + $0x18] sm:$0xff]
    %v512 = vld [vmem:[%s507 + $0x20] sm:$0xff]
    %v513 = vld [vmem:[%s507 + $0x28] sm:$0xff]
    %v514 = vld [vmem:[%s507 + $0x30] sm:$0xff]
    %v515 = vld [vmem:[%s507 + $0x38] sm:$0xff]
    %v516 = vld [vmem:[%s507 + $0x40] sm:$0xff]
    %v517 = vld [vmem:[%s507 + $0x48] sm:$0xff]
    %v518 = vld [vmem:[%s507 + $0x50] sm:$0xff]
    %v519 = vld [vmem:[%s507 + $0x58] sm:$0xff]
    %v520 = vld [vmem:[%s507 + $0x60] sm:$0xff]
    %v521 = vld [vmem:[%s507 + $0x68] sm:$0xff]
    %v522 = vld [vmem:[%s507 + $0x70] sm:$0xff]
    %v523 = vld [vmem:[%s507 + $0x78] sm:$0xff]
    %v524 = vld [vmem:[%s507 + $0x80] sm:$0xff]
    %v525 = vld [vmem:[%s507 + $0x88] sm:$0xff]
    %v526 = vld [vmem:[%s507 + $0x90] sm:$0xff]
    %v527 = vld [vmem:[%s507 + $0x98] sm:$0xff]
    %v528 = vld [vmem:[%s507 + $0xa0] sm:$0xff]
    %v529 = vld [vmem:[%s507 + $0xa8] sm:$0xff]
    %v530 = vld [vmem:[%s507 + $0xb0] sm:$0xff]
    %v531 = vld [vmem:[%s507 + $0xb8] sm:$0xff]
    %v532 = vld [vmem:[%s507 + $0xc0] sm:$0xff]
    %v533 = vld [vmem:[%s507 + $0xc8] sm:$0xff]
    %v534 = vld [vmem:[%s507 + $0xd0] sm:$0xff]
    %v535 = vld [vmem:[%s507 + $0xd8] sm:$0xff]
    %s536 = scalar_lea.vmem %s1, 48
    %v537 = vld [vmem:[%s536] sm:$0xff]
    %v538 = vmul.f32 %v508, %v537
    %v539 = vmul.f32 %v509, %v537
    %v540 = vmul.f32 %v510, %v537
    %v541 = vmul.f32 %v511, %v537
    %v542 = vmul.f32 %v512, %v537
    %v543 = vmul.f32 %v513, %v537
    %v544 = vmul.f32 %v514, %v537
    %v545 = vmul.f32 %v515, %v537
    %v546 = vmul.f32 %v516, %v537
    %v547 = vmul.f32 %v517, %v537
    %v548 = vmul.f32 %v518, %v537
    %v549 = vmul.f32 %v519, %v537
    %v550 = vmul.f32 %v520, %v537
    %v551 = vmul.f32 %v521, %v537
    %v552 = vmul.f32 %v522, %v537
    %v553 = vmul.f32 %v523, %v537
    %v554 = vmul.f32 %v524, %v537
    %v555 = vmul.f32 %v525, %v537
    %v556 = vmul.f32 %v526, %v537
    %v557 = vmul.f32 %v527, %v537
    %v558 = vmul.f32 %v528, %v537
    %v559 = vmul.f32 %v529, %v537
    %v560 = vmul.f32 %v530, %v537
    %v561 = vmul.f32 %v531, %v537
    %v562 = vmul.f32 %v532, %v537
    %v563 = vmul.f32 %v533, %v537
    %v564 = vmul.f32 %v534, %v537
    %v565 = vmul.f32 %v535, %v537
    %v566 = vadd.f32 %v477, %v538
    %v567 = vadd.f32 %v478, %v539
    %v568 = vadd.f32 %v479, %v540
    %v569 = vadd.f32 %v480, %v541
    %v570 = vadd.f32 %v481, %v542
    %v571 = vadd.f32 %v482, %v543
    %v572 = vadd.f32 %v483, %v544
    %v573 = vadd.f32 %v484, %v545
    %v574 = vadd.f32 %v485, %v546
    %v575 = vadd.f32 %v486, %v547
    %v576 = vadd.f32 %v487, %v548
    %v577 = vadd.f32 %v488, %v549
    %v578 = vadd.f32 %v489, %v550
    %v579 = vadd.f32 %v490, %v551
    %v580 = vadd.f32 %v491, %v552
    %v581 = vadd.f32 %v492, %v553
    %v582 = vadd.f32 %v493, %v554
    %v583 = vadd.f32 %v494, %v555
    %v584 = vadd.f32 %v495, %v556
    %v585 = vadd.f32 %v496, %v557
    %v586 = vadd.f32 %v497, %v558
    %v587 = vadd.f32 %v498, %v559
    %v588 = vadd.f32 %v499, %v560
    %v589 = vadd.f32 %v500, %v561
    %v590 = vadd.f32 %v501, %v562
    %v591 = vadd.f32 %v502, %v563
    %v592 = vadd.f32 %v503, %v564
    %v593 = vadd.f32 %v504, %v565
    %s594 = sadd.s32 8, %s506
    %s595 = scalar_lea.vmem %s0, %s594
    %v596 = vld [vmem:[%s595] sm:$0xff]
    %v597 = vld [vmem:[%s595 + $0x8] sm:$0xff]
    %v598 = vld [vmem:[%s595 + $0x10] sm:$0xff]
    %v599 = vld [vmem:[%s595 + $0x18] sm:$0xff]
    %v600 = vld [vmem:[%s595 + $0x20] sm:$0xff]
    %v601 = vld [vmem:[%s595 + $0x28] sm:$0xff]
    %v602 = vld [vmem:[%s595 + $0x30] sm:$0xff]
    %v603 = vld [vmem:[%s595 + $0x38] sm:$0xff]
    %v604 = vld [vmem:[%s595 + $0x40] sm:$0xff]
    %v605 = vld [vmem:[%s595 + $0x48] sm:$0xff]
    %v606 = vld [vmem:[%s595 + $0x50] sm:$0xff]
    %v607 = vld [vmem:[%s595 + $0x58] sm:$0xff]
    %v608 = vld [vmem:[%s595 + $0x60] sm:$0xff]
    %v609 = vld [vmem:[%s595 + $0x68] sm:$0xff]
    %v610 = vld [vmem:[%s595 + $0x70] sm:$0xff]
    %v611 = vld [vmem:[%s595 + $0x78] sm:$0xff]
    %v612 = vld [vmem:[%s595 + $0x80] sm:$0xff]
    %v613 = vld [vmem:[%s595 + $0x88] sm:$0xff]
    %v614 = vld [vmem:[%s595 + $0x90] sm:$0xff]
    %v615 = vld [vmem:[%s595 + $0x98] sm:$0xff]
    %v616 = vld [vmem:[%s595 + $0xa0] sm:$0xff]
    %v617 = vld [vmem:[%s595 + $0xa8] sm:$0xff]
    %v618 = vld [vmem:[%s595 + $0xb0] sm:$0xff]
    %v619 = vld [vmem:[%s595 + $0xb8] sm:$0xff]
    %v620 = vld [vmem:[%s595 + $0xc0] sm:$0xff]
    %v621 = vld [vmem:[%s595 + $0xc8] sm:$0xff]
    %v622 = vld [vmem:[%s595 + $0xd0] sm:$0xff]
    %v623 = vld [vmem:[%s595 + $0xd8] sm:$0xff]
    %s624 = scalar_lea.vmem %s1, 64
    %v625 = vld [vmem:[%s624] sm:$0xff]
    %v626 = vmul.f32 %v596, %v625
    %v627 = vmul.f32 %v597, %v625
    %v628 = vmul.f32 %v598, %v625
    %v629 = vmul.f32 %v599, %v625
    %v630 = vmul.f32 %v600, %v625
    %v631 = vmul.f32 %v601, %v625
    %v632 = vmul.f32 %v602, %v625
    %v633 = vmul.f32 %v603, %v625
    %v634 = vmul.f32 %v604, %v625
    %v635 = vmul.f32 %v605, %v625
    %v636 = vmul.f32 %v606, %v625
    %v637 = vmul.f32 %v607, %v625
    %v638 = vmul.f32 %v608, %v625
    %v639 = vmul.f32 %v609, %v625
    %v640 = vmul.f32 %v610, %v625
    %v641 = vmul.f32 %v611, %v625
    %v642 = vmul.f32 %v612, %v625
    %v643 = vmul.f32 %v613, %v625
    %v644 = vmul.f32 %v614, %v625
    %v645 = vmul.f32 %v615, %v625
    %v646 = vmul.f32 %v616, %v625
    %v647 = vmul.f32 %v617, %v625
    %v648 = vmul.f32 %v618, %v625
    %v649 = vmul.f32 %v619, %v625
    %v650 = vmul.f32 %v620, %v625
    %v651 = vmul.f32 %v621, %v625
    %v652 = vmul.f32 %v622, %v625
    %v653 = vmul.f32 %v623, %v625
    %v654 = vadd.f32 %v566, %v626
    %v655 = vadd.f32 %v567, %v627
    %v656 = vadd.f32 %v568, %v628
    %v657 = vadd.f32 %v569, %v629
    %v658 = vadd.f32 %v570, %v630
    %v659 = vadd.f32 %v571, %v631
    %v660 = vadd.f32 %v572, %v632
    %v661 = vadd.f32 %v573, %v633
    %v662 = vadd.f32 %v574, %v634
    %v663 = vadd.f32 %v575, %v635
    %v664 = vadd.f32 %v576, %v636
    %v665 = vadd.f32 %v577, %v637
    %v666 = vadd.f32 %v578, %v638
    %v667 = vadd.f32 %v579, %v639
    %v668 = vadd.f32 %v580, %v640
    %v669 = vadd.f32 %v581, %v641
    %v670 = vadd.f32 %v582, %v642
    %v671 = vadd.f32 %v583, %v643
    %v672 = vadd.f32 %v584, %v644
    %v673 = vadd.f32 %v585, %v645
    %v674 = vadd.f32 %v586, %v646
    %v675 = vadd.f32 %v587, %v647
    %v676 = vadd.f32 %v588, %v648
    %v677 = vadd.f32 %v589, %v649
    %v678 = vadd.f32 %v590, %v650
    %v679 = vadd.f32 %v591, %v651
    %v680 = vadd.f32 %v592, %v652
    %v681 = vadd.f32 %v593, %v653
    %s682 = sadd.s32 16, %s506
    %s683 = scalar_lea.vmem %s0, %s682
    %v684 = vld [vmem:[%s683] sm:$0xff]
    %v685 = vld [vmem:[%s683 + $0x8] sm:$0xff]
    %v686 = vld [vmem:[%s683 + $0x10] sm:$0xff]
    %v687 = vld [vmem:[%s683 + $0x18] sm:$0xff]
    %v688 = vld [vmem:[%s683 + $0x20] sm:$0xff]
    %v689 = vld [vmem:[%s683 + $0x28] sm:$0xff]
    %v690 = vld [vmem:[%s683 + $0x30] sm:$0xff]
    %v691 = vld [vmem:[%s683 + $0x38] sm:$0xff]
    %v692 = vld [vmem:[%s683 + $0x40] sm:$0xff]
    %v693 = vld [vmem:[%s683 + $0x48] sm:$0xff]
    %v694 = vld [vmem:[%s683 + $0x50] sm:$0xff]
    %v695 = vld [vmem:[%s683 + $0x58] sm:$0xff]
    %v696 = vld [vmem:[%s683 + $0x60] sm:$0xff]
    %v697 = vld [vmem:[%s683 + $0x68] sm:$0xff]
    %v698 = vld [vmem:[%s683 + $0x70] sm:$0xff]
    %v699 = vld [vmem:[%s683 + $0x78] sm:$0xff]
    %v700 = vld [vmem:[%s683 + $0x80] sm:$0xff]
    %v701 = vld [vmem:[%s683 + $0x88] sm:$0xff]
    %v702 = vld [vmem:[%s683 + $0x90] sm:$0xff]
    %v703 = vld [vmem:[%s683 + $0x98] sm:$0xff]
    %v704 = vld [vmem:[%s683 + $0xa0] sm:$0xff]
    %v705 = vld [vmem:[%s683 + $0xa8] sm:$0xff]
    %v706 = vld [vmem:[%s683 + $0xb0] sm:$0xff]
    %v707 = vld [vmem:[%s683 + $0xb8] sm:$0xff]
    %v708 = vld [vmem:[%s683 + $0xc0] sm:$0xff]
    %v709 = vld [vmem:[%s683 + $0xc8] sm:$0xff]
    %v710 = vld [vmem:[%s683 + $0xd0] sm:$0xff]
    %v711 = vld [vmem:[%s683 + $0xd8] sm:$0xff]
    %s712 = scalar_lea.vmem %s1, 80
    %v713 = vld [vmem:[%s712] sm:$0xff]
    %v714 = vmul.f32 %v684, %v713
    %v715 = vmul.f32 %v685, %v713
    %v716 = vmul.f32 %v686, %v713
    %v717 = vmul.f32 %v687, %v713
    %v718 = vmul.f32 %v688, %v713
    %v719 = vmul.f32 %v689, %v713
    %v720 = vmul.f32 %v690, %v713
    %v721 = vmul.f32 %v691, %v713
    %v722 = vmul.f32 %v692, %v713
    %v723 = vmul.f32 %v693, %v713
    %v724 = vmul.f32 %v694, %v713
    %v725 = vmul.f32 %v695, %v713
    %v726 = vmul.f32 %v696, %v713
    %v727 = vmul.f32 %v697, %v713
    %v728 = vmul.f32 %v698, %v713
    %v729 = vmul.f32 %v699, %v713
    %v730 = vmul.f32 %v700, %v713
    %v731 = vmul.f32 %v701, %v713
    %v732 = vmul.f32 %v702, %v713
    %v733 = vmul.f32 %v703, %v713
    %v734 = vmul.f32 %v704, %v713
    %v735 = vmul.f32 %v705, %v713
    %v736 = vmul.f32 %v706, %v713
    %v737 = vmul.f32 %v707, %v713
    %v738 = vmul.f32 %v708, %v713
    %v739 = vmul.f32 %v709, %v713
    %v740 = vmul.f32 %v710, %v713
    %v741 = vmul.f32 %v711, %v713
    %v742 = vadd.f32 %v654, %v714
    %v743 = vadd.f32 %v655, %v715
    %v744 = vadd.f32 %v656, %v716
    %v745 = vadd.f32 %v657, %v717
    %v746 = vadd.f32 %v658, %v718
    %v747 = vadd.f32 %v659, %v719
    %v748 = vadd.f32 %v660, %v720
    %v749 = vadd.f32 %v661, %v721
    %v750 = vadd.f32 %v662, %v722
    %v751 = vadd.f32 %v663, %v723
    %v752 = vadd.f32 %v664, %v724
    %v753 = vadd.f32 %v665, %v725
    %v754 = vadd.f32 %v666, %v726
    %v755 = vadd.f32 %v667, %v727
    %v756 = vadd.f32 %v668, %v728
    %v757 = vadd.f32 %v669, %v729
    %v758 = vadd.f32 %v670, %v730
    %v759 = vadd.f32 %v671, %v731
    %v760 = vadd.f32 %v672, %v732
    %v761 = vadd.f32 %v673, %v733
    %v762 = vadd.f32 %v674, %v734
    %v763 = vadd.f32 %v675, %v735
    %v764 = vadd.f32 %v676, %v736
    %v765 = vadd.f32 %v677, %v737
    %v766 = vadd.f32 %v678, %v738
    %v767 = vadd.f32 %v679, %v739
    %v768 = vadd.f32 %v680, %v740
    %v769 = vadd.f32 %v681, %v741
    %s770 = sadd.s32 %s265, 2
    %s771 = smul.u32 %s770, 240
    %s772 = scalar_lea.vmem %s0, %s771
    %v773 = vld [vmem:[%s772] sm:$0xff]
    %v774 = vld [vmem:[%s772 + $0x8] sm:$0xff]
    %v775 = vld [vmem:[%s772 + $0x10] sm:$0xff]
    %v776 = vld [vmem:[%s772 + $0x18] sm:$0xff]
    %v777 = vld [vmem:[%s772 + $0x20] sm:$0xff]
    %v778 = vld [vmem:[%s772 + $0x28] sm:$0xff]
    %v779 = vld [vmem:[%s772 + $0x30] sm:$0xff]
    %v780 = vld [vmem:[%s772 + $0x38] sm:$0xff]
    %v781 = vld [vmem:[%s772 + $0x40] sm:$0xff]
    %v782 = vld [vmem:[%s772 + $0x48] sm:$0xff]
    %v783 = vld [vmem:[%s772 + $0x50] sm:$0xff]
    %v784 = vld [vmem:[%s772 + $0x58] sm:$0xff]
    %v785 = vld [vmem:[%s772 + $0x60] sm:$0xff]
    %v786 = vld [vmem:[%s772 + $0x68] sm:$0xff]
    %v787 = vld [vmem:[%s772 + $0x70] sm:$0xff]
    %v788 = vld [vmem:[%s772 + $0x78] sm:$0xff]
    %v789 = vld [vmem:[%s772 + $0x80] sm:$0xff]
    %v790 = vld [vmem:[%s772 + $0x88] sm:$0xff]
    %v791 = vld [vmem:[%s772 + $0x90] sm:$0xff]
    %v792 = vld [vmem:[%s772 + $0x98] sm:$0xff]
    %v793 = vld [vmem:[%s772 + $0xa0] sm:$0xff]
    %v794 = vld [vmem:[%s772 + $0xa8] sm:$0xff]
    %v795 = vld [vmem:[%s772 + $0xb0] sm:$0xff]
    %v796 = vld [vmem:[%s772 + $0xb8] sm:$0xff]
    %v797 = vld [vmem:[%s772 + $0xc0] sm:$0xff]
    %v798 = vld [vmem:[%s772 + $0xc8] sm:$0xff]
    %v799 = vld [vmem:[%s772 + $0xd0] sm:$0xff]
    %v800 = vld [vmem:[%s772 + $0xd8] sm:$0xff]
    %s801 = scalar_lea.vmem %s1, 96
    %v802 = vld [vmem:[%s801] sm:$0xff]
    %v803 = vmul.f32 %v773, %v802
    %v804 = vmul.f32 %v774, %v802
    %v805 = vmul.f32 %v775, %v802
    %v806 = vmul.f32 %v776, %v802
    %v807 = vmul.f32 %v777, %v802
    %v808 = vmul.f32 %v778, %v802
    %v809 = vmul.f32 %v779, %v802
    %v810 = vmul.f32 %v780, %v802
    %v811 = vmul.f32 %v781, %v802
    %v812 = vmul.f32 %v782, %v802
    %v813 = vmul.f32 %v783, %v802
    %v814 = vmul.f32 %v784, %v802
    %v815 = vmul.f32 %v785, %v802
    %v816 = vmul.f32 %v786, %v802
    %v817 = vmul.f32 %v787, %v802
    %v818 = vmul.f32 %v788, %v802
    %v819 = vmul.f32 %v789, %v802
    %v820 = vmul.f32 %v790, %v802
    %v821 = vmul.f32 %v791, %v802
    %v822 = vmul.f32 %v792, %v802
    %v823 = vmul.f32 %v793, %v802
    %v824 = vmul.f32 %v794, %v802
    %v825 = vmul.f32 %v795, %v802
    %v826 = vmul.f32 %v796, %v802
    %v827 = vmul.f32 %v797, %v802
    %v828 = vmul.f32 %v798, %v802
    %v829 = vmul.f32 %v799, %v802
    %v830 = vmul.f32 %v800, %v802
    %v831 = vadd.f32 %v742, %v803
    %v832 = vadd.f32 %v743, %v804
    %v833 = vadd.f32 %v744, %v805
    %v834 = vadd.f32 %v745, %v806
    %v835 = vadd.f32 %v746, %v807
    %v836 = vadd.f32 %v747, %v808
    %v837 = vadd.f32 %v748, %v809
    %v838 = vadd.f32 %v749, %v810
    %v839 = vadd.f32 %v750, %v811
    %v840 = vadd.f32 %v751, %v812
    %v841 = vadd.f32 %v752, %v813
    %v842 = vadd.f32 %v753, %v814
    %v843 = vadd.f32 %v754, %v815
    %v844 = vadd.f32 %v755, %v816
    %v845 = vadd.f32 %v756, %v817
    %v846 = vadd.f32 %v757, %v818
    %v847 = vadd.f32 %v758, %v819
    %v848 = vadd.f32 %v759, %v820
    %v849 = vadd.f32 %v760, %v821
    %v850 = vadd.f32 %v761, %v822
    %v851 = vadd.f32 %v762, %v823
    %v852 = vadd.f32 %v763, %v824
    %v853 = vadd.f32 %v764, %v825
    %v854 = vadd.f32 %v765, %v826
    %v855 = vadd.f32 %v766, %v827
    %v856 = vadd.f32 %v767, %v828
    %v857 = vadd.f32 %v768, %v829
    %v858 = vadd.f32 %v769, %v830
    %s859 = sadd.s32 8, %s771
    %s860 = scalar_lea.vmem %s0, %s859
    %v861 = vld [vmem:[%s860] sm:$0xff]
    %v862 = vld [vmem:[%s860 + $0x8] sm:$0xff]
    %v863 = vld [vmem:[%s860 + $0x10] sm:$0xff]
    %v864 = vld [vmem:[%s860 + $0x18] sm:$0xff]
    %v865 = vld [vmem:[%s860 + $0x20] sm:$0xff]
    %v866 = vld [vmem:[%s860 + $0x28] sm:$0xff]
    %v867 = vld [vmem:[%s860 + $0x30] sm:$0xff]
    %v868 = vld [vmem:[%s860 + $0x38] sm:$0xff]
    %v869 = vld [vmem:[%s860 + $0x40] sm:$0xff]
    %v870 = vld [vmem:[%s860 + $0x48] sm:$0xff]
    %v871 = vld [vmem:[%s860 + $0x50] sm:$0xff]
    %v872 = vld [vmem:[%s860 + $0x58] sm:$0xff]
    %v873 = vld [vmem:[%s860 + $0x60] sm:$0xff]
    %v874 = vld [vmem:[%s860 + $0x68] sm:$0xff]
    %v875 = vld [vmem:[%s860 + $0x70] sm:$0xff]
    %v876 = vld [vmem:[%s860 + $0x78] sm:$0xff]
    %v877 = vld [vmem:[%s860 + $0x80] sm:$0xff]
    %v878 = vld [vmem:[%s860 + $0x88] sm:$0xff]
    %v879 = vld [vmem:[%s860 + $0x90] sm:$0xff]
    %v880 = vld [vmem:[%s860 + $0x98] sm:$0xff]
    %v881 = vld [vmem:[%s860 + $0xa0] sm:$0xff]
    %v882 = vld [vmem:[%s860 + $0xa8] sm:$0xff]
    %v883 = vld [vmem:[%s860 + $0xb0] sm:$0xff]
    %v884 = vld [vmem:[%s860 + $0xb8] sm:$0xff]
    %v885 = vld [vmem:[%s860 + $0xc0] sm:$0xff]
    %v886 = vld [vmem:[%s860 + $0xc8] sm:$0xff]
    %v887 = vld [vmem:[%s860 + $0xd0] sm:$0xff]
    %v888 = vld [vmem:[%s860 + $0xd8] sm:$0xff]
    %s889 = scalar_lea.vmem %s1, 112
    %v890 = vld [vmem:[%s889] sm:$0xff]
    %v891 = vmul.f32 %v861, %v890
    %v892 = vmul.f32 %v862, %v890
    %v893 = vmul.f32 %v863, %v890
    %v894 = vmul.f32 %v864, %v890
    %v895 = vmul.f32 %v865, %v890
    %v896 = vmul.f32 %v866, %v890
    %v897 = vmul.f32 %v867, %v890
    %v898 = vmul.f32 %v868, %v890
    %v899 = vmul.f32 %v869, %v890
    %v900 = vmul.f32 %v870, %v890
    %v901 = vmul.f32 %v871, %v890
    %v902 = vmul.f32 %v872, %v890
    %v903 = vmul.f32 %v873, %v890
    %v904 = vmul.f32 %v874, %v890
    %v905 = vmul.f32 %v875, %v890
    %v906 = vmul.f32 %v876, %v890
    %v907 = vmul.f32 %v877, %v890
    %v908 = vmul.f32 %v878, %v890
    %v909 = vmul.f32 %v879, %v890
    %v910 = vmul.f32 %v880, %v890
    %v911 = vmul.f32 %v881, %v890
    %v912 = vmul.f32 %v882, %v890
    %v913 = vmul.f32 %v883, %v890
    %v914 = vmul.f32 %v884, %v890
    %v915 = vmul.f32 %v885, %v890
    %v916 = vmul.f32 %v886, %v890
    %v917 = vmul.f32 %v887, %v890
    %v918 = vmul.f32 %v888, %v890
    %v919 = vadd.f32 %v831, %v891
    %v920 = vadd.f32 %v832, %v892
    %v921 = vadd.f32 %v833, %v893
    %v922 = vadd.f32 %v834, %v894
    %v923 = vadd.f32 %v835, %v895
    %v924 = vadd.f32 %v836, %v896
    %v925 = vadd.f32 %v837, %v897
    %v926 = vadd.f32 %v838, %v898
    %v927 = vadd.f32 %v839, %v899
    %v928 = vadd.f32 %v840, %v900
    %v929 = vadd.f32 %v841, %v901
    %v930 = vadd.f32 %v842, %v902
    %v931 = vadd.f32 %v843, %v903
    %v932 = vadd.f32 %v844, %v904
    %v933 = vadd.f32 %v845, %v905
    %v934 = vadd.f32 %v846, %v906
    %v935 = vadd.f32 %v847, %v907
    %v936 = vadd.f32 %v848, %v908
    %v937 = vadd.f32 %v849, %v909
    %v938 = vadd.f32 %v850, %v910
    %v939 = vadd.f32 %v851, %v911
    %v940 = vadd.f32 %v852, %v912
    %v941 = vadd.f32 %v853, %v913
    %v942 = vadd.f32 %v854, %v914
    %v943 = vadd.f32 %v855, %v915
    %v944 = vadd.f32 %v856, %v916
    %v945 = vadd.f32 %v857, %v917
    %v946 = vadd.f32 %v858, %v918
    %s947 = sadd.s32 16, %s771
    %s948 = scalar_lea.vmem %s0, %s947
    %v949 = vld [vmem:[%s948] sm:$0xff]
    %v950 = vld [vmem:[%s948 + $0x8] sm:$0xff]
    %v951 = vld [vmem:[%s948 + $0x10] sm:$0xff]
    %v952 = vld [vmem:[%s948 + $0x18] sm:$0xff]
    %v953 = vld [vmem:[%s948 + $0x20] sm:$0xff]
    %v954 = vld [vmem:[%s948 + $0x28] sm:$0xff]
    %v955 = vld [vmem:[%s948 + $0x30] sm:$0xff]
    %v956 = vld [vmem:[%s948 + $0x38] sm:$0xff]
    %v957 = vld [vmem:[%s948 + $0x40] sm:$0xff]
    %v958 = vld [vmem:[%s948 + $0x48] sm:$0xff]
    %v959 = vld [vmem:[%s948 + $0x50] sm:$0xff]
    %v960 = vld [vmem:[%s948 + $0x58] sm:$0xff]
    %v961 = vld [vmem:[%s948 + $0x60] sm:$0xff]
    %v962 = vld [vmem:[%s948 + $0x68] sm:$0xff]
    %v963 = vld [vmem:[%s948 + $0x70] sm:$0xff]
    %v964 = vld [vmem:[%s948 + $0x78] sm:$0xff]
    %v965 = vld [vmem:[%s948 + $0x80] sm:$0xff]
    %v966 = vld [vmem:[%s948 + $0x88] sm:$0xff]
    %v967 = vld [vmem:[%s948 + $0x90] sm:$0xff]
    %v968 = vld [vmem:[%s948 + $0x98] sm:$0xff]
    %v969 = vld [vmem:[%s948 + $0xa0] sm:$0xff]
    %v970 = vld [vmem:[%s948 + $0xa8] sm:$0xff]
    %v971 = vld [vmem:[%s948 + $0xb0] sm:$0xff]
    %v972 = vld [vmem:[%s948 + $0xb8] sm:$0xff]
    %v973 = vld [vmem:[%s948 + $0xc0] sm:$0xff]
    %v974 = vld [vmem:[%s948 + $0xc8] sm:$0xff]
    %v975 = vld [vmem:[%s948 + $0xd0] sm:$0xff]
    %v976 = vld [vmem:[%s948 + $0xd8] sm:$0xff]
    %s977 = scalar_lea.vmem %s1, 128
    %v978 = vld [vmem:[%s977] sm:$0xff]
    %v979 = vmul.f32 %v949, %v978
    %v980 = vmul.f32 %v950, %v978
    %v981 = vmul.f32 %v951, %v978
    %v982 = vmul.f32 %v952, %v978
    %v983 = vmul.f32 %v953, %v978
    %v984 = vmul.f32 %v954, %v978
    %v985 = vmul.f32 %v955, %v978
    %v986 = vmul.f32 %v956, %v978
    %v987 = vmul.f32 %v957, %v978
    %v988 = vmul.f32 %v958, %v978
    %v989 = vmul.f32 %v959, %v978
    %v990 = vmul.f32 %v960, %v978
    %v991 = vmul.f32 %v961, %v978
    %v992 = vmul.f32 %v962, %v978
    %v993 = vmul.f32 %v963, %v978
    %v994 = vmul.f32 %v964, %v978
    %v995 = vmul.f32 %v965, %v978
    %v996 = vmul.f32 %v966, %v978
    %v997 = vmul.f32 %v967, %v978
    %v998 = vmul.f32 %v968, %v978
    %v999 = vmul.f32 %v969, %v978
    %v1000 = vmul.f32 %v970, %v978
    %v1001 = vmul.f32 %v971, %v978
    %v1002 = vmul.f32 %v972, %v978
    %v1003 = vmul.f32 %v973, %v978
    %v1004 = vmul.f32 %v974, %v978
    %v1005 = vmul.f32 %v975, %v978
    %v1006 = vmul.f32 %v976, %v978
    %v1007 = vadd.f32 %v919, %v979
    %v1008 = vadd.f32 %v920, %v980
    %v1009 = vadd.f32 %v921, %v981
    %v1010 = vadd.f32 %v922, %v982
    %v1011 = vadd.f32 %v923, %v983
    %v1012 = vadd.f32 %v924, %v984
    %v1013 = vadd.f32 %v925, %v985
    %v1014 = vadd.f32 %v926, %v986
    %v1015 = vadd.f32 %v927, %v987
    %v1016 = vadd.f32 %v928, %v988
    %v1017 = vadd.f32 %v929, %v989
    %v1018 = vadd.f32 %v930, %v990
    %v1019 = vadd.f32 %v931, %v991
    %v1020 = vadd.f32 %v932, %v992
    %v1021 = vadd.f32 %v933, %v993
    %v1022 = vadd.f32 %v934, %v994
    %v1023 = vadd.f32 %v935, %v995
    %v1024 = vadd.f32 %v936, %v996
    %v1025 = vadd.f32 %v937, %v997
    %v1026 = vadd.f32 %v938, %v998
    %v1027 = vadd.f32 %v939, %v999
    %v1028 = vadd.f32 %v940, %v1000
    %v1029 = vadd.f32 %v941, %v1001
    %v1030 = vadd.f32 %v942, %v1002
    %v1031 = vadd.f32 %v943, %v1003
    %v1032 = vadd.f32 %v944, %v1004
    %v1033 = vadd.f32 %v945, %v1005
    %v1034 = vadd.f32 %v946, %v1006
    %v1035 = vld [vmem:[%s2] sm:$0xff]
    %v1036 = vadd.f32 %v1007, %v1035
    %v1037 = vadd.f32 %v1008, %v1035
    %v1038 = vadd.f32 %v1009, %v1035
    %v1039 = vadd.f32 %v1010, %v1035
    %v1040 = vadd.f32 %v1011, %v1035
    %v1041 = vadd.f32 %v1012, %v1035
    %v1042 = vadd.f32 %v1013, %v1035
    %v1043 = vadd.f32 %v1014, %v1035
    %v1044 = vadd.f32 %v1015, %v1035
    %v1045 = vadd.f32 %v1016, %v1035
    %v1046 = vadd.f32 %v1017, %v1035
    %v1047 = vadd.f32 %v1018, %v1035
    %v1048 = vadd.f32 %v1019, %v1035
    %v1049 = vadd.f32 %v1020, %v1035
    %v1050 = vadd.f32 %v1021, %v1035
    %v1051 = vadd.f32 %v1022, %v1035
    %v1052 = vadd.f32 %v1023, %v1035
    %v1053 = vadd.f32 %v1024, %v1035
    %v1054 = vadd.f32 %v1025, %v1035
    %v1055 = vadd.f32 %v1026, %v1035
    %v1056 = vadd.f32 %v1027, %v1035
    %v1057 = vadd.f32 %v1028, %v1035
    %v1058 = vadd.f32 %v1029, %v1035
    %v1059 = vadd.f32 %v1030, %v1035
    %v1060 = vadd.f32 %v1031, %v1035
    %v1061 = vadd.f32 %v1032, %v1035
    %v1062 = vadd.f32 %v1033, %v1035
    %v1063 = vadd.f32 %v1034, %v1035
    %v1064 = vmax.f32 %v1036, 0.0
    %v1065 = vmax.f32 %v1037, 0.0
    %v1066 = vmax.f32 %v1038, 0.0
    %v1067 = vmax.f32 %v1039, 0.0
    %v1068 = vmax.f32 %v1040, 0.0
    %v1069 = vmax.f32 %v1041, 0.0
    %v1070 = vmax.f32 %v1042, 0.0
    %v1071 = vmax.f32 %v1043, 0.0
    %v1072 = vmax.f32 %v1044, 0.0
    %v1073 = vmax.f32 %v1045, 0.0
    %v1074 = vmax.f32 %v1046, 0.0
    %v1075 = vmax.f32 %v1047, 0.0
    %v1076 = vmax.f32 %v1048, 0.0
    %v1077 = vmax.f32 %v1049, 0.0
    %v1078 = vmax.f32 %v1050, 0.0
    %v1079 = vmax.f32 %v1051, 0.0
    %v1080 = vmax.f32 %v1052, 0.0
    %v1081 = vmax.f32 %v1053, 0.0
    %v1082 = vmax.f32 %v1054, 0.0
    %v1083 = vmax.f32 %v1055, 0.0
    %v1084 = vmax.f32 %v1056, 0.0
    %v1085 = vmax.f32 %v1057, 0.0
    %v1086 = vmax.f32 %v1058, 0.0
    %v1087 = vmax.f32 %v1059, 0.0
    %v1088 = vmax.f32 %v1060, 0.0
    %v1089 = vmax.f32 %v1061, 0.0
    %v1090 = vmax.f32 %v1062, 0.0
    %v1091 = vmax.f32 %v1063, 0.0
    %s1092 = smul.u32 %s505, 480
    %s1093 = sadd.s32 16, %s1092
    %s1094 = scalar_lea.vmem [#allocation2], %s1093
    %1095 = vst [vmem:[%s1094] sm:$0xff] %v1064
    %1096 = vst [vmem:[%s1094 + $0x10] sm:$0xff] %v1065
    %1097 = vst [vmem:[%s1094 + $0x20] sm:$0xff] %v1066
    %1098 = vst [vmem:[%s1094 + $0x30] sm:$0xff] %v1067
    %1099 = vst [vmem:[%s1094 + $0x40] sm:$0xff] %v1068
    %1100 = vst [vmem:[%s1094 + $0x50] sm:$0xff] %v1069
    %1101 = vst [vmem:[%s1094 + $0x60] sm:$0xff] %v1070
    %1102 = vst [vmem:[%s1094 + $0x70] sm:$0xff] %v1071
    %1103 = vst [vmem:[%s1094 + $0x80] sm:$0xff] %v1072
    %1104 = vst [vmem:[%s1094 + $0x90] sm:$0xff] %v1073
    %1105 = vst [vmem:[%s1094 + $0xa0] sm:$0xff] %v1074
    %1106 = vst [vmem:[%s1094 + $0xb0] sm:$0xff] %v1075
    %1107 = vst [vmem:[%s1094 + $0xc0] sm:$0xff] %v1076
    %1108 = vst [vmem:[%s1094 + $0xd0] sm:$0xff] %v1077
    %1109 = vst [vmem:[%s1094 + $0xe0] sm:$0xff] %v1078
    %1110 = vst [vmem:[%s1094 + $0xf0] sm:$0xff] %v1079
    %1111 = vst [vmem:[%s1094 + $0x100] sm:$0xff] %v1080
    %1112 = vst [vmem:[%s1094 + $0x110] sm:$0xff] %v1081
    %1113 = vst [vmem:[%s1094 + $0x120] sm:$0xff] %v1082
    %1114 = vst [vmem:[%s1094 + $0x130] sm:$0xff] %v1083
    %1115 = vst [vmem:[%s1094 + $0x140] sm:$0xff] %v1084
    %1116 = vst [vmem:[%s1094 + $0x150] sm:$0xff] %v1085
    %1117 = vst [vmem:[%s1094 + $0x160] sm:$0xff] %v1086
    %1118 = vst [vmem:[%s1094 + $0x170] sm:$0xff] %v1087
    %1119 = vst [vmem:[%s1094 + $0x180] sm:$0xff] %v1088
    %1120 = vst [vmem:[%s1094 + $0x190] sm:$0xff] %v1089
    %1121 = vst [vmem:[%s1094 + $0x1a0] sm:$0xff] %v1090
    %1122 = vst [vmem:[%s1094 + $0x1b0] sm:$0xff] %v1091
    %v1123 = vld [vmem:[%s271] sm:$0xff]
    %v1124 = vld [vmem:[%s271 + $0x8] sm:$0xff]
    %v1125 = vld [vmem:[%s271 + $0x10] sm:$0xff]
    %v1126 = vld [vmem:[%s271 + $0x18] sm:$0xff]
    %v1127 = vld [vmem:[%s271 + $0x20] sm:$0xff]
    %v1128 = vld [vmem:[%s271 + $0x28] sm:$0xff]
    %v1129 = vld [vmem:[%s271 + $0x30] sm:$0xff]
    %v1130 = vld [vmem:[%s271 + $0x38] sm:$0xff]
    %v1131 = vld [vmem:[%s271 + $0x40] sm:$0xff]
    %v1132 = vld [vmem:[%s271 + $0x48] sm:$0xff]
    %v1133 = vld [vmem:[%s271 + $0x50] sm:$0xff]
    %v1134 = vld [vmem:[%s271 + $0x58] sm:$0xff]
    %v1135 = vld [vmem:[%s271 + $0x60] sm:$0xff]
    %v1136 = vld [vmem:[%s271 + $0x68] sm:$0xff]
    %v1137 = vld [vmem:[%s271 + $0x70] sm:$0xff]
    %v1138 = vld [vmem:[%s271 + $0x78] sm:$0xff]
    %v1139 = vld [vmem:[%s271 + $0x80] sm:$0xff]
    %v1140 = vld [vmem:[%s271 + $0x88] sm:$0xff]
    %v1141 = vld [vmem:[%s271 + $0x90] sm:$0xff]
    %v1142 = vld [vmem:[%s271 + $0x98] sm:$0xff]
    %v1143 = vld [vmem:[%s271 + $0xa0] sm:$0xff]
    %v1144 = vld [vmem:[%s271 + $0xa8] sm:$0xff]
    %v1145 = vld [vmem:[%s271 + $0xb0] sm:$0xff]
    %v1146 = vld [vmem:[%s271 + $0xb8] sm:$0xff]
    %v1147 = vld [vmem:[%s271 + $0xc0] sm:$0xff]
    %v1148 = vld [vmem:[%s271 + $0xc8] sm:$0xff]
    %v1149 = vld [vmem:[%s271 + $0xd0] sm:$0xff]
    %v1150 = vld [vmem:[%s271 + $0xd8] sm:$0xff]
    %s1151 = scalar_lea.vmem %s1, 8
    %v1152 = vld [vmem:[%s1151] sm:$0xff]
    %v1153 = vmul.f32 %v1123, %v1152
    %v1154 = vmul.f32 %v1124, %v1152
    %v1155 = vmul.f32 %v1125, %v1152
    %v1156 = vmul.f32 %v1126, %v1152
    %v1157 = vmul.f32 %v1127, %v1152
    %v1158 = vmul.f32 %v1128, %v1152
    %v1159 = vmul.f32 %v1129, %v1152
    %v1160 = vmul.f32 %v1130, %v1152
    %v1161 = vmul.f32 %v1131, %v1152
    %v1162 = vmul.f32 %v1132, %v1152
    %v1163 = vmul.f32 %v1133, %v1152
    %v1164 = vmul.f32 %v1134, %v1152
    %v1165 = vmul.f32 %v1135, %v1152
    %v1166 = vmul.f32 %v1136, %v1152
    %v1167 = vmul.f32 %v1137, %v1152
    %v1168 = vmul.f32 %v1138, %v1152
    %v1169 = vmul.f32 %v1139, %v1152
    %v1170 = vmul.f32 %v1140, %v1152
    %v1171 = vmul.f32 %v1141, %v1152
    %v1172 = vmul.f32 %v1142, %v1152
    %v1173 = vmul.f32 %v1143, %v1152
    %v1174 = vmul.f32 %v1144, %v1152
    %v1175 = vmul.f32 %v1145, %v1152
    %v1176 = vmul.f32 %v1146, %v1152
    %v1177 = vmul.f32 %v1147, %v1152
    %v1178 = vmul.f32 %v1148, %v1152
    %v1179 = vmul.f32 %v1149, %v1152
    %v1180 = vmul.f32 %v1150, %v1152
    %v1181 = vld [vmem:[%s330] sm:$0xff]
    %v1182 = vld [vmem:[%s330 + $0x8] sm:$0xff]
    %v1183 = vld [vmem:[%s330 + $0x10] sm:$0xff]
    %v1184 = vld [vmem:[%s330 + $0x18] sm:$0xff]
    %v1185 = vld [vmem:[%s330 + $0x20] sm:$0xff]
    %v1186 = vld [vmem:[%s330 + $0x28] sm:$0xff]
    %v1187 = vld [vmem:[%s330 + $0x30] sm:$0xff]
    %v1188 = vld [vmem:[%s330 + $0x38] sm:$0xff]
    %v1189 = vld [vmem:[%s330 + $0x40] sm:$0xff]
    %v1190 = vld [vmem:[%s330 + $0x48] sm:$0xff]
    %v1191 = vld [vmem:[%s330 + $0x50] sm:$0xff]
    %v1192 = vld [vmem:[%s330 + $0x58] sm:$0xff]
    %v1193 = vld [vmem:[%s330 + $0x60] sm:$0xff]
    %v1194 = vld [vmem:[%s330 + $0x68] sm:$0xff]
    %v1195 = vld [vmem:[%s330 + $0x70] sm:$0xff]
    %v1196 = vld [vmem:[%s330 + $0x78] sm:$0xff]
    %v1197 = vld [vmem:[%s330 + $0x80] sm:$0xff]
    %v1198 = vld [vmem:[%s330 + $0x88] sm:$0xff]
    %v1199 = vld [vmem:[%s330 + $0x90] sm:$0xff]
    %v1200 = vld [vmem:[%s330 + $0x98] sm:$0xff]
    %v1201 = vld [vmem:[%s330 + $0xa0] sm:$0xff]
    %v1202 = vld [vmem:[%s330 + $0xa8] sm:$0xff]
    %v1203 = vld [vmem:[%s330 + $0xb0] sm:$0xff]
    %v1204 = vld [vmem:[%s330 + $0xb8] sm:$0xff]
    %v1205 = vld [vmem:[%s330 + $0xc0] sm:$0xff]
    %v1206 = vld [vmem:[%s330 + $0xc8] sm:$0xff]
    %v1207 = vld [vmem:[%s330 + $0xd0] sm:$0xff]
    %v1208 = vld [vmem:[%s330 + $0xd8] sm:$0xff]
    %s1209 = scalar_lea.vmem %s1, 24
    %v1210 = vld [vmem:[%s1209] sm:$0xff]
    %v1211 = vmul.f32 %v1181, %v1210
    %v1212 = vmul.f32 %v1182, %v1210
    %v1213 = vmul.f32 %v1183, %v1210
    %v1214 = vmul.f32 %v1184, %v1210
    %v1215 = vmul.f32 %v1185, %v1210
    %v1216 = vmul.f32 %v1186, %v1210
    %v1217 = vmul.f32 %v1187, %v1210
    %v1218 = vmul.f32 %v1188, %v1210
    %v1219 = vmul.f32 %v1189, %v1210
    %v1220 = vmul.f32 %v1190, %v1210
    %v1221 = vmul.f32 %v1191, %v1210
    %v1222 = vmul.f32 %v1192, %v1210
    %v1223 = vmul.f32 %v1193, %v1210
    %v1224 = vmul.f32 %v1194, %v1210
    %v1225 = vmul.f32 %v1195, %v1210
    %v1226 = vmul.f32 %v1196, %v1210
    %v1227 = vmul.f32 %v1197, %v1210
    %v1228 = vmul.f32 %v1198, %v1210
    %v1229 = vmul.f32 %v1199, %v1210
    %v1230 = vmul.f32 %v1200, %v1210
    %v1231 = vmul.f32 %v1201, %v1210
    %v1232 = vmul.f32 %v1202, %v1210
    %v1233 = vmul.f32 %v1203, %v1210
    %v1234 = vmul.f32 %v1204, %v1210
    %v1235 = vmul.f32 %v1205, %v1210
    %v1236 = vmul.f32 %v1206, %v1210
    %v1237 = vmul.f32 %v1207, %v1210
    %v1238 = vmul.f32 %v1208, %v1210
    %v1239 = vadd.f32 %v1153, %v1211
    %v1240 = vadd.f32 %v1154, %v1212
    %v1241 = vadd.f32 %v1155, %v1213
    %v1242 = vadd.f32 %v1156, %v1214
    %v1243 = vadd.f32 %v1157, %v1215
    %v1244 = vadd.f32 %v1158, %v1216
    %v1245 = vadd.f32 %v1159, %v1217
    %v1246 = vadd.f32 %v1160, %v1218
    %v1247 = vadd.f32 %v1161, %v1219
    %v1248 = vadd.f32 %v1162, %v1220
    %v1249 = vadd.f32 %v1163, %v1221
    %v1250 = vadd.f32 %v1164, %v1222
    %v1251 = vadd.f32 %v1165, %v1223
    %v1252 = vadd.f32 %v1166, %v1224
    %v1253 = vadd.f32 %v1167, %v1225
    %v1254 = vadd.f32 %v1168, %v1226
    %v1255 = vadd.f32 %v1169, %v1227
    %v1256 = vadd.f32 %v1170, %v1228
    %v1257 = vadd.f32 %v1171, %v1229
    %v1258 = vadd.f32 %v1172, %v1230
    %v1259 = vadd.f32 %v1173, %v1231
    %v1260 = vadd.f32 %v1174, %v1232
    %v1261 = vadd.f32 %v1175, %v1233
    %v1262 = vadd.f32 %v1176, %v1234
    %v1263 = vadd.f32 %v1177, %v1235
    %v1264 = vadd.f32 %v1178, %v1236
    %v1265 = vadd.f32 %v1179, %v1237
    %v1266 = vadd.f32 %v1180, %v1238
    %v1267 = vld [vmem:[%s418] sm:$0xff]
    %v1268 = vld [vmem:[%s418 + $0x8] sm:$0xff]
    %v1269 = vld [vmem:[%s418 + $0x10] sm:$0xff]
    %v1270 = vld [vmem:[%s418 + $0x18] sm:$0xff]
    %v1271 = vld [vmem:[%s418 + $0x20] sm:$0xff]
    %v1272 = vld [vmem:[%s418 + $0x28] sm:$0xff]
    %v1273 = vld [vmem:[%s418 + $0x30] sm:$0xff]
    %v1274 = vld [vmem:[%s418 + $0x38] sm:$0xff]
    %v1275 = vld [vmem:[%s418 + $0x40] sm:$0xff]
    %v1276 = vld [vmem:[%s418 + $0x48] sm:$0xff]
    %v1277 = vld [vmem:[%s418 + $0x50] sm:$0xff]
    %v1278 = vld [vmem:[%s418 + $0x58] sm:$0xff]
    %v1279 = vld [vmem:[%s418 + $0x60] sm:$0xff]
    %v1280 = vld [vmem:[%s418 + $0x68] sm:$0xff]
    %v1281 = vld [vmem:[%s418 + $0x70] sm:$0xff]
    %v1282 = vld [vmem:[%s418 + $0x78] sm:$0xff]
    %v1283 = vld [vmem:[%s418 + $0x80] sm:$0xff]
    %v1284 = vld [vmem:[%s418 + $0x88] sm:$0xff]
    %v1285 = vld [vmem:[%s418 + $0x90] sm:$0xff]
    %v1286 = vld [vmem:[%s418 + $0x98] sm:$0xff]
    %v1287 = vld [vmem:[%s418 + $0xa0] sm:$0xff]
    %v1288 = vld [vmem:[%s418 + $0xa8] sm:$0xff]
    %v1289 = vld [vmem:[%s418 + $0xb0] sm:$0xff]
    %v1290 = vld [vmem:[%s418 + $0xb8] sm:$0xff]
    %v1291 = vld [vmem:[%s418 + $0xc0] sm:$0xff]
    %v1292 = vld [vmem:[%s418 + $0xc8] sm:$0xff]
    %v1293 = vld [vmem:[%s418 + $0xd0] sm:$0xff]
    %v1294 = vld [vmem:[%s418 + $0xd8] sm:$0xff]
    %s1295 = scalar_lea.vmem %s1, 40
    %v1296 = vld [vmem:[%s1295] sm:$0xff]
    %v1297 = vmul.f32 %v1267, %v1296
    %v1298 = vmul.f32 %v1268, %v1296
    %v1299 = vmul.f32 %v1269, %v1296
    %v1300 = vmul.f32 %v1270, %v1296
    %v1301 = vmul.f32 %v1271, %v1296
    %v1302 = vmul.f32 %v1272, %v1296
    %v1303 = vmul.f32 %v1273, %v1296
    %v1304 = vmul.f32 %v1274, %v1296
    %v1305 = vmul.f32 %v1275, %v1296
    %v1306 = vmul.f32 %v1276, %v1296
    %v1307 = vmul.f32 %v1277, %v1296
    %v1308 = vmul.f32 %v1278, %v1296
    %v1309 = vmul.f32 %v1279, %v1296
    %v1310 = vmul.f32 %v1280, %v1296
    %v1311 = vmul.f32 %v1281, %v1296
    %v1312 = vmul.f32 %v1282, %v1296
    %v1313 = vmul.f32 %v1283, %v1296
    %v1314 = vmul.f32 %v1284, %v1296
    %v1315 = vmul.f32 %v1285, %v1296
    %v1316 = vmul.f32 %v1286, %v1296
    %v1317 = vmul.f32 %v1287, %v1296
    %v1318 = vmul.f32 %v1288, %v1296
    %v1319 = vmul.f32 %v1289, %v1296
    %v1320 = vmul.f32 %v1290, %v1296
    %v1321 = vmul.f32 %v1291, %v1296
    %v1322 = vmul.f32 %v1292, %v1296
    %v1323 = vmul.f32 %v1293, %v1296
    %v1324 = vmul.f32 %v1294, %v1296
    %v1325 = vadd.f32 %v1239, %v1297
    %v1326 = vadd.f32 %v1240, %v1298
    %v1327 = vadd.f32 %v1241, %v1299
    %v1328 = vadd.f32 %v1242, %v1300
    %v1329 = vadd.f32 %v1243, %v1301
    %v1330 = vadd.f32 %v1244, %v1302
    %v1331 = vadd.f32 %v1245, %v1303
    %v1332 = vadd.f32 %v1246, %v1304
    %v1333 = vadd.f32 %v1247, %v1305
    %v1334 = vadd.f32 %v1248, %v1306
    %v1335 = vadd.f32 %v1249, %v1307
    %v1336 = vadd.f32 %v1250, %v1308
    %v1337 = vadd.f32 %v1251, %v1309
    %v1338 = vadd.f32 %v1252, %v1310
    %v1339 = vadd.f32 %v1253, %v1311
    %v1340 = vadd.f32 %v1254, %v1312
    %v1341 = vadd.f32 %v1255, %v1313
    %v1342 = vadd.f32 %v1256, %v1314
    %v1343 = vadd.f32 %v1257, %v1315
    %v1344 = vadd.f32 %v1258, %v1316
    %v1345 = vadd.f32 %v1259, %v1317
    %v1346 = vadd.f32 %v1260, %v1318
    %v1347 = vadd.f32 %v1261, %v1319
    %v1348 = vadd.f32 %v1262, %v1320
    %v1349 = vadd.f32 %v1263, %v1321
    %v1350 = vadd.f32 %v1264, %v1322
    %v1351 = vadd.f32 %v1265, %v1323
    %v1352 = vadd.f32 %v1266, %v1324
    %v1353 = vld [vmem:[%s507] sm:$0xff]
    %v1354 = vld [vmem:[%s507 + $0x8] sm:$0xff]
    %v1355 = vld [vmem:[%s507 + $0x10] sm:$0xff]
    %v1356 = vld [vmem:[%s507 + $0x18] sm:$0xff]
    %v1357 = vld [vmem:[%s507 + $0x20] sm:$0xff]
    %v1358 = vld [vmem:[%s507 + $0x28] sm:$0xff]
    %v1359 = vld [vmem:[%s507 + $0x30] sm:$0xff]
    %v1360 = vld [vmem:[%s507 + $0x38] sm:$0xff]
    %v1361 = vld [vmem:[%s507 + $0x40] sm:$0xff]
    %v1362 = vld [vmem:[%s507 + $0x48] sm:$0xff]
    %v1363 = vld [vmem:[%s507 + $0x50] sm:$0xff]
    %v1364 = vld [vmem:[%s507 + $0x58] sm:$0xff]
    %v1365 = vld [vmem:[%s507 + $0x60] sm:$0xff]
    %v1366 = vld [vmem:[%s507 + $0x68] sm:$0xff]
    %v1367 = vld [vmem:[%s507 + $0x70] sm:$0xff]
    %v1368 = vld [vmem:[%s507 + $0x78] sm:$0xff]
    %v1369 = vld [vmem:[%s507 + $0x80] sm:$0xff]
    %v1370 = vld [vmem:[%s507 + $0x88] sm:$0xff]
    %v1371 = vld [vmem:[%s507 + $0x90] sm:$0xff]
    %v1372 = vld [vmem:[%s507 + $0x98] sm:$0xff]
    %v1373 = vld [vmem:[%s507 + $0xa0] sm:$0xff]
    %v1374 = vld [vmem:[%s507 + $0xa8] sm:$0xff]
    %v1375 = vld [vmem:[%s507 + $0xb0] sm:$0xff]
    %v1376 = vld [vmem:[%s507 + $0xb8] sm:$0xff]
    %v1377 = vld [vmem:[%s507 + $0xc0] sm:$0xff]
    %v1378 = vld [vmem:[%s507 + $0xc8] sm:$0xff]
    %v1379 = vld [vmem:[%s507 + $0xd0] sm:$0xff]
    %v1380 = vld [vmem:[%s507 + $0xd8] sm:$0xff]
    %s1381 = scalar_lea.vmem %s1, 56
    %v1382 = vld [vmem:[%s1381] sm:$0xff]
    %v1383 = vmul.f32 %v1353, %v1382
    %v1384 = vmul.f32 %v1354, %v1382
    %v1385 = vmul.f32 %v1355, %v1382
    %v1386 = vmul.f32 %v1356, %v1382
    %v1387 = vmul.f32 %v1357, %v1382
    %v1388 = vmul.f32 %v1358, %v1382
    %v1389 = vmul.f32 %v1359, %v1382
    %v1390 = vmul.f32 %v1360, %v1382
    %v1391 = vmul.f32 %v1361, %v1382
    %v1392 = vmul.f32 %v1362, %v1382
    %v1393 = vmul.f32 %v1363, %v1382
    %v1394 = vmul.f32 %v1364, %v1382
    %v1395 = vmul.f32 %v1365, %v1382
    %v1396 = vmul.f32 %v1366, %v1382
    %v1397 = vmul.f32 %v1367, %v1382
    %v1398 = vmul.f32 %v1368, %v1382
    %v1399 = vmul.f32 %v1369, %v1382
    %v1400 = vmul.f32 %v1370, %v1382
    %v1401 = vmul.f32 %v1371, %v1382
    %v1402 = vmul.f32 %v1372, %v1382
    %v1403 = vmul.f32 %v1373, %v1382
    %v1404 = vmul.f32 %v1374, %v1382
    %v1405 = vmul.f32 %v1375, %v1382
    %v1406 = vmul.f32 %v1376, %v1382
    %v1407 = vmul.f32 %v1377, %v1382
    %v1408 = vmul.f32 %v1378, %v1382
    %v1409 = vmul.f32 %v1379, %v1382
    %v1410 = vmul.f32 %v1380, %v1382
    %v1411 = vadd.f32 %v1325, %v1383
    %v1412 = vadd.f32 %v1326, %v1384
    %v1413 = vadd.f32 %v1327, %v1385
    %v1414 = vadd.f32 %v1328, %v1386
    %v1415 = vadd.f32 %v1329, %v1387
    %v1416 = vadd.f32 %v1330, %v1388
    %v1417 = vadd.f32 %v1331, %v1389
    %v1418 = vadd.f32 %v1332, %v1390
    %v1419 = vadd.f32 %v1333, %v1391
    %v1420 = vadd.f32 %v1334, %v1392
    %v1421 = vadd.f32 %v1335, %v1393
    %v1422 = vadd.f32 %v1336, %v1394
    %v1423 = vadd.f32 %v1337, %v1395
    %v1424 = vadd.f32 %v1338, %v1396
    %v1425 = vadd.f32 %v1339, %v1397
    %v1426 = vadd.f32 %v1340, %v1398
    %v1427 = vadd.f32 %v1341, %v1399
    %v1428 = vadd.f32 %v1342, %v1400
    %v1429 = vadd.f32 %v1343, %v1401
    %v1430 = vadd.f32 %v1344, %v1402
    %v1431 = vadd.f32 %v1345, %v1403
    %v1432 = vadd.f32 %v1346, %v1404
    %v1433 = vadd.f32 %v1347, %v1405
    %v1434 = vadd.f32 %v1348, %v1406
    %v1435 = vadd.f32 %v1349, %v1407
    %v1436 = vadd.f32 %v1350, %v1408
    %v1437 = vadd.f32 %v1351, %v1409
    %v1438 = vadd.f32 %v1352, %v1410
    %v1439 = vld [vmem:[%s595] sm:$0xff]
    %v1440 = vld [vmem:[%s595 + $0x8] sm:$0xff]
    %v1441 = vld [vmem:[%s595 + $0x10] sm:$0xff]
    %v1442 = vld [vmem:[%s595 + $0x18] sm:$0xff]
    %v1443 = vld [vmem:[%s595 + $0x20] sm:$0xff]
    %v1444 = vld [vmem:[%s595 + $0x28] sm:$0xff]
    %v1445 = vld [vmem:[%s595 + $0x30] sm:$0xff]
    %v1446 = vld [vmem:[%s595 + $0x38] sm:$0xff]
    %v1447 = vld [vmem:[%s595 + $0x40] sm:$0xff]
    %v1448 = vld [vmem:[%s595 + $0x48] sm:$0xff]
    %v1449 = vld [vmem:[%s595 + $0x50] sm:$0xff]
    %v1450 = vld [vmem:[%s595 + $0x58] sm:$0xff]
    %v1451 = vld [vmem:[%s595 + $0x60] sm:$0xff]
    %v1452 = vld [vmem:[%s595 + $0x68] sm:$0xff]
    %v1453 = vld [vmem:[%s595 + $0x70] sm:$0xff]
    %v1454 = vld [vmem:[%s595 + $0x78] sm:$0xff]
    %v1455 = vld [vmem:[%s595 + $0x80] sm:$0xff]
    %v1456 = vld [vmem:[%s595 + $0x88] sm:$0xff]
    %v1457 = vld [vmem:[%s595 + $0x90] sm:$0xff]
    %v1458 = vld [vmem:[%s595 + $0x98] sm:$0xff]
    %v1459 = vld [vmem:[%s595 + $0xa0] sm:$0xff]
    %v1460 = vld [vmem:[%s595 + $0xa8] sm:$0xff]
    %v1461 = vld [vmem:[%s595 + $0xb0] sm:$0xff]
    %v1462 = vld [vmem:[%s595 + $0xb8] sm:$0xff]
    %v1463 = vld [vmem:[%s595 + $0xc0] sm:$0xff]
    %v1464 = vld [vmem:[%s595 + $0xc8] sm:$0xff]
    %v1465 = vld [vmem:[%s595 + $0xd0] sm:$0xff]
    %v1466 = vld [vmem:[%s595 + $0xd8] sm:$0xff]
    %s1467 = scalar_lea.vmem %s1, 72
    %v1468 = vld [vmem:[%s1467] sm:$0xff]
    %v1469 = vmul.f32 %v1439, %v1468
    %v1470 = vmul.f32 %v1440, %v1468
    %v1471 = vmul.f32 %v1441, %v1468
    %v1472 = vmul.f32 %v1442, %v1468
    %v1473 = vmul.f32 %v1443, %v1468
    %v1474 = vmul.f32 %v1444, %v1468
    %v1475 = vmul.f32 %v1445, %v1468
    %v1476 = vmul.f32 %v1446, %v1468
    %v1477 = vmul.f32 %v1447, %v1468
    %v1478 = vmul.f32 %v1448, %v1468
    %v1479 = vmul.f32 %v1449, %v1468
    %v1480 = vmul.f32 %v1450, %v1468
    %v1481 = vmul.f32 %v1451, %v1468
    %v1482 = vmul.f32 %v1452, %v1468
    %v1483 = vmul.f32 %v1453, %v1468
    %v1484 = vmul.f32 %v1454, %v1468
    %v1485 = vmul.f32 %v1455, %v1468
    %v1486 = vmul.f32 %v1456, %v1468
    %v1487 = vmul.f32 %v1457, %v1468
    %v1488 = vmul.f32 %v1458, %v1468
    %v1489 = vmul.f32 %v1459, %v1468
    %v1490 = vmul.f32 %v1460, %v1468
    %v1491 = vmul.f32 %v1461, %v1468
    %v1492 = vmul.f32 %v1462, %v1468
    %v1493 = vmul.f32 %v1463, %v1468
    %v1494 = vmul.f32 %v1464, %v1468
    %v1495 = vmul.f32 %v1465, %v1468
    %v1496 = vmul.f32 %v1466, %v1468
    %v1497 = vadd.f32 %v1411, %v1469
    %v1498 = vadd.f32 %v1412, %v1470
    %v1499 = vadd.f32 %v1413, %v1471
    %v1500 = vadd.f32 %v1414, %v1472
    %v1501 = vadd.f32 %v1415, %v1473
    %v1502 = vadd.f32 %v1416, %v1474
    %v1503 = vadd.f32 %v1417, %v1475
    %v1504 = vadd.f32 %v1418, %v1476
    %v1505 = vadd.f32 %v1419, %v1477
    %v1506 = vadd.f32 %v1420, %v1478
    %v1507 = vadd.f32 %v1421, %v1479
    %v1508 = vadd.f32 %v1422, %v1480
    %v1509 = vadd.f32 %v1423, %v1481
    %v1510 = vadd.f32 %v1424, %v1482
    %v1511 = vadd.f32 %v1425, %v1483
    %v1512 = vadd.f32 %v1426, %v1484
    %v1513 = vadd.f32 %v1427, %v1485
    %v1514 = vadd.f32 %v1428, %v1486
    %v1515 = vadd.f32 %v1429, %v1487
    %v1516 = vadd.f32 %v1430, %v1488
    %v1517 = vadd.f32 %v1431, %v1489
    %v1518 = vadd.f32 %v1432, %v1490
    %v1519 = vadd.f32 %v1433, %v1491
    %v1520 = vadd.f32 %v1434, %v1492
    %v1521 = vadd.f32 %v1435, %v1493
    %v1522 = vadd.f32 %v1436, %v1494
    %v1523 = vadd.f32 %v1437, %v1495
    %v1524 = vadd.f32 %v1438, %v1496
    %v1525 = vld [vmem:[%s683] sm:$0xff]
    %v1526 = vld [vmem:[%s683 + $0x8] sm:$0xff]
    %v1527 = vld [vmem:[%s683 + $0x10] sm:$0xff]
    %v1528 = vld [vmem:[%s683 + $0x18] sm:$0xff]
    %v1529 = vld [vmem:[%s683 + $0x20] sm:$0xff]
    %v1530 = vld [vmem:[%s683 + $0x28] sm:$0xff]
    %v1531 = vld [vmem:[%s683 + $0x30] sm:$0xff]
    %v1532 = vld [vmem:[%s683 + $0x38] sm:$0xff]
    %v1533 = vld [vmem:[%s683 + $0x40] sm:$0xff]
    %v1534 = vld [vmem:[%s683 + $0x48] sm:$0xff]
    %v1535 = vld [vmem:[%s683 + $0x50] sm:$0xff]
    %v1536 = vld [vmem:[%s683 + $0x58] sm:$0xff]
    %v1537 = vld [vmem:[%s683 + $0x60] sm:$0xff]
    %v1538 = vld [vmem:[%s683 + $0x68] sm:$0xff]
    %v1539 = vld [vmem:[%s683 + $0x70] sm:$0xff]
    %v1540 = vld [vmem:[%s683 + $0x78] sm:$0xff]
    %v1541 = vld [vmem:[%s683 + $0x80] sm:$0xff]
    %v1542 = vld [vmem:[%s683 + $0x88] sm:$0xff]
    %v1543 = vld [vmem:[%s683 + $0x90] sm:$0xff]
    %v1544 = vld [vmem:[%s683 + $0x98] sm:$0xff]
    %v1545 = vld [vmem:[%s683 + $0xa0] sm:$0xff]
    %v1546 = vld [vmem:[%s683 + $0xa8] sm:$0xff]
    %v1547 = vld [vmem:[%s683 + $0xb0] sm:$0xff]
    %v1548 = vld [vmem:[%s683 + $0xb8] sm:$0xff]
    %v1549 = vld [vmem:[%s683 + $0xc0] sm:$0xff]
    %v1550 = vld [vmem:[%s683 + $0xc8] sm:$0xff]
    %v1551 = vld [vmem:[%s683 + $0xd0] sm:$0xff]
    %v1552 = vld [vmem:[%s683 + $0xd8] sm:$0xff]
    %s1553 = scalar_lea.vmem %s1, 88
    %v1554 = vld [vmem:[%s1553] sm:$0xff]
    %v1555 = vmul.f32 %v1525, %v1554
    %v1556 = vmul.f32 %v1526, %v1554
    %v1557 = vmul.f32 %v1527, %v1554
    %v1558 = vmul.f32 %v1528, %v1554
    %v1559 = vmul.f32 %v1529, %v1554
    %v1560 = vmul.f32 %v1530, %v1554
    %v1561 = vmul.f32 %v1531, %v1554
    %v1562 = vmul.f32 %v1532, %v1554
    %v1563 = vmul.f32 %v1533, %v1554
    %v1564 = vmul.f32 %v1534, %v1554
    %v1565 = vmul.f32 %v1535, %v1554
    %v1566 = vmul.f32 %v1536, %v1554
    %v1567 = vmul.f32 %v1537, %v1554
    %v1568 = vmul.f32 %v1538, %v1554
    %v1569 = vmul.f32 %v1539, %v1554
    %v1570 = vmul.f32 %v1540, %v1554
    %v1571 = vmul.f32 %v1541, %v1554
    %v1572 = vmul.f32 %v1542, %v1554
    %v1573 = vmul.f32 %v1543, %v1554
    %v1574 = vmul.f32 %v1544, %v1554
    %v1575 = vmul.f32 %v1545, %v1554
    %v1576 = vmul.f32 %v1546, %v1554
    %v1577 = vmul.f32 %v1547, %v1554
    %v1578 = vmul.f32 %v1548, %v1554
    %v1579 = vmul.f32 %v1549, %v1554
    %v1580 = vmul.f32 %v1550, %v1554
    %v1581 = vmul.f32 %v1551, %v1554
    %v1582 = vmul.f32 %v1552, %v1554
    %v1583 = vadd.f32 %v1497, %v1555
    %v1584 = vadd.f32 %v1498, %v1556
    %v1585 = vadd.f32 %v1499, %v1557
    %v1586 = vadd.f32 %v1500, %v1558
    %v1587 = vadd.f32 %v1501, %v1559
    %v1588 = vadd.f32 %v1502, %v1560
    %v1589 = vadd.f32 %v1503, %v1561
    %v1590 = vadd.f32 %v1504, %v1562
    %v1591 = vadd.f32 %v1505, %v1563
    %v1592 = vadd.f32 %v1506, %v1564
    %v1593 = vadd.f32 %v1507, %v1565
    %v1594 = vadd.f32 %v1508, %v1566
    %v1595 = vadd.f32 %v1509, %v1567
    %v1596 = vadd.f32 %v1510, %v1568
    %v1597 = vadd.f32 %v1511, %v1569
    %v1598 = vadd.f32 %v1512, %v1570
    %v1599 = vadd.f32 %v1513, %v1571
    %v1600 = vadd.f32 %v1514, %v1572
    %v1601 = vadd.f32 %v1515, %v1573
    %v1602 = vadd.f32 %v1516, %v1574
    %v1603 = vadd.f32 %v1517, %v1575
    %v1604 = vadd.f32 %v1518, %v1576
    %v1605 = vadd.f32 %v1519, %v1577
    %v1606 = vadd.f32 %v1520, %v1578
    %v1607 = vadd.f32 %v1521, %v1579
    %v1608 = vadd.f32 %v1522, %v1580
    %v1609 = vadd.f32 %v1523, %v1581
    %v1610 = vadd.f32 %v1524, %v1582
    %v1611 = vld [vmem:[%s772] sm:$0xff]
    %v1612 = vld [vmem:[%s772 + $0x8] sm:$0xff]
    %v1613 = vld [vmem:[%s772 + $0x10] sm:$0xff]
    %v1614 = vld [vmem:[%s772 + $0x18] sm:$0xff]
    %v1615 = vld [vmem:[%s772 + $0x20] sm:$0xff]
    %v1616 = vld [vmem:[%s772 + $0x28] sm:$0xff]
    %v1617 = vld [vmem:[%s772 + $0x30] sm:$0xff]
    %v1618 = vld [vmem:[%s772 + $0x38] sm:$0xff]
    %v1619 = vld [vmem:[%s772 + $0x40] sm:$0xff]
    %v1620 = vld [vmem:[%s772 + $0x48] sm:$0xff]
    %v1621 = vld [vmem:[%s772 + $0x50] sm:$0xff]
    %v1622 = vld [vmem:[%s772 + $0x58] sm:$0xff]
    %v1623 = vld [vmem:[%s772 + $0x60] sm:$0xff]
    %v1624 = vld [vmem:[%s772 + $0x68] sm:$0xff]
    %v1625 = vld [vmem:[%s772 + $0x70] sm:$0xff]
    %v1626 = vld [vmem:[%s772 + $0x78] sm:$0xff]
    %v1627 = vld [vmem:[%s772 + $0x80] sm:$0xff]
    %v1628 = vld [vmem:[%s772 + $0x88] sm:$0xff]
    %v1629 = vld [vmem:[%s772 + $0x90] sm:$0xff]
    %v1630 = vld [vmem:[%s772 + $0x98] sm:$0xff]
    %v1631 = vld [vmem:[%s772 + $0xa0] sm:$0xff]
    %v1632 = vld [vmem:[%s772 + $0xa8] sm:$0xff]
    %v1633 = vld [vmem:[%s772 + $0xb0] sm:$0xff]
    %v1634 = vld [vmem:[%s772 + $0xb8] sm:$0xff]
    %v1635 = vld [vmem:[%s772 + $0xc0] sm:$0xff]
    %v1636 = vld [vmem:[%s772 + $0xc8] sm:$0xff]
    %v1637 = vld [vmem:[%s772 + $0xd0] sm:$0xff]
    %v1638 = vld [vmem:[%s772 + $0xd8] sm:$0xff]
    %s1639 = scalar_lea.vmem %s1, 104
    %v1640 = vld [vmem:[%s1639] sm:$0xff]
    %v1641 = vmul.f32 %v1611, %v1640
    %v1642 = vmul.f32 %v1612, %v1640
    %v1643 = vmul.f32 %v1613, %v1640
    %v1644 = vmul.f32 %v1614, %v1640
    %v1645 = vmul.f32 %v1615, %v1640
    %v1646 = vmul.f32 %v1616, %v1640
    %v1647 = vmul.f32 %v1617, %v1640
    %v1648 = vmul.f32 %v1618, %v1640
    %v1649 = vmul.f32 %v1619, %v1640
    %v1650 = vmul.f32 %v1620, %v1640
    %v1651 = vmul.f32 %v1621, %v1640
    %v1652 = vmul.f32 %v1622, %v1640
    %v1653 = vmul.f32 %v1623, %v1640
    %v1654 = vmul.f32 %v1624, %v1640
    %v1655 = vmul.f32 %v1625, %v1640
    %v1656 = vmul.f32 %v1626, %v1640
    %v1657 = vmul.f32 %v1627, %v1640
    %v1658 = vmul.f32 %v1628, %v1640
    %v1659 = vmul.f32 %v1629, %v1640
    %v1660 = vmul.f32 %v1630, %v1640
    %v1661 = vmul.f32 %v1631, %v1640
    %v1662 = vmul.f32 %v1632, %v1640
    %v1663 = vmul.f32 %v1633, %v1640
    %v1664 = vmul.f32 %v1634, %v1640
    %v1665 = vmul.f32 %v1635, %v1640
    %v1666 = vmul.f32 %v1636, %v1640
    %v1667 = vmul.f32 %v1637, %v1640
    %v1668 = vmul.f32 %v1638, %v1640
    %v1669 = vadd.f32 %v1583, %v1641
    %v1670 = vadd.f32 %v1584, %v1642
    %v1671 = vadd.f32 %v1585, %v1643
    %v1672 = vadd.f32 %v1586, %v1644
    %v1673 = vadd.f32 %v1587, %v1645
    %v1674 = vadd.f32 %v1588, %v1646
    %v1675 = vadd.f32 %v1589, %v1647
    %v1676 = vadd.f32 %v1590, %v1648
    %v1677 = vadd.f32 %v1591, %v1649
    %v1678 = vadd.f32 %v1592, %v1650
    %v1679 = vadd.f32 %v1593, %v1651
    %v1680 = vadd.f32 %v1594, %v1652
    %v1681 = vadd.f32 %v1595, %v1653
    %v1682 = vadd.f32 %v1596, %v1654
    %v1683 = vadd.f32 %v1597, %v1655
    %v1684 = vadd.f32 %v1598, %v1656
    %v1685 = vadd.f32 %v1599, %v1657
    %v1686 = vadd.f32 %v1600, %v1658
    %v1687 = vadd.f32 %v1601, %v1659
    %v1688 = vadd.f32 %v1602, %v1660
    %v1689 = vadd.f32 %v1603, %v1661
    %v1690 = vadd.f32 %v1604, %v1662
    %v1691 = vadd.f32 %v1605, %v1663
    %v1692 = vadd.f32 %v1606, %v1664
    %v1693 = vadd.f32 %v1607, %v1665
    %v1694 = vadd.f32 %v1608, %v1666
    %v1695 = vadd.f32 %v1609, %v1667
    %v1696 = vadd.f32 %v1610, %v1668
    %v1697 = vld [vmem:[%s860] sm:$0xff]
    %v1698 = vld [vmem:[%s860 + $0x8] sm:$0xff]
    %v1699 = vld [vmem:[%s860 + $0x10] sm:$0xff]
    %v1700 = vld [vmem:[%s860 + $0x18] sm:$0xff]
    %v1701 = vld [vmem:[%s860 + $0x20] sm:$0xff]
    %v1702 = vld [vmem:[%s860 + $0x28] sm:$0xff]
    %v1703 = vld [vmem:[%s860 + $0x30] sm:$0xff]
    %v1704 = vld [vmem:[%s860 + $0x38] sm:$0xff]
    %v1705 = vld [vmem:[%s860 + $0x40] sm:$0xff]
    %v1706 = vld [vmem:[%s860 + $0x48] sm:$0xff]
    %v1707 = vld [vmem:[%s860 + $0x50] sm:$0xff]
    %v1708 = vld [vmem:[%s860 + $0x58] sm:$0xff]
    %v1709 = vld [vmem:[%s860 + $0x60] sm:$0xff]
    %v1710 = vld [vmem:[%s860 + $0x68] sm:$0xff]
    %v1711 = vld [vmem:[%s860 + $0x70] sm:$0xff]
    %v1712 = vld [vmem:[%s860 + $0x78] sm:$0xff]
    %v1713 = vld [vmem:[%s860 + $0x80] sm:$0xff]
    %v1714 = vld [vmem:[%s860 + $0x88] sm:$0xff]
    %v1715 = vld [vmem:[%s860 + $0x90] sm:$0xff]
    %v1716 = vld [vmem:[%s860 + $0x98] sm:$0xff]
    %v1717 = vld [vmem:[%s860 + $0xa0] sm:$0xff]
    %v1718 = vld [vmem:[%s860 + $0xa8] sm:$0xff]
    %v1719 = vld [vmem:[%s860 + $0xb0] sm:$0xff]
    %v1720 = vld [vmem:[%s860 + $0xb8] sm:$0xff]
    %v1721 = vld [vmem:[%s860 + $0xc0] sm:$0xff]
    %v1722 = vld [vmem:[%s860 + $0xc8] sm:$0xff]
    %v1723 = vld [vmem:[%s860 + $0xd0] sm:$0xff]
    %v1724 = vld [vmem:[%s860 + $0xd8] sm:$0xff]
    %s1725 = scalar_lea.vmem %s1, 120
    %v1726 = vld [vmem:[%s1725] sm:$0xff]
    %v1727 = vmul.f32 %v1697, %v1726
    %v1728 = vmul.f32 %v1698, %v1726
    %v1729 = vmul.f32 %v1699, %v1726
    %v1730 = vmul.f32 %v1700, %v1726
    %v1731 = vmul.f32 %v1701, %v1726
    %v1732 = vmul.f32 %v1702, %v1726
    %v1733 = vmul.f32 %v1703, %v1726
    %v1734 = vmul.f32 %v1704, %v1726
    %v1735 = vmul.f32 %v1705, %v1726
    %v1736 = vmul.f32 %v1706, %v1726
    %v1737 = vmul.f32 %v1707, %v1726
    %v1738 = vmul.f32 %v1708, %v1726
    %v1739 = vmul.f32 %v1709, %v1726
    %v1740 = vmul.f32 %v1710, %v1726
    %v1741 = vmul.f32 %v1711, %v1726
    %v1742 = vmul.f32 %v1712, %v1726
    %v1743 = vmul.f32 %v1713, %v1726
    %v1744 = vmul.f32 %v1714, %v1726
    %v1745 = vmul.f32 %v1715, %v1726
    %v1746 = vmul.f32 %v1716, %v1726
    %v1747 = vmul.f32 %v1717, %v1726
    %v1748 = vmul.f32 %v1718, %v1726
    %v1749 = vmul.f32 %v1719, %v1726
    %v1750 = vmul.f32 %v1720, %v1726
    %v1751 = vmul.f32 %v1721, %v1726
    %v1752 = vmul.f32 %v1722, %v1726
    %v1753 = vmul.f32 %v1723, %v1726
    %v1754 = vmul.f32 %v1724, %v1726
    %v1755 = vadd.f32 %v1669, %v1727
    %v1756 = vadd.f32 %v1670, %v1728
    %v1757 = vadd.f32 %v1671, %v1729
    %v1758 = vadd.f32 %v1672, %v1730
    %v1759 = vadd.f32 %v1673, %v1731
    %v1760 = vadd.f32 %v1674, %v1732
    %v1761 = vadd.f32 %v1675, %v1733
    %v1762 = vadd.f32 %v1676, %v1734
    %v1763 = vadd.f32 %v1677, %v1735
    %v1764 = vadd.f32 %v1678, %v1736
    %v1765 = vadd.f32 %v1679, %v1737
    %v1766 = vadd.f32 %v1680, %v1738
    %v1767 = vadd.f32 %v1681, %v1739
    %v1768 = vadd.f32 %v1682, %v1740
    %v1769 = vadd.f32 %v1683, %v1741
    %v1770 = vadd.f32 %v1684, %v1742
    %v1771 = vadd.f32 %v1685, %v1743
    %v1772 = vadd.f32 %v1686, %v1744
    %v1773 = vadd.f32 %v1687, %v1745
    %v1774 = vadd.f32 %v1688, %v1746
    %v1775 = vadd.f32 %v1689, %v1747
    %v1776 = vadd.f32 %v1690, %v1748
    %v1777 = vadd.f32 %v1691, %v1749
    %v1778 = vadd.f32 %v1692, %v1750
    %v1779 = vadd.f32 %v1693, %v1751
    %v1780 = vadd.f32 %v1694, %v1752
    %v1781 = vadd.f32 %v1695, %v1753
    %v1782 = vadd.f32 %v1696, %v1754
    %v1783 = vld [vmem:[%s948] sm:$0xff]
    %v1784 = vld [vmem:[%s948 + $0x8] sm:$0xff]
    %v1785 = vld [vmem:[%s948 + $0x10] sm:$0xff]
    %v1786 = vld [vmem:[%s948 + $0x18] sm:$0xff]
    %v1787 = vld [vmem:[%s948 + $0x20] sm:$0xff]
    %v1788 = vld [vmem:[%s948 + $0x28] sm:$0xff]
    %v1789 = vld [vmem:[%s948 + $0x30] sm:$0xff]
    %v1790 = vld [vmem:[%s948 + $0x38] sm:$0xff]
    %v1791 = vld [vmem:[%s948 + $0x40] sm:$0xff]
    %v1792 = vld [vmem:[%s948 + $0x48] sm:$0xff]
    %v1793 = vld [vmem:[%s948 + $0x50] sm:$0xff]
    %v1794 = vld [vmem:[%s948 + $0x58] sm:$0xff]
    %v1795 = vld [vmem:[%s948 + $0x60] sm:$0xff]
    %v1796 = vld [vmem:[%s948 + $0x68] sm:$0xff]
    %v1797 = vld [vmem:[%s948 + $0x70] sm:$0xff]
    %v1798 = vld [vmem:[%s948 + $0x78] sm:$0xff]
    %v1799 = vld [vmem:[%s948 + $0x80] sm:$0xff]
    %v1800 = vld [vmem:[%s948 + $0x88] sm:$0xff]
    %v1801 = vld [vmem:[%s948 + $0x90] sm:$0xff]
    %v1802 = vld [vmem:[%s948 + $0x98] sm:$0xff]
    %v1803 = vld [vmem:[%s948 + $0xa0] sm:$0xff]
    %v1804 = vld [vmem:[%s948 + $0xa8] sm:$0xff]
    %v1805 = vld [vmem:[%s948 + $0xb0] sm:$0xff]
    %v1806 = vld [vmem:[%s948 + $0xb8] sm:$0xff]
    %v1807 = vld [vmem:[%s948 + $0xc0] sm:$0xff]
    %v1808 = vld [vmem:[%s948 + $0xc8] sm:$0xff]
    %v1809 = vld [vmem:[%s948 + $0xd0] sm:$0xff]
    %v1810 = vld [vmem:[%s948 + $0xd8] sm:$0xff]
    %s1811 = scalar_lea.vmem %s1, 136
    %v1812 = vld [vmem:[%s1811] sm:$0xff]
    %v1813 = vmul.f32 %v1783, %v1812
    %v1814 = vmul.f32 %v1784, %v1812
    %v1815 = vmul.f32 %v1785, %v1812
    %v1816 = vmul.f32 %v1786, %v1812
    %v1817 = vmul.f32 %v1787, %v1812
    %v1818 = vmul.f32 %v1788, %v1812
    %v1819 = vmul.f32 %v1789, %v1812
    %v1820 = vmul.f32 %v1790, %v1812
    %v1821 = vmul.f32 %v1791, %v1812
    %v1822 = vmul.f32 %v1792, %v1812
    %v1823 = vmul.f32 %v1793, %v1812
    %v1824 = vmul.f32 %v1794, %v1812
    %v1825 = vmul.f32 %v1795, %v1812
    %v1826 = vmul.f32 %v1796, %v1812
    %v1827 = vmul.f32 %v1797, %v1812
    %v1828 = vmul.f32 %v1798, %v1812
    %v1829 = vmul.f32 %v1799, %v1812
    %v1830 = vmul.f32 %v1800, %v1812
    %v1831 = vmul.f32 %v1801, %v1812
    %v1832 = vmul.f32 %v1802, %v1812
    %v1833 = vmul.f32 %v1803, %v1812
    %v1834 = vmul.f32 %v1804, %v1812
    %v1835 = vmul.f32 %v1805, %v1812
    %v1836 = vmul.f32 %v1806, %v1812
    %v1837 = vmul.f32 %v1807, %v1812
    %v1838 = vmul.f32 %v1808, %v1812
    %v1839 = vmul.f32 %v1809, %v1812
    %v1840 = vmul.f32 %v1810, %v1812
    %v1841 = vadd.f32 %v1755, %v1813
    %v1842 = vadd.f32 %v1756, %v1814
    %v1843 = vadd.f32 %v1757, %v1815
    %v1844 = vadd.f32 %v1758, %v1816
    %v1845 = vadd.f32 %v1759, %v1817
    %v1846 = vadd.f32 %v1760, %v1818
    %v1847 = vadd.f32 %v1761, %v1819
    %v1848 = vadd.f32 %v1762, %v1820
    %v1849 = vadd.f32 %v1763, %v1821
    %v1850 = vadd.f32 %v1764, %v1822
    %v1851 = vadd.f32 %v1765, %v1823
    %v1852 = vadd.f32 %v1766, %v1824
    %v1853 = vadd.f32 %v1767, %v1825
    %v1854 = vadd.f32 %v1768, %v1826
    %v1855 = vadd.f32 %v1769, %v1827
    %v1856 = vadd.f32 %v1770, %v1828
    %v1857 = vadd.f32 %v1771, %v1829
    %v1858 = vadd.f32 %v1772, %v1830
    %v1859 = vadd.f32 %v1773, %v1831
    %v1860 = vadd.f32 %v1774, %v1832
    %v1861 = vadd.f32 %v1775, %v1833
    %v1862 = vadd.f32 %v1776, %v1834
    %v1863 = vadd.f32 %v1777, %v1835
    %v1864 = vadd.f32 %v1778, %v1836
    %v1865 = vadd.f32 %v1779, %v1837
    %v1866 = vadd.f32 %v1780, %v1838
    %v1867 = vadd.f32 %v1781, %v1839
    %v1868 = vadd.f32 %v1782, %v1840
    %s1869 = scalar_lea.vmem %s2, 8
    %v1870 = vld [vmem:[%s1869] sm:$0xff]
    %v1871 = vadd.f32 %v1841, %v1870
    %v1872 = vadd.f32 %v1842, %v1870
    %v1873 = vadd.f32 %v1843, %v1870
    %v1874 = vadd.f32 %v1844, %v1870
    %v1875 = vadd.f32 %v1845, %v1870
    %v1876 = vadd.f32 %v1846, %v1870
    %v1877 = vadd.f32 %v1847, %v1870
    %v1878 = vadd.f32 %v1848, %v1870
    %v1879 = vadd.f32 %v1849, %v1870
    %v1880 = vadd.f32 %v1850, %v1870
    %v1881 = vadd.f32 %v1851, %v1870
    %v1882 = vadd.f32 %v1852, %v1870
    %v1883 = vadd.f32 %v1853, %v1870
    %v1884 = vadd.f32 %v1854, %v1870
    %v1885 = vadd.f32 %v1855, %v1870
    %v1886 = vadd.f32 %v1856, %v1870
    %v1887 = vadd.f32 %v1857, %v1870
    %v1888 = vadd.f32 %v1858, %v1870
    %v1889 = vadd.f32 %v1859, %v1870
    %v1890 = vadd.f32 %v1860, %v1870
    %v1891 = vadd.f32 %v1861, %v1870
    %v1892 = vadd.f32 %v1862, %v1870
    %v1893 = vadd.f32 %v1863, %v1870
    %v1894 = vadd.f32 %v1864, %v1870
    %v1895 = vadd.f32 %v1865, %v1870
    %v1896 = vadd.f32 %v1866, %v1870
    %v1897 = vadd.f32 %v1867, %v1870
    %v1898 = vadd.f32 %v1868, %v1870
    %v1899 = vmax.f32 %v1871, 0.0
    %v1900 = vmax.f32 %v1872, 0.0
    %v1901 = vmax.f32 %v1873, 0.0
    %v1902 = vmax.f32 %v1874, 0.0
    %v1903 = vmax.f32 %v1875, 0.0
    %v1904 = vmax.f32 %v1876, 0.0
    %v1905 = vmax.f32 %v1877, 0.0
    %v1906 = vmax.f32 %v1878, 0.0
    %v1907 = vmax.f32 %v1879, 0.0
    %v1908 = vmax.f32 %v1880, 0.0
    %v1909 = vmax.f32 %v1881, 0.0
    %v1910 = vmax.f32 %v1882, 0.0
    %v1911 = vmax.f32 %v1883, 0.0
    %v1912 = vmax.f32 %v1884, 0.0
    %v1913 = vmax.f32 %v1885, 0.0
    %v1914 = vmax.f32 %v1886, 0.0
    %v1915 = vmax.f32 %v1887, 0.0
    %v1916 = vmax.f32 %v1888, 0.0
    %v1917 = vmax.f32 %v1889, 0.0
    %v1918 = vmax.f32 %v1890, 0.0
    %v1919 = vmax.f32 %v1891, 0.0
    %v1920 = vmax.f32 %v1892, 0.0
    %v1921 = vmax.f32 %v1893, 0.0
    %v1922 = vmax.f32 %v1894, 0.0
    %v1923 = vmax.f32 %v1895, 0.0
    %v1924 = vmax.f32 %v1896, 0.0
    %v1925 = vmax.f32 %v1897, 0.0
    %v1926 = vmax.f32 %v1898, 0.0
    %1927 = vst [vmem:[%s1094 + $0x8] sm:$0xff] %v1899
    %1928 = vst [vmem:[%s1094 + $0x18] sm:$0xff] %v1900
    %1929 = vst [vmem:[%s1094 + $0x28] sm:$0xff] %v1901
    %1930 = vst [vmem:[%s1094 + $0x38] sm:$0xff] %v1902
    %1931 = vst [vmem:[%s1094 + $0x48] sm:$0xff] %v1903
    %1932 = vst [vmem:[%s1094 + $0x58] sm:$0xff] %v1904
    %1933 = vst [vmem:[%s1094 + $0x68] sm:$0xff] %v1905
    %1934 = vst [vmem:[%s1094 + $0x78] sm:$0xff] %v1906
    %1935 = vst [vmem:[%s1094 + $0x88] sm:$0xff] %v1907
    %1936 = vst [vmem:[%s1094 + $0x98] sm:$0xff] %v1908
    %1937 = vst [vmem:[%s1094 + $0xa8] sm:$0xff] %v1909
    %1938 = vst [vmem:[%s1094 + $0xb8] sm:$0xff] %v1910
    %1939 = vst [vmem:[%s1094 + $0xc8] sm:$0xff] %v1911
    %1940 = vst [vmem:[%s1094 + $0xd8] sm:$0xff] %v1912
    %1941 = vst [vmem:[%s1094 + $0xe8] sm:$0xff] %v1913
    %1942 = vst [vmem:[%s1094 + $0xf8] sm:$0xff] %v1914
    %1943 = vst [vmem:[%s1094 + $0x108] sm:$0xff] %v1915
    %1944 = vst [vmem:[%s1094 + $0x118] sm:$0xff] %v1916
    %1945 = vst [vmem:[%s1094 + $0x128] sm:$0xff] %v1917
    %1946 = vst [vmem:[%s1094 + $0x138] sm:$0xff] %v1918
    %1947 = vst [vmem:[%s1094 + $0x148] sm:$0xff] %v1919
    %1948 = vst [vmem:[%s1094 + $0x158] sm:$0xff] %v1920
    %1949 = vst [vmem:[%s1094 + $0x168] sm:$0xff] %v1921
    %1950 = vst [vmem:[%s1094 + $0x178] sm:$0xff] %v1922
    %1951 = vst [vmem:[%s1094 + $0x188] sm:$0xff] %v1923
    %1952 = vst [vmem:[%s1094 + $0x198] sm:$0xff] %v1924
    %1953 = vst [vmem:[%s1094 + $0x1a8] sm:$0xff] %v1925
    %1954 = vst [vmem:[%s1094 + $0x1b8] sm:$0xff] %v1926
  $region26: #{neuralnet_forward.1} parent=0 // loop_footer
    %s269 = sadd.s32 1, %s265
  $region27: #{neuralnet_forward.1} parent=0 // loop_footer_branch
    %264 = sbr.rel target = $region23
  $region28: #{neuralnet_forward.1} parent=0 // loop_exit
    _
  loop: start=0, step=1, limit=28
  $region29: #{neuralnet_forward.1} parent=0 // loop_pre_header
    _
  $region30: #{neuralnet_forward.1} parent=0 // loop_header
    %s1956 = sphi 0, %s1960
    %p1957 = scmp.ge.s32.totalorder %s1956, 28
  $region31: #{neuralnet_forward.1} parent=0 // loop_header_branch
    %1959 = sbr.rel (%p1957) target = $region35
  $region32: #{neuralnet_forward.1} parent=0 // loop_body
    %s1961 = smul.u32 %s1956, 480
    %s1962 = scalar_lea.vmem [#allocation2], %s1961
    %v1963 = vld [vmem:[%s1962] sm:$0xff]
    %v1964 = vld [vmem:[%s1962 + $0x10] sm:$0xff]
    %v1965 = vld [vmem:[%s1962 + $0x20] sm:$0xff]
    %v1966 = vld [vmem:[%s1962 + $0x30] sm:$0xff]
    %v1967 = vld [vmem:[%s1962 + $0x40] sm:$0xff]
    %v1968 = vld [vmem:[%s1962 + $0x50] sm:$0xff]
    %v1969 = vld [vmem:[%s1962 + $0x60] sm:$0xff]
    %v1970 = vld [vmem:[%s1962 + $0x70] sm:$0xff]
    %v1971 = vld [vmem:[%s1962 + $0x80] sm:$0xff]
    %v1972 = vld [vmem:[%s1962 + $0x90] sm:$0xff]
    %v1973 = vld [vmem:[%s1962 + $0xa0] sm:$0xff]
    %v1974 = vld [vmem:[%s1962 + $0xb0] sm:$0xff]
    %v1975 = vld [vmem:[%s1962 + $0xc0] sm:$0xff]
    %v1976 = vld [vmem:[%s1962 + $0xd0] sm:$0xff]
    %v1977 = vld [vmem:[%s1962 + $0xe0] sm:$0xff]
    %v1978 = vld [vmem:[%s1962 + $0xf0] sm:$0xff]
    %v1979 = vld [vmem:[%s1962 + $0x100] sm:$0xff]
    %v1980 = vld [vmem:[%s1962 + $0x110] sm:$0xff]
    %v1981 = vld [vmem:[%s1962 + $0x120] sm:$0xff]
    %v1982 = vld [vmem:[%s1962 + $0x130] sm:$0xff]
    %v1983 = vld [vmem:[%s1962 + $0x140] sm:$0xff]
    %v1984 = vld [vmem:[%s1962 + $0x150] sm:$0xff]
    %v1985 = vld [vmem:[%s1962 + $0x160] sm:$0xff]
    %v1986 = vld [vmem:[%s1962 + $0x170] sm:$0xff]
    %v1987 = vld [vmem:[%s1962 + $0x180] sm:$0xff]
    %v1988 = vld [vmem:[%s1962 + $0x190] sm:$0xff]
    %v1989 = vld [vmem:[%s1962 + $0x1a0] sm:$0xff]
    %v1990 = vld [vmem:[%s1962 + $0x1b0] sm:$0xff]
    %v1991 = vld [vmem:[%s3] sm:$0xff]
    %v1992 = vmul.f32 %v1963, %v1991
    %v1993 = vmul.f32 %v1964, %v1991
    %v1994 = vmul.f32 %v1965, %v1991
    %v1995 = vmul.f32 %v1966, %v1991
    %v1996 = vmul.f32 %v1967, %v1991
    %v1997 = vmul.f32 %v1968, %v1991
    %v1998 = vmul.f32 %v1969, %v1991
    %v1999 = vmul.f32 %v1970, %v1991
    %v2000 = vmul.f32 %v1971, %v1991
    %v2001 = vmul.f32 %v1972, %v1991
    %v2002 = vmul.f32 %v1973, %v1991
    %v2003 = vmul.f32 %v1974, %v1991
    %v2004 = vmul.f32 %v1975, %v1991
    %v2005 = vmul.f32 %v1976, %v1991
    %v2006 = vmul.f32 %v1977, %v1991
    %v2007 = vmul.f32 %v1978, %v1991
    %v2008 = vmul.f32 %v1979, %v1991
    %v2009 = vmul.f32 %v1980, %v1991
    %v2010 = vmul.f32 %v1981, %v1991
    %v2011 = vmul.f32 %v1982, %v1991
    %v2012 = vmul.f32 %v1983, %v1991
    %v2013 = vmul.f32 %v1984, %v1991
    %v2014 = vmul.f32 %v1985, %v1991
    %v2015 = vmul.f32 %v1986, %v1991
    %v2016 = vmul.f32 %v1987, %v1991
    %v2017 = vmul.f32 %v1988, %v1991
    %v2018 = vmul.f32 %v1989, %v1991
    %v2019 = vmul.f32 %v1990, %v1991
    %v2020 = vld [vmem:[%s1962 + $0x8] sm:$0xff]
    %v2021 = vld [vmem:[%s1962 + $0x18] sm:$0xff]
    %v2022 = vld [vmem:[%s1962 + $0x28] sm:$0xff]
    %v2023 = vld [vmem:[%s1962 + $0x38] sm:$0xff]
    %v2024 = vld [vmem:[%s1962 + $0x48] sm:$0xff]
    %v2025 = vld [vmem:[%s1962 + $0x58] sm:$0xff]
    %v2026 = vld [vmem:[%s1962 + $0x68] sm:$0xff]
    %v2027 = vld [vmem:[%s1962 + $0x78] sm:$0xff]
    %v2028 = vld [vmem:[%s1962 + $0x88] sm:$0xff]
    %v2029 = vld [vmem:[%s1962 + $0x98] sm:$0xff]
    %v2030 = vld [vmem:[%s1962 + $0xa8] sm:$0xff]
    %v2031 = vld [vmem:[%s1962 + $0xb8] sm:$0xff]
    %v2032 = vld [vmem:[%s1962 + $0xc8] sm:$0xff]
    %v2033 = vld [vmem:[%s1962 + $0xd8] sm:$0xff]
    %v2034 = vld [vmem:[%s1962 + $0xe8] sm:$0xff]
    %v2035 = vld [vmem:[%s1962 + $0xf8] sm:$0xff]
    %v2036 = vld [vmem:[%s1962 + $0x108] sm:$0xff]
    %v2037 = vld [vmem:[%s1962 + $0x118] sm:$0xff]
    %v2038 = vld [vmem:[%s1962 + $0x128] sm:$0xff]
    %v2039 = vld [vmem:[%s1962 + $0x138] sm:$0xff]
    %v2040 = vld [vmem:[%s1962 + $0x148] sm:$0xff]
    %v2041 = vld [vmem:[%s1962 + $0x158] sm:$0xff]
    %v2042 = vld [vmem:[%s1962 + $0x168] sm:$0xff]
    %v2043 = vld [vmem:[%s1962 + $0x178] sm:$0xff]
    %v2044 = vld [vmem:[%s1962 + $0x188] sm:$0xff]
    %v2045 = vld [vmem:[%s1962 + $0x198] sm:$0xff]
    %v2046 = vld [vmem:[%s1962 + $0x1a8] sm:$0xff]
    %v2047 = vld [vmem:[%s1962 + $0x1b8] sm:$0xff]
    %s2048 = scalar_lea.vmem %s3, 8
    %v2049 = vld [vmem:[%s2048] sm:$0xff]
    %v2050 = vmul.f32 %v2020, %v2049
    %v2051 = vmul.f32 %v2021, %v2049
    %v2052 = vmul.f32 %v2022, %v2049
    %v2053 = vmul.f32 %v2023, %v2049
    %v2054 = vmul.f32 %v2024, %v2049
    %v2055 = vmul.f32 %v2025, %v2049
    %v2056 = vmul.f32 %v2026, %v2049
    %v2057 = vmul.f32 %v2027, %v2049
    %v2058 = vmul.f32 %v2028, %v2049
    %v2059 = vmul.f32 %v2029, %v2049
    %v2060 = vmul.f32 %v2030, %v2049
    %v2061 = vmul.f32 %v2031, %v2049
    %v2062 = vmul.f32 %v2032, %v2049
    %v2063 = vmul.f32 %v2033, %v2049
    %v2064 = vmul.f32 %v2034, %v2049
    %v2065 = vmul.f32 %v2035, %v2049
    %v2066 = vmul.f32 %v2036, %v2049
    %v2067 = vmul.f32 %v2037, %v2049
    %v2068 = vmul.f32 %v2038, %v2049
    %v2069 = vmul.f32 %v2039, %v2049
    %v2070 = vmul.f32 %v2040, %v2049
    %v2071 = vmul.f32 %v2041, %v2049
    %v2072 = vmul.f32 %v2042, %v2049
    %v2073 = vmul.f32 %v2043, %v2049
    %v2074 = vmul.f32 %v2044, %v2049
    %v2075 = vmul.f32 %v2045, %v2049
    %v2076 = vmul.f32 %v2046, %v2049
    %v2077 = vmul.f32 %v2047, %v2049
    %v2078 = vadd.f32 %v1992, %v2050
    %v2079 = vadd.f32 %v1993, %v2051
    %v2080 = vadd.f32 %v1994, %v2052
    %v2081 = vadd.f32 %v1995, %v2053
    %v2082 = vadd.f32 %v1996, %v2054
    %v2083 = vadd.f32 %v1997, %v2055
    %v2084 = vadd.f32 %v1998, %v2056
    %v2085 = vadd.f32 %v1999, %v2057
    %v2086 = vadd.f32 %v2000, %v2058
    %v2087 = vadd.f32 %v2001, %v2059
    %v2088 = vadd.f32 %v2002, %v2060
    %v2089 = vadd.f32 %v2003, %v2061
    %v2090 = vadd.f32 %v2004, %v2062
    %v2091 = vadd.f32 %v2005, %v2063
    %v2092 = vadd.f32 %v2006, %v2064
    %v2093 = vadd.f32 %v2007, %v2065
    %v2094 = vadd.f32 %v2008, %v2066
    %v2095 = vadd.f32 %v2009, %v2067
    %v2096 = vadd.f32 %v2010, %v2068
    %v2097 = vadd.f32 %v2011, %v2069
    %v2098 = vadd.f32 %v2012, %v2070
    %v2099 = vadd.f32 %v2013, %v2071
    %v2100 = vadd.f32 %v2014, %v2072
    %v2101 = vadd.f32 %v2015, %v2073
    %v2102 = vadd.f32 %v2016, %v2074
    %v2103 = vadd.f32 %v2017, %v2075
    %v2104 = vadd.f32 %v2018, %v2076
    %v2105 = vadd.f32 %v2019, %v2077
    %s2106 = sadd.s32 16, %s1961
    %s2107 = scalar_lea.vmem [#allocation2], %s2106
    %v2108 = vld [vmem:[%s2107] sm:$0xff]
    %v2109 = vld [vmem:[%s2107 + $0x10] sm:$0xff]
    %v2110 = vld [vmem:[%s2107 + $0x20] sm:$0xff]
    %v2111 = vld [vmem:[%s2107 + $0x30] sm:$0xff]
    %v2112 = vld [vmem:[%s2107 + $0x40] sm:$0xff]
    %v2113 = vld [vmem:[%s2107 + $0x50] sm:$0xff]
    %v2114 = vld [vmem:[%s2107 + $0x60] sm:$0xff]
    %v2115 = vld [vmem:[%s2107 + $0x70] sm:$0xff]
    %v2116 = vld [vmem:[%s2107 + $0x80] sm:$0xff]
    %v2117 = vld [vmem:[%s2107 + $0x90] sm:$0xff]
    %v2118 = vld [vmem:[%s2107 + $0xa0] sm:$0xff]
    %v2119 = vld [vmem:[%s2107 + $0xb0] sm:$0xff]
    %v2120 = vld [vmem:[%s2107 + $0xc0] sm:$0xff]
    %v2121 = vld [vmem:[%s2107 + $0xd0] sm:$0xff]
    %v2122 = vld [vmem:[%s2107 + $0xe0] sm:$0xff]
    %v2123 = vld [vmem:[%s2107 + $0xf0] sm:$0xff]
    %v2124 = vld [vmem:[%s2107 + $0x100] sm:$0xff]
    %v2125 = vld [vmem:[%s2107 + $0x110] sm:$0xff]
    %v2126 = vld [vmem:[%s2107 + $0x120] sm:$0xff]
    %v2127 = vld [vmem:[%s2107 + $0x130] sm:$0xff]
    %v2128 = vld [vmem:[%s2107 + $0x140] sm:$0xff]
    %v2129 = vld [vmem:[%s2107 + $0x150] sm:$0xff]
    %v2130 = vld [vmem:[%s2107 + $0x160] sm:$0xff]
    %v2131 = vld [vmem:[%s2107 + $0x170] sm:$0xff]
    %v2132 = vld [vmem:[%s2107 + $0x180] sm:$0xff]
    %v2133 = vld [vmem:[%s2107 + $0x190] sm:$0xff]
    %v2134 = vld [vmem:[%s2107 + $0x1a0] sm:$0xff]
    %v2135 = vld [vmem:[%s2107 + $0x1b0] sm:$0xff]
    %s2136 = scalar_lea.vmem %s3, 16
    %v2137 = vld [vmem:[%s2136] sm:$0xff]
    %v2138 = vmul.f32 %v2108, %v2137
    %v2139 = vmul.f32 %v2109, %v2137
    %v2140 = vmul.f32 %v2110, %v2137
    %v2141 = vmul.f32 %v2111, %v2137
    %v2142 = vmul.f32 %v2112, %v2137
    %v2143 = vmul.f32 %v2113, %v2137
    %v2144 = vmul.f32 %v2114, %v2137
    %v2145 = vmul.f32 %v2115, %v2137
    %v2146 = vmul.f32 %v2116, %v2137
    %v2147 = vmul.f32 %v2117, %v2137
    %v2148 = vmul.f32 %v2118, %v2137
    %v2149 = vmul.f32 %v2119, %v2137
    %v2150 = vmul.f32 %v2120, %v2137
    %v2151 = vmul.f32 %v2121, %v2137
    %v2152 = vmul.f32 %v2122, %v2137
    %v2153 = vmul.f32 %v2123, %v2137
    %v2154 = vmul.f32 %v2124, %v2137
    %v2155 = vmul.f32 %v2125, %v2137
    %v2156 = vmul.f32 %v2126, %v2137
    %v2157 = vmul.f32 %v2127, %v2137
    %v2158 = vmul.f32 %v2128, %v2137
    %v2159 = vmul.f32 %v2129, %v2137
    %v2160 = vmul.f32 %v2130, %v2137
    %v2161 = vmul.f32 %v2131, %v2137
    %v2162 = vmul.f32 %v2132, %v2137
    %v2163 = vmul.f32 %v2133, %v2137
    %v2164 = vmul.f32 %v2134, %v2137
    %v2165 = vmul.f32 %v2135, %v2137
    %v2166 = vadd.f32 %v2078, %v2138
    %v2167 = vadd.f32 %v2079, %v2139
    %v2168 = vadd.f32 %v2080, %v2140
    %v2169 = vadd.f32 %v2081, %v2141
    %v2170 = vadd.f32 %v2082, %v2142
    %v2171 = vadd.f32 %v2083, %v2143
    %v2172 = vadd.f32 %v2084, %v2144
    %v2173 = vadd.f32 %v2085, %v2145
    %v2174 = vadd.f32 %v2086, %v2146
    %v2175 = vadd.f32 %v2087, %v2147
    %v2176 = vadd.f32 %v2088, %v2148
    %v2177 = vadd.f32 %v2089, %v2149
    %v2178 = vadd.f32 %v2090, %v2150
    %v2179 = vadd.f32 %v2091, %v2151
    %v2180 = vadd.f32 %v2092, %v2152
    %v2181 = vadd.f32 %v2093, %v2153
    %v2182 = vadd.f32 %v2094, %v2154
    %v2183 = vadd.f32 %v2095, %v2155
    %v2184 = vadd.f32 %v2096, %v2156
    %v2185 = vadd.f32 %v2097, %v2157
    %v2186 = vadd.f32 %v2098, %v2158
    %v2187 = vadd.f32 %v2099, %v2159
    %v2188 = vadd.f32 %v2100, %v2160
    %v2189 = vadd.f32 %v2101, %v2161
    %v2190 = vadd.f32 %v2102, %v2162
    %v2191 = vadd.f32 %v2103, %v2163
    %v2192 = vadd.f32 %v2104, %v2164
    %v2193 = vadd.f32 %v2105, %v2165
    %v2194 = vld [vmem:[%s2107 + $0x8] sm:$0xff]
    %v2195 = vld [vmem:[%s2107 + $0x18] sm:$0xff]
    %v2196 = vld [vmem:[%s2107 + $0x28] sm:$0xff]
    %v2197 = vld [vmem:[%s2107 + $0x38] sm:$0xff]
    %v2198 = vld [vmem:[%s2107 + $0x48] sm:$0xff]
    %v2199 = vld [vmem:[%s2107 + $0x58] sm:$0xff]
    %v2200 = vld [vmem:[%s2107 + $0x68] sm:$0xff]
    %v2201 = vld [vmem:[%s2107 + $0x78] sm:$0xff]
    %v2202 = vld [vmem:[%s2107 + $0x88] sm:$0xff]
    %v2203 = vld [vmem:[%s2107 + $0x98] sm:$0xff]
    %v2204 = vld [vmem:[%s2107 + $0xa8] sm:$0xff]
    %v2205 = vld [vmem:[%s2107 + $0xb8] sm:$0xff]
    %v2206 = vld [vmem:[%s2107 + $0xc8] sm:$0xff]
    %v2207 = vld [vmem:[%s2107 + $0xd8] sm:$0xff]
    %v2208 = vld [vmem:[%s2107 + $0xe8] sm:$0xff]
    %v2209 = vld [vmem:[%s2107 + $0xf8] sm:$0xff]
    %v2210 = vld [vmem:[%s2107 + $0x108] sm:$0xff]
    %v2211 = vld [vmem:[%s2107 + $0x118] sm:$0xff]
    %v2212 = vld [vmem:[%s2107 + $0x128] sm:$0xff]
    %v2213 = vld [vmem:[%s2107 + $0x138] sm:$0xff]
    %v2214 = vld [vmem:[%s2107 + $0x148] sm:$0xff]
    %v2215 = vld [vmem:[%s2107 + $0x158] sm:$0xff]
    %v2216 = vld [vmem:[%s2107 + $0x168] sm:$0xff]
    %v2217 = vld [vmem:[%s2107 + $0x178] sm:$0xff]
    %v2218 = vld [vmem:[%s2107 + $0x188] sm:$0xff]
    %v2219 = vld [vmem:[%s2107 + $0x198] sm:$0xff]
    %v2220 = vld [vmem:[%s2107 + $0x1a8] sm:$0xff]
    %v2221 = vld [vmem:[%s2107 + $0x1b8] sm:$0xff]
    %s2222 = scalar_lea.vmem %s3, 24
    %v2223 = vld [vmem:[%s2222] sm:$0xff]
    %v2224 = vmul.f32 %v2194, %v2223
    %v2225 = vmul.f32 %v2195, %v2223
    %v2226 = vmul.f32 %v2196, %v2223
    %v2227 = vmul.f32 %v2197, %v2223
    %v2228 = vmul.f32 %v2198, %v2223
    %v2229 = vmul.f32 %v2199, %v2223
    %v2230 = vmul.f32 %v2200, %v2223
    %v2231 = vmul.f32 %v2201, %v2223
    %v2232 = vmul.f32 %v2202, %v2223
    %v2233 = vmul.f32 %v2203, %v2223
    %v2234 = vmul.f32 %v2204, %v2223
    %v2235 = vmul.f32 %v2205, %v2223
    %v2236 = vmul.f32 %v2206, %v2223
    %v2237 = vmul.f32 %v2207, %v2223
    %v2238 = vmul.f32 %v2208, %v2223
    %v2239 = vmul.f32 %v2209, %v2223
    %v2240 = vmul.f32 %v2210, %v2223
    %v2241 = vmul.f32 %v2211, %v2223
    %v2242 = vmul.f32 %v2212, %v2223
    %v2243 = vmul.f32 %v2213, %v2223
    %v2244 = vmul.f32 %v2214, %v2223
    %v2245 = vmul.f32 %v2215, %v2223
    %v2246 = vmul.f32 %v2216, %v2223
    %v2247 = vmul.f32 %v2217, %v2223
    %v2248 = vmul.f32 %v2218, %v2223
    %v2249 = vmul.f32 %v2219, %v2223
    %v2250 = vmul.f32 %v2220, %v2223
    %v2251 = vmul.f32 %v2221, %v2223
    %v2252 = vadd.f32 %v2166, %v2224
    %v2253 = vadd.f32 %v2167, %v2225
    %v2254 = vadd.f32 %v2168, %v2226
    %v2255 = vadd.f32 %v2169, %v2227
    %v2256 = vadd.f32 %v2170, %v2228
    %v2257 = vadd.f32 %v2171, %v2229
    %v2258 = vadd.f32 %v2172, %v2230
    %v2259 = vadd.f32 %v2173, %v2231
    %v2260 = vadd.f32 %v2174, %v2232
    %v2261 = vadd.f32 %v2175, %v2233
    %v2262 = vadd.f32 %v2176, %v2234
    %v2263 = vadd.f32 %v2177, %v2235
    %v2264 = vadd.f32 %v2178, %v2236
    %v2265 = vadd.f32 %v2179, %v2237
    %v2266 = vadd.f32 %v2180, %v2238
    %v2267 = vadd.f32 %v2181, %v2239
    %v2268 = vadd.f32 %v2182, %v2240
    %v2269 = vadd.f32 %v2183, %v2241
    %v2270 = vadd.f32 %v2184, %v2242
    %v2271 = vadd.f32 %v2185, %v2243
    %v2272 = vadd.f32 %v2186, %v2244
    %v2273 = vadd.f32 %v2187, %v2245
    %v2274 = vadd.f32 %v2188, %v2246
    %v2275 = vadd.f32 %v2189, %v2247
    %v2276 = vadd.f32 %v2190, %v2248
    %v2277 = vadd.f32 %v2191, %v2249
    %v2278 = vadd.f32 %v2192, %v2250
    %v2279 = vadd.f32 %v2193, %v2251
    %s2280 = sadd.s32 32, %s1961
    %s2281 = scalar_lea.vmem [#allocation2], %s2280
    %v2282 = vld [vmem:[%s2281] sm:$0xff]
    %v2283 = vld [vmem:[%s2281 + $0x10] sm:$0xff]
    %v2284 = vld [vmem:[%s2281 + $0x20] sm:$0xff]
    %v2285 = vld [vmem:[%s2281 + $0x30] sm:$0xff]
    %v2286 = vld [vmem:[%s2281 + $0x40] sm:$0xff]
    %v2287 = vld [vmem:[%s2281 + $0x50] sm:$0xff]
    %v2288 = vld [vmem:[%s2281 + $0x60] sm:$0xff]
    %v2289 = vld [vmem:[%s2281 + $0x70] sm:$0xff]
    %v2290 = vld [vmem:[%s2281 + $0x80] sm:$0xff]
    %v2291 = vld [vmem:[%s2281 + $0x90] sm:$0xff]
    %v2292 = vld [vmem:[%s2281 + $0xa0] sm:$0xff]
    %v2293 = vld [vmem:[%s2281 + $0xb0] sm:$0xff]
    %v2294 = vld [vmem:[%s2281 + $0xc0] sm:$0xff]
    %v2295 = vld [vmem:[%s2281 + $0xd0] sm:$0xff]
    %v2296 = vld [vmem:[%s2281 + $0xe0] sm:$0xff]
    %v2297 = vld [vmem:[%s2281 + $0xf0] sm:$0xff]
    %v2298 = vld [vmem:[%s2281 + $0x100] sm:$0xff]
    %v2299 = vld [vmem:[%s2281 + $0x110] sm:$0xff]
    %v2300 = vld [vmem:[%s2281 + $0x120] sm:$0xff]
    %v2301 = vld [vmem:[%s2281 + $0x130] sm:$0xff]
    %v2302 = vld [vmem:[%s2281 + $0x140] sm:$0xff]
    %v2303 = vld [vmem:[%s2281 + $0x150] sm:$0xff]
    %v2304 = vld [vmem:[%s2281 + $0x160] sm:$0xff]
    %v2305 = vld [vmem:[%s2281 + $0x170] sm:$0xff]
    %v2306 = vld [vmem:[%s2281 + $0x180] sm:$0xff]
    %v2307 = vld [vmem:[%s2281 + $0x190] sm:$0xff]
    %v2308 = vld [vmem:[%s2281 + $0x1a0] sm:$0xff]
    %v2309 = vld [vmem:[%s2281 + $0x1b0] sm:$0xff]
    %s2310 = scalar_lea.vmem %s3, 32
    %v2311 = vld [vmem:[%s2310] sm:$0xff]
    %v2312 = vmul.f32 %v2282, %v2311
    %v2313 = vmul.f32 %v2283, %v2311
    %v2314 = vmul.f32 %v2284, %v2311
    %v2315 = vmul.f32 %v2285, %v2311
    %v2316 = vmul.f32 %v2286, %v2311
    %v2317 = vmul.f32 %v2287, %v2311
    %v2318 = vmul.f32 %v2288, %v2311
    %v2319 = vmul.f32 %v2289, %v2311
    %v2320 = vmul.f32 %v2290, %v2311
    %v2321 = vmul.f32 %v2291, %v2311
    %v2322 = vmul.f32 %v2292, %v2311
    %v2323 = vmul.f32 %v2293, %v2311
    %v2324 = vmul.f32 %v2294, %v2311
    %v2325 = vmul.f32 %v2295, %v2311
    %v2326 = vmul.f32 %v2296, %v2311
    %v2327 = vmul.f32 %v2297, %v2311
    %v2328 = vmul.f32 %v2298, %v2311
    %v2329 = vmul.f32 %v2299, %v2311
    %v2330 = vmul.f32 %v2300, %v2311
    %v2331 = vmul.f32 %v2301, %v2311
    %v2332 = vmul.f32 %v2302, %v2311
    %v2333 = vmul.f32 %v2303, %v2311
    %v2334 = vmul.f32 %v2304, %v2311
    %v2335 = vmul.f32 %v2305, %v2311
    %v2336 = vmul.f32 %v2306, %v2311
    %v2337 = vmul.f32 %v2307, %v2311
    %v2338 = vmul.f32 %v2308, %v2311
    %v2339 = vmul.f32 %v2309, %v2311
    %v2340 = vadd.f32 %v2252, %v2312
    %v2341 = vadd.f32 %v2253, %v2313
    %v2342 = vadd.f32 %v2254, %v2314
    %v2343 = vadd.f32 %v2255, %v2315
    %v2344 = vadd.f32 %v2256, %v2316
    %v2345 = vadd.f32 %v2257, %v2317
    %v2346 = vadd.f32 %v2258, %v2318
    %v2347 = vadd.f32 %v2259, %v2319
    %v2348 = vadd.f32 %v2260, %v2320
    %v2349 = vadd.f32 %v2261, %v2321
    %v2350 = vadd.f32 %v2262, %v2322
    %v2351 = vadd.f32 %v2263, %v2323
    %v2352 = vadd.f32 %v2264, %v2324
    %v2353 = vadd.f32 %v2265, %v2325
    %v2354 = vadd.f32 %v2266, %v2326
    %v2355 = vadd.f32 %v2267, %v2327
    %v2356 = vadd.f32 %v2268, %v2328
    %v2357 = vadd.f32 %v2269, %v2329
    %v2358 = vadd.f32 %v2270, %v2330
    %v2359 = vadd.f32 %v2271, %v2331
    %v2360 = vadd.f32 %v2272, %v2332
    %v2361 = vadd.f32 %v2273, %v2333
    %v2362 = vadd.f32 %v2274, %v2334
    %v2363 = vadd.f32 %v2275, %v2335
    %v2364 = vadd.f32 %v2276, %v2336
    %v2365 = vadd.f32 %v2277, %v2337
    %v2366 = vadd.f32 %v2278, %v2338
    %v2367 = vadd.f32 %v2279, %v2339
    %v2368 = vld [vmem:[%s2281 + $0x8] sm:$0xff]
    %v2369 = vld [vmem:[%s2281 + $0x18] sm:$0xff]
    %v2370 = vld [vmem:[%s2281 + $0x28] sm:$0xff]
    %v2371 = vld [vmem:[%s2281 + $0x38] sm:$0xff]
    %v2372 = vld [vmem:[%s2281 + $0x48] sm:$0xff]
    %v2373 = vld [vmem:[%s2281 + $0x58] sm:$0xff]
    %v2374 = vld [vmem:[%s2281 + $0x68] sm:$0xff]
    %v2375 = vld [vmem:[%s2281 + $0x78] sm:$0xff]
    %v2376 = vld [vmem:[%s2281 + $0x88] sm:$0xff]
    %v2377 = vld [vmem:[%s2281 + $0x98] sm:$0xff]
    %v2378 = vld [vmem:[%s2281 + $0xa8] sm:$0xff]
    %v2379 = vld [vmem:[%s2281 + $0xb8] sm:$0xff]
    %v2380 = vld [vmem:[%s2281 + $0xc8] sm:$0xff]
    %v2381 = vld [vmem:[%s2281 + $0xd8] sm:$0xff]
    %v2382 = vld [vmem:[%s2281 + $0xe8] sm:$0xff]
    %v2383 = vld [vmem:[%s2281 + $0xf8] sm:$0xff]
    %v2384 = vld [vmem:[%s2281 + $0x108] sm:$0xff]
    %v2385 = vld [vmem:[%s2281 + $0x118] sm:$0xff]
    %v2386 = vld [vmem:[%s2281 + $0x128] sm:$0xff]
    %v2387 = vld [vmem:[%s2281 + $0x138] sm:$0xff]
    %v2388 = vld [vmem:[%s2281 + $0x148] sm:$0xff]
    %v2389 = vld [vmem:[%s2281 + $0x158] sm:$0xff]
    %v2390 = vld [vmem:[%s2281 + $0x168] sm:$0xff]
    %v2391 = vld [vmem:[%s2281 + $0x178] sm:$0xff]
    %v2392 = vld [vmem:[%s2281 + $0x188] sm:$0xff]
    %v2393 = vld [vmem:[%s2281 + $0x198] sm:$0xff]
    %v2394 = vld [vmem:[%s2281 + $0x1a8] sm:$0xff]
    %v2395 = vld [vmem:[%s2281 + $0x1b8] sm:$0xff]
    %s2396 = scalar_lea.vmem %s3, 40
    %v2397 = vld [vmem:[%s2396] sm:$0xff]
    %v2398 = vmul.f32 %v2368, %v2397
    %v2399 = vmul.f32 %v2369, %v2397
    %v2400 = vmul.f32 %v2370, %v2397
    %v2401 = vmul.f32 %v2371, %v2397
    %v2402 = vmul.f32 %v2372, %v2397
    %v2403 = vmul.f32 %v2373, %v2397
    %v2404 = vmul.f32 %v2374, %v2397
    %v2405 = vmul.f32 %v2375, %v2397
    %v2406 = vmul.f32 %v2376, %v2397
    %v2407 = vmul.f32 %v2377, %v2397
    %v2408 = vmul.f32 %v2378, %v2397
    %v2409 = vmul.f32 %v2379, %v2397
    %v2410 = vmul.f32 %v2380, %v2397
    %v2411 = vmul.f32 %v2381, %v2397
    %v2412 = vmul.f32 %v2382, %v2397
    %v2413 = vmul.f32 %v2383, %v2397
    %v2414 = vmul.f32 %v2384, %v2397
    %v2415 = vmul.f32 %v2385, %v2397
    %v2416 = vmul.f32 %v2386, %v2397
    %v2417 = vmul.f32 %v2387, %v2397
    %v2418 = vmul.f32 %v2388, %v2397
    %v2419 = vmul.f32 %v2389, %v2397
    %v2420 = vmul.f32 %v2390, %v2397
    %v2421 = vmul.f32 %v2391, %v2397
    %v2422 = vmul.f32 %v2392, %v2397
    %v2423 = vmul.f32 %v2393, %v2397
    %v2424 = vmul.f32 %v2394, %v2397
    %v2425 = vmul.f32 %v2395, %v2397
    %v2426 = vadd.f32 %v2340, %v2398
    %v2427 = vadd.f32 %v2341, %v2399
    %v2428 = vadd.f32 %v2342, %v2400
    %v2429 = vadd.f32 %v2343, %v2401
    %v2430 = vadd.f32 %v2344, %v2402
    %v2431 = vadd.f32 %v2345, %v2403
    %v2432 = vadd.f32 %v2346, %v2404
    %v2433 = vadd.f32 %v2347, %v2405
    %v2434 = vadd.f32 %v2348, %v2406
    %v2435 = vadd.f32 %v2349, %v2407
    %v2436 = vadd.f32 %v2350, %v2408
    %v2437 = vadd.f32 %v2351, %v2409
    %v2438 = vadd.f32 %v2352, %v2410
    %v2439 = vadd.f32 %v2353, %v2411
    %v2440 = vadd.f32 %v2354, %v2412
    %v2441 = vadd.f32 %v2355, %v2413
    %v2442 = vadd.f32 %v2356, %v2414
    %v2443 = vadd.f32 %v2357, %v2415
    %v2444 = vadd.f32 %v2358, %v2416
    %v2445 = vadd.f32 %v2359, %v2417
    %v2446 = vadd.f32 %v2360, %v2418
    %v2447 = vadd.f32 %v2361, %v2419
    %v2448 = vadd.f32 %v2362, %v2420
    %v2449 = vadd.f32 %v2363, %v2421
    %v2450 = vadd.f32 %v2364, %v2422
    %v2451 = vadd.f32 %v2365, %v2423
    %v2452 = vadd.f32 %v2366, %v2424
    %v2453 = vadd.f32 %v2367, %v2425
    %s2454 = sadd.s32 %s1956, 1
    %s2455 = smul.u32 %s2454, 480
    %s2456 = scalar_lea.vmem [#allocation2], %s2455
    %v2457 = vld [vmem:[%s2456] sm:$0xff]
    %v2458 = vld [vmem:[%s2456 + $0x10] sm:$0xff]
    %v2459 = vld [vmem:[%s2456 + $0x20] sm:$0xff]
    %v2460 = vld [vmem:[%s2456 + $0x30] sm:$0xff]
    %v2461 = vld [vmem:[%s2456 + $0x40] sm:$0xff]
    %v2462 = vld [vmem:[%s2456 + $0x50] sm:$0xff]
    %v2463 = vld [vmem:[%s2456 + $0x60] sm:$0xff]
    %v2464 = vld [vmem:[%s2456 + $0x70] sm:$0xff]
    %v2465 = vld [vmem:[%s2456 + $0x80] sm:$0xff]
    %v2466 = vld [vmem:[%s2456 + $0x90] sm:$0xff]
    %v2467 = vld [vmem:[%s2456 + $0xa0] sm:$0xff]
    %v2468 = vld [vmem:[%s2456 + $0xb0] sm:$0xff]
    %v2469 = vld [vmem:[%s2456 + $0xc0] sm:$0xff]
    %v2470 = vld [vmem:[%s2456 + $0xd0] sm:$0xff]
    %v2471 = vld [vmem:[%s2456 + $0xe0] sm:$0xff]
    %v2472 = vld [vmem:[%s2456 + $0xf0] sm:$0xff]
    %v2473 = vld [vmem:[%s2456 + $0x100] sm:$0xff]
    %v2474 = vld [vmem:[%s2456 + $0x110] sm:$0xff]
    %v2475 = vld [vmem:[%s2456 + $0x120] sm:$0xff]
    %v2476 = vld [vmem:[%s2456 + $0x130] sm:$0xff]
    %v2477 = vld [vmem:[%s2456 + $0x140] sm:$0xff]
    %v2478 = vld [vmem:[%s2456 + $0x150] sm:$0xff]
    %v2479 = vld [vmem:[%s2456 + $0x160] sm:$0xff]
    %v2480 = vld [vmem:[%s2456 + $0x170] sm:$0xff]
    %v2481 = vld [vmem:[%s2456 + $0x180] sm:$0xff]
    %v2482 = vld [vmem:[%s2456 + $0x190] sm:$0xff]
    %v2483 = vld [vmem:[%s2456 + $0x1a0] sm:$0xff]
    %v2484 = vld [vmem:[%s2456 + $0x1b0] sm:$0xff]
    %s2485 = scalar_lea.vmem %s3, 48
    %v2486 = vld [vmem:[%s2485] sm:$0xff]
    %v2487 = vmul.f32 %v2457, %v2486
    %v2488 = vmul.f32 %v2458, %v2486
    %v2489 = vmul.f32 %v2459, %v2486
    %v2490 = vmul.f32 %v2460, %v2486
    %v2491 = vmul.f32 %v2461, %v2486
    %v2492 = vmul.f32 %v2462, %v2486
    %v2493 = vmul.f32 %v2463, %v2486
    %v2494 = vmul.f32 %v2464, %v2486
    %v2495 = vmul.f32 %v2465, %v2486
    %v2496 = vmul.f32 %v2466, %v2486
    %v2497 = vmul.f32 %v2467, %v2486
    %v2498 = vmul.f32 %v2468, %v2486
    %v2499 = vmul.f32 %v2469, %v2486
    %v2500 = vmul.f32 %v2470, %v2486
    %v2501 = vmul.f32 %v2471, %v2486
    %v2502 = vmul.f32 %v2472, %v2486
    %v2503 = vmul.f32 %v2473, %v2486
    %v2504 = vmul.f32 %v2474, %v2486
    %v2505 = vmul.f32 %v2475, %v2486
    %v2506 = vmul.f32 %v2476, %v2486
    %v2507 = vmul.f32 %v2477, %v2486
    %v2508 = vmul.f32 %v2478, %v2486
    %v2509 = vmul.f32 %v2479, %v2486
    %v2510 = vmul.f32 %v2480, %v2486
    %v2511 = vmul.f32 %v2481, %v2486
    %v2512 = vmul.f32 %v2482, %v2486
    %v2513 = vmul.f32 %v2483, %v2486
    %v2514 = vmul.f32 %v2484, %v2486
    %v2515 = vadd.f32 %v2426, %v2487
    %v2516 = vadd.f32 %v2427, %v2488
    %v2517 = vadd.f32 %v2428, %v2489
    %v2518 = vadd.f32 %v2429, %v2490
    %v2519 = vadd.f32 %v2430, %v2491
    %v2520 = vadd.f32 %v2431, %v2492
    %v2521 = vadd.f32 %v2432, %v2493
    %v2522 = vadd.f32 %v2433, %v2494
    %v2523 = vadd.f32 %v2434, %v2495
    %v2524 = vadd.f32 %v2435, %v2496
    %v2525 = vadd.f32 %v2436, %v2497
    %v2526 = vadd.f32 %v2437, %v2498
    %v2527 = vadd.f32 %v2438, %v2499
    %v2528 = vadd.f32 %v2439, %v2500
    %v2529 = vadd.f32 %v2440, %v2501
    %v2530 = vadd.f32 %v2441, %v2502
    %v2531 = vadd.f32 %v2442, %v2503
    %v2532 = vadd.f32 %v2443, %v2504
    %v2533 = vadd.f32 %v2444, %v2505
    %v2534 = vadd.f32 %v2445, %v2506
    %v2535 = vadd.f32 %v2446, %v2507
    %v2536 = vadd.f32 %v2447, %v2508
    %v2537 = vadd.f32 %v2448, %v2509
    %v2538 = vadd.f32 %v2449, %v2510
    %v2539 = vadd.f32 %v2450, %v2511
    %v2540 = vadd.f32 %v2451, %v2512
    %v2541 = vadd.f32 %v2452, %v2513
    %v2542 = vadd.f32 %v2453, %v2514
    %v2543 = vld [vmem:[%s2456 + $0x8] sm:$0xff]
    %v2544 = vld [vmem:[%s2456 + $0x18] sm:$0xff]
    %v2545 = vld [vmem:[%s2456 + $0x28] sm:$0xff]
    %v2546 = vld [vmem:[%s2456 + $0x38] sm:$0xff]
    %v2547 = vld [vmem:[%s2456 + $0x48] sm:$0xff]
    %v2548 = vld [vmem:[%s2456 + $0x58] sm:$0xff]
    %v2549 = vld [vmem:[%s2456 + $0x68] sm:$0xff]
    %v2550 = vld [vmem:[%s2456 + $0x78] sm:$0xff]
    %v2551 = vld [vmem:[%s2456 + $0x88] sm:$0xff]
    %v2552 = vld [vmem:[%s2456 + $0x98] sm:$0xff]
    %v2553 = vld [vmem:[%s2456 + $0xa8] sm:$0xff]
    %v2554 = vld [vmem:[%s2456 + $0xb8] sm:$0xff]
    %v2555 = vld [vmem:[%s2456 + $0xc8] sm:$0xff]
    %v2556 = vld [vmem:[%s2456 + $0xd8] sm:$0xff]
    %v2557 = vld [vmem:[%s2456 + $0xe8] sm:$0xff]
    %v2558 = vld [vmem:[%s2456 + $0xf8] sm:$0xff]
    %v2559 = vld [vmem:[%s2456 + $0x108] sm:$0xff]
    %v2560 = vld [vmem:[%s2456 + $0x118] sm:$0xff]
    %v2561 = vld [vmem:[%s2456 + $0x128] sm:$0xff]
    %v2562 = vld [vmem:[%s2456 + $0x138] sm:$0xff]
    %v2563 = vld [vmem:[%s2456 + $0x148] sm:$0xff]
    %v2564 = vld [vmem:[%s2456 + $0x158] sm:$0xff]
    %v2565 = vld [vmem:[%s2456 + $0x168] sm:$0xff]
    %v2566 = vld [vmem:[%s2456 + $0x178] sm:$0xff]
    %v2567 = vld [vmem:[%s2456 + $0x188] sm:$0xff]
    %v2568 = vld [vmem:[%s2456 + $0x198] sm:$0xff]
    %v2569 = vld [vmem:[%s2456 + $0x1a8] sm:$0xff]
    %v2570 = vld [vmem:[%s2456 + $0x1b8] sm:$0xff]
    %s2571 = scalar_lea.vmem %s3, 56
    %v2572 = vld [vmem:[%s2571] sm:$0xff]
    %v2573 = vmul.f32 %v2543, %v2572
    %v2574 = vmul.f32 %v2544, %v2572
    %v2575 = vmul.f32 %v2545, %v2572
    %v2576 = vmul.f32 %v2546, %v2572
    %v2577 = vmul.f32 %v2547, %v2572
    %v2578 = vmul.f32 %v2548, %v2572
    %v2579 = vmul.f32 %v2549, %v2572
    %v2580 = vmul.f32 %v2550, %v2572
    %v2581 = vmul.f32 %v2551, %v2572
    %v2582 = vmul.f32 %v2552, %v2572
    %v2583 = vmul.f32 %v2553, %v2572
    %v2584 = vmul.f32 %v2554, %v2572
    %v2585 = vmul.f32 %v2555, %v2572
    %v2586 = vmul.f32 %v2556, %v2572
    %v2587 = vmul.f32 %v2557, %v2572
    %v2588 = vmul.f32 %v2558, %v2572
    %v2589 = vmul.f32 %v2559, %v2572
    %v2590 = vmul.f32 %v2560, %v2572
    %v2591 = vmul.f32 %v2561, %v2572
    %v2592 = vmul.f32 %v2562, %v2572
    %v2593 = vmul.f32 %v2563, %v2572
    %v2594 = vmul.f32 %v2564, %v2572
    %v2595 = vmul.f32 %v2565, %v2572
    %v2596 = vmul.f32 %v2566, %v2572
    %v2597 = vmul.f32 %v2567, %v2572
    %v2598 = vmul.f32 %v2568, %v2572
    %v2599 = vmul.f32 %v2569, %v2572
    %v2600 = vmul.f32 %v2570, %v2572
    %v2601 = vadd.f32 %v2515, %v2573
    %v2602 = vadd.f32 %v2516, %v2574
    %v2603 = vadd.f32 %v2517, %v2575
    %v2604 = vadd.f32 %v2518, %v2576
    %v2605 = vadd.f32 %v2519, %v2577
    %v2606 = vadd.f32 %v2520, %v2578
    %v2607 = vadd.f32 %v2521, %v2579
    %v2608 = vadd.f32 %v2522, %v2580
    %v2609 = vadd.f32 %v2523, %v2581
    %v2610 = vadd.f32 %v2524, %v2582
    %v2611 = vadd.f32 %v2525, %v2583
    %v2612 = vadd.f32 %v2526, %v2584
    %v2613 = vadd.f32 %v2527, %v2585
    %v2614 = vadd.f32 %v2528, %v2586
    %v2615 = vadd.f32 %v2529, %v2587
    %v2616 = vadd.f32 %v2530, %v2588
    %v2617 = vadd.f32 %v2531, %v2589
    %v2618 = vadd.f32 %v2532, %v2590
    %v2619 = vadd.f32 %v2533, %v2591
    %v2620 = vadd.f32 %v2534, %v2592
    %v2621 = vadd.f32 %v2535, %v2593
    %v2622 = vadd.f32 %v2536, %v2594
    %v2623 = vadd.f32 %v2537, %v2595
    %v2624 = vadd.f32 %v2538, %v2596
    %v2625 = vadd.f32 %v2539, %v2597
    %v2626 = vadd.f32 %v2540, %v2598
    %v2627 = vadd.f32 %v2541, %v2599
    %v2628 = vadd.f32 %v2542, %v2600
    %s2629 = sadd.s32 16, %s2455
    %s2630 = scalar_lea.vmem [#allocation2], %s2629
    %v2631 = vld [vmem:[%s2630] sm:$0xff]
    %v2632 = vld [vmem:[%s2630 + $0x10] sm:$0xff]
    %v2633 = vld [vmem:[%s2630 + $0x20] sm:$0xff]
    %v2634 = vld [vmem:[%s2630 + $0x30] sm:$0xff]
    %v2635 = vld [vmem:[%s2630 + $0x40] sm:$0xff]
    %v2636 = vld [vmem:[%s2630 + $0x50] sm:$0xff]
    %v2637 = vld [vmem:[%s2630 + $0x60] sm:$0xff]
    %v2638 = vld [vmem:[%s2630 + $0x70] sm:$0xff]
    %v2639 = vld [vmem:[%s2630 + $0x80] sm:$0xff]
    %v2640 = vld [vmem:[%s2630 + $0x90] sm:$0xff]
    %v2641 = vld [vmem:[%s2630 + $0xa0] sm:$0xff]
    %v2642 = vld [vmem:[%s2630 + $0xb0] sm:$0xff]
    %v2643 = vld [vmem:[%s2630 + $0xc0] sm:$0xff]
    %v2644 = vld [vmem:[%s2630 + $0xd0] sm:$0xff]
    %v2645 = vld [vmem:[%s2630 + $0xe0] sm:$0xff]
    %v2646 = vld [vmem:[%s2630 + $0xf0] sm:$0xff]
    %v2647 = vld [vmem:[%s2630 + $0x100] sm:$0xff]
    %v2648 = vld [vmem:[%s2630 + $0x110] sm:$0xff]
    %v2649 = vld [vmem:[%s2630 + $0x120] sm:$0xff]
    %v2650 = vld [vmem:[%s2630 + $0x130] sm:$0xff]
    %v2651 = vld [vmem:[%s2630 + $0x140] sm:$0xff]
    %v2652 = vld [vmem:[%s2630 + $0x150] sm:$0xff]
    %v2653 = vld [vmem:[%s2630 + $0x160] sm:$0xff]
    %v2654 = vld [vmem:[%s2630 + $0x170] sm:$0xff]
    %v2655 = vld [vmem:[%s2630 + $0x180] sm:$0xff]
    %v2656 = vld [vmem:[%s2630 + $0x190] sm:$0xff]
    %v2657 = vld [vmem:[%s2630 + $0x1a0] sm:$0xff]
    %v2658 = vld [vmem:[%s2630 + $0x1b0] sm:$0xff]
    %s2659 = scalar_lea.vmem %s3, 64
    %v2660 = vld [vmem:[%s2659] sm:$0xff]
    %v2661 = vmul.f32 %v2631, %v2660
    %v2662 = vmul.f32 %v2632, %v2660
    %v2663 = vmul.f32 %v2633, %v2660
    %v2664 = vmul.f32 %v2634, %v2660
    %v2665 = vmul.f32 %v2635, %v2660
    %v2666 = vmul.f32 %v2636, %v2660
    %v2667 = vmul.f32 %v2637, %v2660
    %v2668 = vmul.f32 %v2638, %v2660
    %v2669 = vmul.f32 %v2639, %v2660
    %v2670 = vmul.f32 %v2640, %v2660
    %v2671 = vmul.f32 %v2641, %v2660
    %v2672 = vmul.f32 %v2642, %v2660
    %v2673 = vmul.f32 %v2643, %v2660
    %v2674 = vmul.f32 %v2644, %v2660
    %v2675 = vmul.f32 %v2645, %v2660
    %v2676 = vmul.f32 %v2646, %v2660
    %v2677 = vmul.f32 %v2647, %v2660
    %v2678 = vmul.f32 %v2648, %v2660
    %v2679 = vmul.f32 %v2649, %v2660
    %v2680 = vmul.f32 %v2650, %v2660
    %v2681 = vmul.f32 %v2651, %v2660
    %v2682 = vmul.f32 %v2652, %v2660
    %v2683 = vmul.f32 %v2653, %v2660
    %v2684 = vmul.f32 %v2654, %v2660
    %v2685 = vmul.f32 %v2655, %v2660
    %v2686 = vmul.f32 %v2656, %v2660
    %v2687 = vmul.f32 %v2657, %v2660
    %v2688 = vmul.f32 %v2658, %v2660
    %v2689 = vadd.f32 %v2601, %v2661
    %v2690 = vadd.f32 %v2602, %v2662
    %v2691 = vadd.f32 %v2603, %v2663
    %v2692 = vadd.f32 %v2604, %v2664
    %v2693 = vadd.f32 %v2605, %v2665
    %v2694 = vadd.f32 %v2606, %v2666
    %v2695 = vadd.f32 %v2607, %v2667
    %v2696 = vadd.f32 %v2608, %v2668
    %v2697 = vadd.f32 %v2609, %v2669
    %v2698 = vadd.f32 %v2610, %v2670
    %v2699 = vadd.f32 %v2611, %v2671
    %v2700 = vadd.f32 %v2612, %v2672
    %v2701 = vadd.f32 %v2613, %v2673
    %v2702 = vadd.f32 %v2614, %v2674
    %v2703 = vadd.f32 %v2615, %v2675
    %v2704 = vadd.f32 %v2616, %v2676
    %v2705 = vadd.f32 %v2617, %v2677
    %v2706 = vadd.f32 %v2618, %v2678
    %v2707 = vadd.f32 %v2619, %v2679
    %v2708 = vadd.f32 %v2620, %v2680
    %v2709 = vadd.f32 %v2621, %v2681
    %v2710 = vadd.f32 %v2622, %v2682
    %v2711 = vadd.f32 %v2623, %v2683
    %v2712 = vadd.f32 %v2624, %v2684
    %v2713 = vadd.f32 %v2625, %v2685
    %v2714 = vadd.f32 %v2626, %v2686
    %v2715 = vadd.f32 %v2627, %v2687
    %v2716 = vadd.f32 %v2628, %v2688
    %v2717 = vld [vmem:[%s2630 + $0x8] sm:$0xff]
    %v2718 = vld [vmem:[%s2630 + $0x18] sm:$0xff]
    %v2719 = vld [vmem:[%s2630 + $0x28] sm:$0xff]
    %v2720 = vld [vmem:[%s2630 + $0x38] sm:$0xff]
    %v2721 = vld [vmem:[%s2630 + $0x48] sm:$0xff]
    %v2722 = vld [vmem:[%s2630 + $0x58] sm:$0xff]
    %v2723 = vld [vmem:[%s2630 + $0x68] sm:$0xff]
    %v2724 = vld [vmem:[%s2630 + $0x78] sm:$0xff]
    %v2725 = vld [vmem:[%s2630 + $0x88] sm:$0xff]
    %v2726 = vld [vmem:[%s2630 + $0x98] sm:$0xff]
    %v2727 = vld [vmem:[%s2630 + $0xa8] sm:$0xff]
    %v2728 = vld [vmem:[%s2630 + $0xb8] sm:$0xff]
    %v2729 = vld [vmem:[%s2630 + $0xc8] sm:$0xff]
    %v2730 = vld [vmem:[%s2630 + $0xd8] sm:$0xff]
    %v2731 = vld [vmem:[%s2630 + $0xe8] sm:$0xff]
    %v2732 = vld [vmem:[%s2630 + $0xf8] sm:$0xff]
    %v2733 = vld [vmem:[%s2630 + $0x108] sm:$0xff]
    %v2734 = vld [vmem:[%s2630 + $0x118] sm:$0xff]
    %v2735 = vld [vmem:[%s2630 + $0x128] sm:$0xff]
    %v2736 = vld [vmem:[%s2630 + $0x138] sm:$0xff]
    %v2737 = vld [vmem:[%s2630 + $0x148] sm:$0xff]
    %v2738 = vld [vmem:[%s2630 + $0x158] sm:$0xff]
    %v2739 = vld [vmem:[%s2630 + $0x168] sm:$0xff]
    %v2740 = vld [vmem:[%s2630 + $0x178] sm:$0xff]
    %v2741 = vld [vmem:[%s2630 + $0x188] sm:$0xff]
    %v2742 = vld [vmem:[%s2630 + $0x198] sm:$0xff]
    %v2743 = vld [vmem:[%s2630 + $0x1a8] sm:$0xff]
    %v2744 = vld [vmem:[%s2630 + $0x1b8] sm:$0xff]
    %s2745 = scalar_lea.vmem %s3, 72
    %v2746 = vld [vmem:[%s2745] sm:$0xff]
    %v2747 = vmul.f32 %v2717, %v2746
    %v2748 = vmul.f32 %v2718, %v2746
    %v2749 = vmul.f32 %v2719, %v2746
    %v2750 = vmul.f32 %v2720, %v2746
    %v2751 = vmul.f32 %v2721, %v2746
    %v2752 = vmul.f32 %v2722, %v2746
    %v2753 = vmul.f32 %v2723, %v2746
    %v2754 = vmul.f32 %v2724, %v2746
    %v2755 = vmul.f32 %v2725, %v2746
    %v2756 = vmul.f32 %v2726, %v2746
    %v2757 = vmul.f32 %v2727, %v2746
    %v2758 = vmul.f32 %v2728, %v2746
    %v2759 = vmul.f32 %v2729, %v2746
    %v2760 = vmul.f32 %v2730, %v2746
    %v2761 = vmul.f32 %v2731, %v2746
    %v2762 = vmul.f32 %v2732, %v2746
    %v2763 = vmul.f32 %v2733, %v2746
    %v2764 = vmul.f32 %v2734, %v2746
    %v2765 = vmul.f32 %v2735, %v2746
    %v2766 = vmul.f32 %v2736, %v2746
    %v2767 = vmul.f32 %v2737, %v2746
    %v2768 = vmul.f32 %v2738, %v2746
    %v2769 = vmul.f32 %v2739, %v2746
    %v2770 = vmul.f32 %v2740, %v2746
    %v2771 = vmul.f32 %v2741, %v2746
    %v2772 = vmul.f32 %v2742, %v2746
    %v2773 = vmul.f32 %v2743, %v2746
    %v2774 = vmul.f32 %v2744, %v2746
    %v2775 = vadd.f32 %v2689, %v2747
    %v2776 = vadd.f32 %v2690, %v2748
    %v2777 = vadd.f32 %v2691, %v2749
    %v2778 = vadd.f32 %v2692, %v2750
    %v2779 = vadd.f32 %v2693, %v2751
    %v2780 = vadd.f32 %v2694, %v2752
    %v2781 = vadd.f32 %v2695, %v2753
    %v2782 = vadd.f32 %v2696, %v2754
    %v2783 = vadd.f32 %v2697, %v2755
    %v2784 = vadd.f32 %v2698, %v2756
    %v2785 = vadd.f32 %v2699, %v2757
    %v2786 = vadd.f32 %v2700, %v2758
    %v2787 = vadd.f32 %v2701, %v2759
    %v2788 = vadd.f32 %v2702, %v2760
    %v2789 = vadd.f32 %v2703, %v2761
    %v2790 = vadd.f32 %v2704, %v2762
    %v2791 = vadd.f32 %v2705, %v2763
    %v2792 = vadd.f32 %v2706, %v2764
    %v2793 = vadd.f32 %v2707, %v2765
    %v2794 = vadd.f32 %v2708, %v2766
    %v2795 = vadd.f32 %v2709, %v2767
    %v2796 = vadd.f32 %v2710, %v2768
    %v2797 = vadd.f32 %v2711, %v2769
    %v2798 = vadd.f32 %v2712, %v2770
    %v2799 = vadd.f32 %v2713, %v2771
    %v2800 = vadd.f32 %v2714, %v2772
    %v2801 = vadd.f32 %v2715, %v2773
    %v2802 = vadd.f32 %v2716, %v2774
    %s2803 = sadd.s32 32, %s2455
    %s2804 = scalar_lea.vmem [#allocation2], %s2803
    %v2805 = vld [vmem:[%s2804] sm:$0xff]
    %v2806 = vld [vmem:[%s2804 + $0x10] sm:$0xff]
    %v2807 = vld [vmem:[%s2804 + $0x20] sm:$0xff]
    %v2808 = vld [vmem:[%s2804 + $0x30] sm:$0xff]
    %v2809 = vld [vmem:[%s2804 + $0x40] sm:$0xff]
    %v2810 = vld [vmem:[%s2804 + $0x50] sm:$0xff]
    %v2811 = vld [vmem:[%s2804 + $0x60] sm:$0xff]
    %v2812 = vld [vmem:[%s2804 + $0x70] sm:$0xff]
    %v2813 = vld [vmem:[%s2804 + $0x80] sm:$0xff]
    %v2814 = vld [vmem:[%s2804 + $0x90] sm:$0xff]
    %v2815 = vld [vmem:[%s2804 + $0xa0] sm:$0xff]
    %v2816 = vld [vmem:[%s2804 + $0xb0] sm:$0xff]
    %v2817 = vld [vmem:[%s2804 + $0xc0] sm:$0xff]
    %v2818 = vld [vmem:[%s2804 + $0xd0] sm:$0xff]
    %v2819 = vld [vmem:[%s2804 + $0xe0] sm:$0xff]
    %v2820 = vld [vmem:[%s2804 + $0xf0] sm:$0xff]
    %v2821 = vld [vmem:[%s2804 + $0x100] sm:$0xff]
    %v2822 = vld [vmem:[%s2804 + $0x110] sm:$0xff]
    %v2823 = vld [vmem:[%s2804 + $0x120] sm:$0xff]
    %v2824 = vld [vmem:[%s2804 + $0x130] sm:$0xff]
    %v2825 = vld [vmem:[%s2804 + $0x140] sm:$0xff]
    %v2826 = vld [vmem:[%s2804 + $0x150] sm:$0xff]
    %v2827 = vld [vmem:[%s2804 + $0x160] sm:$0xff]
    %v2828 = vld [vmem:[%s2804 + $0x170] sm:$0xff]
    %v2829 = vld [vmem:[%s2804 + $0x180] sm:$0xff]
    %v2830 = vld [vmem:[%s2804 + $0x190] sm:$0xff]
    %v2831 = vld [vmem:[%s2804 + $0x1a0] sm:$0xff]
    %v2832 = vld [vmem:[%s2804 + $0x1b0] sm:$0xff]
    %s2833 = scalar_lea.vmem %s3, 80
    %v2834 = vld [vmem:[%s2833] sm:$0xff]
    %v2835 = vmul.f32 %v2805, %v2834
    %v2836 = vmul.f32 %v2806, %v2834
    %v2837 = vmul.f32 %v2807, %v2834
    %v2838 = vmul.f32 %v2808, %v2834
    %v2839 = vmul.f32 %v2809, %v2834
    %v2840 = vmul.f32 %v2810, %v2834
    %v2841 = vmul.f32 %v2811, %v2834
    %v2842 = vmul.f32 %v2812, %v2834
    %v2843 = vmul.f32 %v2813, %v2834
    %v2844 = vmul.f32 %v2814, %v2834
    %v2845 = vmul.f32 %v2815, %v2834
    %v2846 = vmul.f32 %v2816, %v2834
    %v2847 = vmul.f32 %v2817, %v2834
    %v2848 = vmul.f32 %v2818, %v2834
    %v2849 = vmul.f32 %v2819, %v2834
    %v2850 = vmul.f32 %v2820, %v2834
    %v2851 = vmul.f32 %v2821, %v2834
    %v2852 = vmul.f32 %v2822, %v2834
    %v2853 = vmul.f32 %v2823, %v2834
    %v2854 = vmul.f32 %v2824, %v2834
    %v2855 = vmul.f32 %v2825, %v2834
    %v2856 = vmul.f32 %v2826, %v2834
    %v2857 = vmul.f32 %v2827, %v2834
    %v2858 = vmul.f32 %v2828, %v2834
    %v2859 = vmul.f32 %v2829, %v2834
    %v2860 = vmul.f32 %v2830, %v2834
    %v2861 = vmul.f32 %v2831, %v2834
    %v2862 = vmul.f32 %v2832, %v2834
    %v2863 = vadd.f32 %v2775, %v2835
    %v2864 = vadd.f32 %v2776, %v2836
    %v2865 = vadd.f32 %v2777, %v2837
    %v2866 = vadd.f32 %v2778, %v2838
    %v2867 = vadd.f32 %v2779, %v2839
    %v2868 = vadd.f32 %v2780, %v2840
    %v2869 = vadd.f32 %v2781, %v2841
    %v2870 = vadd.f32 %v2782, %v2842
    %v2871 = vadd.f32 %v2783, %v2843
    %v2872 = vadd.f32 %v2784, %v2844
    %v2873 = vadd.f32 %v2785, %v2845
    %v2874 = vadd.f32 %v2786, %v2846
    %v2875 = vadd.f32 %v2787, %v2847
    %v2876 = vadd.f32 %v2788, %v2848
    %v2877 = vadd.f32 %v2789, %v2849
    %v2878 = vadd.f32 %v2790, %v2850
    %v2879 = vadd.f32 %v2791, %v2851
    %v2880 = vadd.f32 %v2792, %v2852
    %v2881 = vadd.f32 %v2793, %v2853
    %v2882 = vadd.f32 %v2794, %v2854
    %v2883 = vadd.f32 %v2795, %v2855
    %v2884 = vadd.f32 %v2796, %v2856
    %v2885 = vadd.f32 %v2797, %v2857
    %v2886 = vadd.f32 %v2798, %v2858
    %v2887 = vadd.f32 %v2799, %v2859
    %v2888 = vadd.f32 %v2800, %v2860
    %v2889 = vadd.f32 %v2801, %v2861
    %v2890 = vadd.f32 %v2802, %v2862
    %v2891 = vld [vmem:[%s2804 + $0x8] sm:$0xff]
    %v2892 = vld [vmem:[%s2804 + $0x18] sm:$0xff]
    %v2893 = vld [vmem:[%s2804 + $0x28] sm:$0xff]
    %v2894 = vld [vmem:[%s2804 + $0x38] sm:$0xff]
    %v2895 = vld [vmem:[%s2804 + $0x48] sm:$0xff]
    %v2896 = vld [vmem:[%s2804 + $0x58] sm:$0xff]
    %v2897 = vld [vmem:[%s2804 + $0x68] sm:$0xff]
    %v2898 = vld [vmem:[%s2804 + $0x78] sm:$0xff]
    %v2899 = vld [vmem:[%s2804 + $0x88] sm:$0xff]
    %v2900 = vld [vmem:[%s2804 + $0x98] sm:$0xff]
    %v2901 = vld [vmem:[%s2804 + $0xa8] sm:$0xff]
    %v2902 = vld [vmem:[%s2804 + $0xb8] sm:$0xff]
    %v2903 = vld [vmem:[%s2804 + $0xc8] sm:$0xff]
    %v2904 = vld [vmem:[%s2804 + $0xd8] sm:$0xff]
    %v2905 = vld [vmem:[%s2804 + $0xe8] sm:$0xff]
    %v2906 = vld [vmem:[%s2804 + $0xf8] sm:$0xff]
    %v2907 = vld [vmem:[%s2804 + $0x108] sm:$0xff]
    %v2908 = vld [vmem:[%s2804 + $0x118] sm:$0xff]
    %v2909 = vld [vmem:[%s2804 + $0x128] sm:$0xff]
    %v2910 = vld [vmem:[%s2804 + $0x138] sm:$0xff]
    %v2911 = vld [vmem:[%s2804 + $0x148] sm:$0xff]
    %v2912 = vld [vmem:[%s2804 + $0x158] sm:$0xff]
    %v2913 = vld [vmem:[%s2804 + $0x168] sm:$0xff]
    %v2914 = vld [vmem:[%s2804 + $0x178] sm:$0xff]
    %v2915 = vld [vmem:[%s2804 + $0x188] sm:$0xff]
    %v2916 = vld [vmem:[%s2804 + $0x198] sm:$0xff]
    %v2917 = vld [vmem:[%s2804 + $0x1a8] sm:$0xff]
    %v2918 = vld [vmem:[%s2804 + $0x1b8] sm:$0xff]
    %s2919 = scalar_lea.vmem %s3, 88
    %v2920 = vld [vmem:[%s2919] sm:$0xff]
    %v2921 = vmul.f32 %v2891, %v2920
    %v2922 = vmul.f32 %v2892, %v2920
    %v2923 = vmul.f32 %v2893, %v2920
    %v2924 = vmul.f32 %v2894, %v2920
    %v2925 = vmul.f32 %v2895, %v2920
    %v2926 = vmul.f32 %v2896, %v2920
    %v2927 = vmul.f32 %v2897, %v2920
    %v2928 = vmul.f32 %v2898, %v2920
    %v2929 = vmul.f32 %v2899, %v2920
    %v2930 = vmul.f32 %v2900, %v2920
    %v2931 = vmul.f32 %v2901, %v2920
    %v2932 = vmul.f32 %v2902, %v2920
    %v2933 = vmul.f32 %v2903, %v2920
    %v2934 = vmul.f32 %v2904, %v2920
    %v2935 = vmul.f32 %v2905, %v2920
    %v2936 = vmul.f32 %v2906, %v2920
    %v2937 = vmul.f32 %v2907, %v2920
    %v2938 = vmul.f32 %v2908, %v2920
    %v2939 = vmul.f32 %v2909, %v2920
    %v2940 = vmul.f32 %v2910, %v2920
    %v2941 = vmul.f32 %v2911, %v2920
    %v2942 = vmul.f32 %v2912, %v2920
    %v2943 = vmul.f32 %v2913, %v2920
    %v2944 = vmul.f32 %v2914, %v2920
    %v2945 = vmul.f32 %v2915, %v2920
    %v2946 = vmul.f32 %v2916, %v2920
    %v2947 = vmul.f32 %v2917, %v2920
    %v2948 = vmul.f32 %v2918, %v2920
    %v2949 = vadd.f32 %v2863, %v2921
    %v2950 = vadd.f32 %v2864, %v2922
    %v2951 = vadd.f32 %v2865, %v2923
    %v2952 = vadd.f32 %v2866, %v2924
    %v2953 = vadd.f32 %v2867, %v2925
    %v2954 = vadd.f32 %v2868, %v2926
    %v2955 = vadd.f32 %v2869, %v2927
    %v2956 = vadd.f32 %v2870, %v2928
    %v2957 = vadd.f32 %v2871, %v2929
    %v2958 = vadd.f32 %v2872, %v2930
    %v2959 = vadd.f32 %v2873, %v2931
    %v2960 = vadd.f32 %v2874, %v2932
    %v2961 = vadd.f32 %v2875, %v2933
    %v2962 = vadd.f32 %v2876, %v2934
    %v2963 = vadd.f32 %v2877, %v2935
    %v2964 = vadd.f32 %v2878, %v2936
    %v2965 = vadd.f32 %v2879, %v2937
    %v2966 = vadd.f32 %v2880, %v2938
    %v2967 = vadd.f32 %v2881, %v2939
    %v2968 = vadd.f32 %v2882, %v2940
    %v2969 = vadd.f32 %v2883, %v2941
    %v2970 = vadd.f32 %v2884, %v2942
    %v2971 = vadd.f32 %v2885, %v2943
    %v2972 = vadd.f32 %v2886, %v2944
    %v2973 = vadd.f32 %v2887, %v2945
    %v2974 = vadd.f32 %v2888, %v2946
    %v2975 = vadd.f32 %v2889, %v2947
    %v2976 = vadd.f32 %v2890, %v2948
    %s2977 = sadd.s32 %s1956, 2
    %s2978 = smul.u32 %s2977, 480
    %s2979 = scalar_lea.vmem [#allocation2], %s2978
    %v2980 = vld [vmem:[%s2979] sm:$0xff]
    %v2981 = vld [vmem:[%s2979 + $0x10] sm:$0xff]
    %v2982 = vld [vmem:[%s2979 + $0x20] sm:$0xff]
    %v2983 = vld [vmem:[%s2979 + $0x30] sm:$0xff]
    %v2984 = vld [vmem:[%s2979 + $0x40] sm:$0xff]
    %v2985 = vld [vmem:[%s2979 + $0x50] sm:$0xff]
    %v2986 = vld [vmem:[%s2979 + $0x60] sm:$0xff]
    %v2987 = vld [vmem:[%s2979 + $0x70] sm:$0xff]
    %v2988 = vld [vmem:[%s2979 + $0x80] sm:$0xff]
    %v2989 = vld [vmem:[%s2979 + $0x90] sm:$0xff]
    %v2990 = vld [vmem:[%s2979 + $0xa0] sm:$0xff]
    %v2991 = vld [vmem:[%s2979 + $0xb0] sm:$0xff]
    %v2992 = vld [vmem:[%s2979 + $0xc0] sm:$0xff]
    %v2993 = vld [vmem:[%s2979 + $0xd0] sm:$0xff]
    %v2994 = vld [vmem:[%s2979 + $0xe0] sm:$0xff]
    %v2995 = vld [vmem:[%s2979 + $0xf0] sm:$0xff]
    %v2996 = vld [vmem:[%s2979 + $0x100] sm:$0xff]
    %v2997 = vld [vmem:[%s2979 + $0x110] sm:$0xff]
    %v2998 = vld [vmem:[%s2979 + $0x120] sm:$0xff]
    %v2999 = vld [vmem:[%s2979 + $0x130] sm:$0xff]
    %v3000 = vld [vmem:[%s2979 + $0x140] sm:$0xff]
    %v3001 = vld [vmem:[%s2979 + $0x150] sm:$0xff]
    %v3002 = vld [vmem:[%s2979 + $0x160] sm:$0xff]
    %v3003 = vld [vmem:[%s2979 + $0x170] sm:$0xff]
    %v3004 = vld [vmem:[%s2979 + $0x180] sm:$0xff]
    %v3005 = vld [vmem:[%s2979 + $0x190] sm:$0xff]
    %v3006 = vld [vmem:[%s2979 + $0x1a0] sm:$0xff]
    %v3007 = vld [vmem:[%s2979 + $0x1b0] sm:$0xff]
    %s3008 = scalar_lea.vmem %s3, 96
    %v3009 = vld [vmem:[%s3008] sm:$0xff]
    %v3010 = vmul.f32 %v2980, %v3009
    %v3011 = vmul.f32 %v2981, %v3009
    %v3012 = vmul.f32 %v2982, %v3009
    %v3013 = vmul.f32 %v2983, %v3009
    %v3014 = vmul.f32 %v2984, %v3009
    %v3015 = vmul.f32 %v2985, %v3009
    %v3016 = vmul.f32 %v2986, %v3009
    %v3017 = vmul.f32 %v2987, %v3009
    %v3018 = vmul.f32 %v2988, %v3009
    %v3019 = vmul.f32 %v2989, %v3009
    %v3020 = vmul.f32 %v2990, %v3009
    %v3021 = vmul.f32 %v2991, %v3009
    %v3022 = vmul.f32 %v2992, %v3009
    %v3023 = vmul.f32 %v2993, %v3009
    %v3024 = vmul.f32 %v2994, %v3009
    %v3025 = vmul.f32 %v2995, %v3009
    %v3026 = vmul.f32 %v2996, %v3009
    %v3027 = vmul.f32 %v2997, %v3009
    %v3028 = vmul.f32 %v2998, %v3009
    %v3029 = vmul.f32 %v2999, %v3009
    %v3030 = vmul.f32 %v3000, %v3009
    %v3031 = vmul.f32 %v3001, %v3009
    %v3032 = vmul.f32 %v3002, %v3009
    %v3033 = vmul.f32 %v3003, %v3009
    %v3034 = vmul.f32 %v3004, %v3009
    %v3035 = vmul.f32 %v3005, %v3009
    %v3036 = vmul.f32 %v3006, %v3009
    %v3037 = vmul.f32 %v3007, %v3009
    %v3038 = vadd.f32 %v2949, %v3010
    %v3039 = vadd.f32 %v2950, %v3011
    %v3040 = vadd.f32 %v2951, %v3012
    %v3041 = vadd.f32 %v2952, %v3013
    %v3042 = vadd.f32 %v2953, %v3014
    %v3043 = vadd.f32 %v2954, %v3015
    %v3044 = vadd.f32 %v2955, %v3016
    %v3045 = vadd.f32 %v2956, %v3017
    %v3046 = vadd.f32 %v2957, %v3018
    %v3047 = vadd.f32 %v2958, %v3019
    %v3048 = vadd.f32 %v2959, %v3020
    %v3049 = vadd.f32 %v2960, %v3021
    %v3050 = vadd.f32 %v2961, %v3022
    %v3051 = vadd.f32 %v2962, %v3023
    %v3052 = vadd.f32 %v2963, %v3024
    %v3053 = vadd.f32 %v2964, %v3025
    %v3054 = vadd.f32 %v2965, %v3026
    %v3055 = vadd.f32 %v2966, %v3027
    %v3056 = vadd.f32 %v2967, %v3028
    %v3057 = vadd.f32 %v2968, %v3029
    %v3058 = vadd.f32 %v2969, %v3030
    %v3059 = vadd.f32 %v2970, %v3031
    %v3060 = vadd.f32 %v2971, %v3032
    %v3061 = vadd.f32 %v2972, %v3033
    %v3062 = vadd.f32 %v2973, %v3034
    %v3063 = vadd.f32 %v2974, %v3035
    %v3064 = vadd.f32 %v2975, %v3036
    %v3065 = vadd.f32 %v2976, %v3037
    %v3066 = vld [vmem:[%s2979 + $0x8] sm:$0xff]
    %v3067 = vld [vmem:[%s2979 + $0x18] sm:$0xff]
    %v3068 = vld [vmem:[%s2979 + $0x28] sm:$0xff]
    %v3069 = vld [vmem:[%s2979 + $0x38] sm:$0xff]
    %v3070 = vld [vmem:[%s2979 + $0x48] sm:$0xff]
    %v3071 = vld [vmem:[%s2979 + $0x58] sm:$0xff]
    %v3072 = vld [vmem:[%s2979 + $0x68] sm:$0xff]
    %v3073 = vld [vmem:[%s2979 + $0x78] sm:$0xff]
    %v3074 = vld [vmem:[%s2979 + $0x88] sm:$0xff]
    %v3075 = vld [vmem:[%s2979 + $0x98] sm:$0xff]
    %v3076 = vld [vmem:[%s2979 + $0xa8] sm:$0xff]
    %v3077 = vld [vmem:[%s2979 + $0xb8] sm:$0xff]
    %v3078 = vld [vmem:[%s2979 + $0xc8] sm:$0xff]
    %v3079 = vld [vmem:[%s2979 + $0xd8] sm:$0xff]
    %v3080 = vld [vmem:[%s2979 + $0xe8] sm:$0xff]
    %v3081 = vld [vmem:[%s2979 + $0xf8] sm:$0xff]
    %v3082 = vld [vmem:[%s2979 + $0x108] sm:$0xff]
    %v3083 = vld [vmem:[%s2979 + $0x118] sm:$0xff]
    %v3084 = vld [vmem:[%s2979 + $0x128] sm:$0xff]
    %v3085 = vld [vmem:[%s2979 + $0x138] sm:$0xff]
    %v3086 = vld [vmem:[%s2979 + $0x148] sm:$0xff]
    %v3087 = vld [vmem:[%s2979 + $0x158] sm:$0xff]
    %v3088 = vld [vmem:[%s2979 + $0x168] sm:$0xff]
    %v3089 = vld [vmem:[%s2979 + $0x178] sm:$0xff]
    %v3090 = vld [vmem:[%s2979 + $0x188] sm:$0xff]
    %v3091 = vld [vmem:[%s2979 + $0x198] sm:$0xff]
    %v3092 = vld [vmem:[%s2979 + $0x1a8] sm:$0xff]
    %v3093 = vld [vmem:[%s2979 + $0x1b8] sm:$0xff]
    %s3094 = scalar_lea.vmem %s3, 104
    %v3095 = vld [vmem:[%s3094] sm:$0xff]
    %v3096 = vmul.f32 %v3066, %v3095
    %v3097 = vmul.f32 %v3067, %v3095
    %v3098 = vmul.f32 %v3068, %v3095
    %v3099 = vmul.f32 %v3069, %v3095
    %v3100 = vmul.f32 %v3070, %v3095
    %v3101 = vmul.f32 %v3071, %v3095
    %v3102 = vmul.f32 %v3072, %v3095
    %v3103 = vmul.f32 %v3073, %v3095
    %v3104 = vmul.f32 %v3074, %v3095
    %v3105 = vmul.f32 %v3075, %v3095
    %v3106 = vmul.f32 %v3076, %v3095
    %v3107 = vmul.f32 %v3077, %v3095
    %v3108 = vmul.f32 %v3078, %v3095
    %v3109 = vmul.f32 %v3079, %v3095
    %v3110 = vmul.f32 %v3080, %v3095
    %v3111 = vmul.f32 %v3081, %v3095
    %v3112 = vmul.f32 %v3082, %v3095
    %v3113 = vmul.f32 %v3083, %v3095
    %v3114 = vmul.f32 %v3084, %v3095
    %v3115 = vmul.f32 %v3085, %v3095
    %v3116 = vmul.f32 %v3086, %v3095
    %v3117 = vmul.f32 %v3087, %v3095
    %v3118 = vmul.f32 %v3088, %v3095
    %v3119 = vmul.f32 %v3089, %v3095
    %v3120 = vmul.f32 %v3090, %v3095
    %v3121 = vmul.f32 %v3091, %v3095
    %v3122 = vmul.f32 %v3092, %v3095
    %v3123 = vmul.f32 %v3093, %v3095
    %v3124 = vadd.f32 %v3038, %v3096
    %v3125 = vadd.f32 %v3039, %v3097
    %v3126 = vadd.f32 %v3040, %v3098
    %v3127 = vadd.f32 %v3041, %v3099
    %v3128 = vadd.f32 %v3042, %v3100
    %v3129 = vadd.f32 %v3043, %v3101
    %v3130 = vadd.f32 %v3044, %v3102
    %v3131 = vadd.f32 %v3045, %v3103
    %v3132 = vadd.f32 %v3046, %v3104
    %v3133 = vadd.f32 %v3047, %v3105
    %v3134 = vadd.f32 %v3048, %v3106
    %v3135 = vadd.f32 %v3049, %v3107
    %v3136 = vadd.f32 %v3050, %v3108
    %v3137 = vadd.f32 %v3051, %v3109
    %v3138 = vadd.f32 %v3052, %v3110
    %v3139 = vadd.f32 %v3053, %v3111
    %v3140 = vadd.f32 %v3054, %v3112
    %v3141 = vadd.f32 %v3055, %v3113
    %v3142 = vadd.f32 %v3056, %v3114
    %v3143 = vadd.f32 %v3057, %v3115
    %v3144 = vadd.f32 %v3058, %v3116
    %v3145 = vadd.f32 %v3059, %v3117
    %v3146 = vadd.f32 %v3060, %v3118
    %v3147 = vadd.f32 %v3061, %v3119
    %v3148 = vadd.f32 %v3062, %v3120
    %v3149 = vadd.f32 %v3063, %v3121
    %v3150 = vadd.f32 %v3064, %v3122
    %v3151 = vadd.f32 %v3065, %v3123
    %s3152 = sadd.s32 16, %s2978
    %s3153 = scalar_lea.vmem [#allocation2], %s3152
    %v3154 = vld [vmem:[%s3153] sm:$0xff]
    %v3155 = vld [vmem:[%s3153 + $0x10] sm:$0xff]
    %v3156 = vld [vmem:[%s3153 + $0x20] sm:$0xff]
    %v3157 = vld [vmem:[%s3153 + $0x30] sm:$0xff]
    %v3158 = vld [vmem:[%s3153 + $0x40] sm:$0xff]
    %v3159 = vld [vmem:[%s3153 + $0x50] sm:$0xff]
    %v3160 = vld [vmem:[%s3153 + $0x60] sm:$0xff]
    %v3161 = vld [vmem:[%s3153 + $0x70] sm:$0xff]
    %v3162 = vld [vmem:[%s3153 + $0x80] sm:$0xff]
    %v3163 = vld [vmem:[%s3153 + $0x90] sm:$0xff]
    %v3164 = vld [vmem:[%s3153 + $0xa0] sm:$0xff]
    %v3165 = vld [vmem:[%s3153 + $0xb0] sm:$0xff]
    %v3166 = vld [vmem:[%s3153 + $0xc0] sm:$0xff]
    %v3167 = vld [vmem:[%s3153 + $0xd0] sm:$0xff]
    %v3168 = vld [vmem:[%s3153 + $0xe0] sm:$0xff]
    %v3169 = vld [vmem:[%s3153 + $0xf0] sm:$0xff]
    %v3170 = vld [vmem:[%s3153 + $0x100] sm:$0xff]
    %v3171 = vld [vmem:[%s3153 + $0x110] sm:$0xff]
    %v3172 = vld [vmem:[%s3153 + $0x120] sm:$0xff]
    %v3173 = vld [vmem:[%s3153 + $0x130] sm:$0xff]
    %v3174 = vld [vmem:[%s3153 + $0x140] sm:$0xff]
    %v3175 = vld [vmem:[%s3153 + $0x150] sm:$0xff]
    %v3176 = vld [vmem:[%s3153 + $0x160] sm:$0xff]
    %v3177 = vld [vmem:[%s3153 + $0x170] sm:$0xff]
    %v3178 = vld [vmem:[%s3153 + $0x180] sm:$0xff]
    %v3179 = vld [vmem:[%s3153 + $0x190] sm:$0xff]
    %v3180 = vld [vmem:[%s3153 + $0x1a0] sm:$0xff]
    %v3181 = vld [vmem:[%s3153 + $0x1b0] sm:$0xff]
    %s3182 = scalar_lea.vmem %s3, 112
    %v3183 = vld [vmem:[%s3182] sm:$0xff]
    %v3184 = vmul.f32 %v3154, %v3183
    %v3185 = vmul.f32 %v3155, %v3183
    %v3186 = vmul.f32 %v3156, %v3183
    %v3187 = vmul.f32 %v3157, %v3183
    %v3188 = vmul.f32 %v3158, %v3183
    %v3189 = vmul.f32 %v3159, %v3183
    %v3190 = vmul.f32 %v3160, %v3183
    %v3191 = vmul.f32 %v3161, %v3183
    %v3192 = vmul.f32 %v3162, %v3183
    %v3193 = vmul.f32 %v3163, %v3183
    %v3194 = vmul.f32 %v3164, %v3183
    %v3195 = vmul.f32 %v3165, %v3183
    %v3196 = vmul.f32 %v3166, %v3183
    %v3197 = vmul.f32 %v3167, %v3183
    %v3198 = vmul.f32 %v3168, %v3183
    %v3199 = vmul.f32 %v3169, %v3183
    %v3200 = vmul.f32 %v3170, %v3183
    %v3201 = vmul.f32 %v3171, %v3183
    %v3202 = vmul.f32 %v3172, %v3183
    %v3203 = vmul.f32 %v3173, %v3183
    %v3204 = vmul.f32 %v3174, %v3183
    %v3205 = vmul.f32 %v3175, %v3183
    %v3206 = vmul.f32 %v3176, %v3183
    %v3207 = vmul.f32 %v3177, %v3183
    %v3208 = vmul.f32 %v3178, %v3183
    %v3209 = vmul.f32 %v3179, %v3183
    %v3210 = vmul.f32 %v3180, %v3183
    %v3211 = vmul.f32 %v3181, %v3183
    %v3212 = vadd.f32 %v3124, %v3184
    %v3213 = vadd.f32 %v3125, %v3185
    %v3214 = vadd.f32 %v3126, %v3186
    %v3215 = vadd.f32 %v3127, %v3187
    %v3216 = vadd.f32 %v3128, %v3188
    %v3217 = vadd.f32 %v3129, %v3189
    %v3218 = vadd.f32 %v3130, %v3190
    %v3219 = vadd.f32 %v3131, %v3191
    %v3220 = vadd.f32 %v3132, %v3192
    %v3221 = vadd.f32 %v3133, %v3193
    %v3222 = vadd.f32 %v3134, %v3194
    %v3223 = vadd.f32 %v3135, %v3195
    %v3224 = vadd.f32 %v3136, %v3196
    %v3225 = vadd.f32 %v3137, %v3197
    %v3226 = vadd.f32 %v3138, %v3198
    %v3227 = vadd.f32 %v3139, %v3199
    %v3228 = vadd.f32 %v3140, %v3200
    %v3229 = vadd.f32 %v3141, %v3201
    %v3230 = vadd.f32 %v3142, %v3202
    %v3231 = vadd.f32 %v3143, %v3203
    %v3232 = vadd.f32 %v3144, %v3204
    %v3233 = vadd.f32 %v3145, %v3205
    %v3234 = vadd.f32 %v3146, %v3206
    %v3235 = vadd.f32 %v3147, %v3207
    %v3236 = vadd.f32 %v3148, %v3208
    %v3237 = vadd.f32 %v3149, %v3209
    %v3238 = vadd.f32 %v3150, %v3210
    %v3239 = vadd.f32 %v3151, %v3211
    %v3240 = vld [vmem:[%s3153 + $0x8] sm:$0xff]
    %v3241 = vld [vmem:[%s3153 + $0x18] sm:$0xff]
    %v3242 = vld [vmem:[%s3153 + $0x28] sm:$0xff]
    %v3243 = vld [vmem:[%s3153 + $0x38] sm:$0xff]
    %v3244 = vld [vmem:[%s3153 + $0x48] sm:$0xff]
    %v3245 = vld [vmem:[%s3153 + $0x58] sm:$0xff]
    %v3246 = vld [vmem:[%s3153 + $0x68] sm:$0xff]
    %v3247 = vld [vmem:[%s3153 + $0x78] sm:$0xff]
    %v3248 = vld [vmem:[%s3153 + $0x88] sm:$0xff]
    %v3249 = vld [vmem:[%s3153 + $0x98] sm:$0xff]
    %v3250 = vld [vmem:[%s3153 + $0xa8] sm:$0xff]
    %v3251 = vld [vmem:[%s3153 + $0xb8] sm:$0xff]
    %v3252 = vld [vmem:[%s3153 + $0xc8] sm:$0xff]
    %v3253 = vld [vmem:[%s3153 + $0xd8] sm:$0xff]
    %v3254 = vld [vmem:[%s3153 + $0xe8] sm:$0xff]
    %v3255 = vld [vmem:[%s3153 + $0xf8] sm:$0xff]
    %v3256 = vld [vmem:[%s3153 + $0x108] sm:$0xff]
    %v3257 = vld [vmem:[%s3153 + $0x118] sm:$0xff]
    %v3258 = vld [vmem:[%s3153 + $0x128] sm:$0xff]
    %v3259 = vld [vmem:[%s3153 + $0x138] sm:$0xff]
    %v3260 = vld [vmem:[%s3153 + $0x148] sm:$0xff]
    %v3261 = vld [vmem:[%s3153 + $0x158] sm:$0xff]
    %v3262 = vld [vmem:[%s3153 + $0x168] sm:$0xff]
    %v3263 = vld [vmem:[%s3153 + $0x178] sm:$0xff]
    %v3264 = vld [vmem:[%s3153 + $0x188] sm:$0xff]
    %v3265 = vld [vmem:[%s3153 + $0x198] sm:$0xff]
    %v3266 = vld [vmem:[%s3153 + $0x1a8] sm:$0xff]
    %v3267 = vld [vmem:[%s3153 + $0x1b8] sm:$0xff]
    %s3268 = scalar_lea.vmem %s3, 120
    %v3269 = vld [vmem:[%s3268] sm:$0xff]
    %v3270 = vmul.f32 %v3240, %v3269
    %v3271 = vmul.f32 %v3241, %v3269
    %v3272 = vmul.f32 %v3242, %v3269
    %v3273 = vmul.f32 %v3243, %v3269
    %v3274 = vmul.f32 %v3244, %v3269
    %v3275 = vmul.f32 %v3245, %v3269
    %v3276 = vmul.f32 %v3246, %v3269
    %v3277 = vmul.f32 %v3247, %v3269
    %v3278 = vmul.f32 %v3248, %v3269
    %v3279 = vmul.f32 %v3249, %v3269
    %v3280 = vmul.f32 %v3250, %v3269
    %v3281 = vmul.f32 %v3251, %v3269
    %v3282 = vmul.f32 %v3252, %v3269
    %v3283 = vmul.f32 %v3253, %v3269
    %v3284 = vmul.f32 %v3254, %v3269
    %v3285 = vmul.f32 %v3255, %v3269
    %v3286 = vmul.f32 %v3256, %v3269
    %v3287 = vmul.f32 %v3257, %v3269
    %v3288 = vmul.f32 %v3258, %v3269
    %v3289 = vmul.f32 %v3259, %v3269
    %v3290 = vmul.f32 %v3260, %v3269
    %v3291 = vmul.f32 %v3261, %v3269
    %v3292 = vmul.f32 %v3262, %v3269
    %v3293 = vmul.f32 %v3263, %v3269
    %v3294 = vmul.f32 %v3264, %v3269
    %v3295 = vmul.f32 %v3265, %v3269
    %v3296 = vmul.f32 %v3266, %v3269
    %v3297 = vmul.f32 %v3267, %v3269
    %v3298 = vadd.f32 %v3212, %v3270
    %v3299 = vadd.f32 %v3213, %v3271
    %v3300 = vadd.f32 %v3214, %v3272
    %v3301 = vadd.f32 %v3215, %v3273
    %v3302 = vadd.f32 %v3216, %v3274
    %v3303 = vadd.f32 %v3217, %v3275
    %v3304 = vadd.f32 %v3218, %v3276
    %v3305 = vadd.f32 %v3219, %v3277
    %v3306 = vadd.f32 %v3220, %v3278
    %v3307 = vadd.f32 %v3221, %v3279
    %v3308 = vadd.f32 %v3222, %v3280
    %v3309 = vadd.f32 %v3223, %v3281
    %v3310 = vadd.f32 %v3224, %v3282
    %v3311 = vadd.f32 %v3225, %v3283
    %v3312 = vadd.f32 %v3226, %v3284
    %v3313 = vadd.f32 %v3227, %v3285
    %v3314 = vadd.f32 %v3228, %v3286
    %v3315 = vadd.f32 %v3229, %v3287
    %v3316 = vadd.f32 %v3230, %v3288
    %v3317 = vadd.f32 %v3231, %v3289
    %v3318 = vadd.f32 %v3232, %v3290
    %v3319 = vadd.f32 %v3233, %v3291
    %v3320 = vadd.f32 %v3234, %v3292
    %v3321 = vadd.f32 %v3235, %v3293
    %v3322 = vadd.f32 %v3236, %v3294
    %v3323 = vadd.f32 %v3237, %v3295
    %v3324 = vadd.f32 %v3238, %v3296
    %v3325 = vadd.f32 %v3239, %v3297
    %s3326 = sadd.s32 32, %s2978
    %s3327 = scalar_lea.vmem [#allocation2], %s3326
    %v3328 = vld [vmem:[%s3327] sm:$0xff]
    %v3329 = vld [vmem:[%s3327 + $0x10] sm:$0xff]
    %v3330 = vld [vmem:[%s3327 + $0x20] sm:$0xff]
    %v3331 = vld [vmem:[%s3327 + $0x30] sm:$0xff]
    %v3332 = vld [vmem:[%s3327 + $0x40] sm:$0xff]
    %v3333 = vld [vmem:[%s3327 + $0x50] sm:$0xff]
    %v3334 = vld [vmem:[%s3327 + $0x60] sm:$0xff]
    %v3335 = vld [vmem:[%s3327 + $0x70] sm:$0xff]
    %v3336 = vld [vmem:[%s3327 + $0x80] sm:$0xff]
    %v3337 = vld [vmem:[%s3327 + $0x90] sm:$0xff]
    %v3338 = vld [vmem:[%s3327 + $0xa0] sm:$0xff]
    %v3339 = vld [vmem:[%s3327 + $0xb0] sm:$0xff]
    %v3340 = vld [vmem:[%s3327 + $0xc0] sm:$0xff]
    %v3341 = vld [vmem:[%s3327 + $0xd0] sm:$0xff]
    %v3342 = vld [vmem:[%s3327 + $0xe0] sm:$0xff]
    %v3343 = vld [vmem:[%s3327 + $0xf0] sm:$0xff]
    %v3344 = vld [vmem:[%s3327 + $0x100] sm:$0xff]
    %v3345 = vld [vmem:[%s3327 + $0x110] sm:$0xff]
    %v3346 = vld [vmem:[%s3327 + $0x120] sm:$0xff]
    %v3347 = vld [vmem:[%s3327 + $0x130] sm:$0xff]
    %v3348 = vld [vmem:[%s3327 + $0x140] sm:$0xff]
    %v3349 = vld [vmem:[%s3327 + $0x150] sm:$0xff]
    %v3350 = vld [vmem:[%s3327 + $0x160] sm:$0xff]
    %v3351 = vld [vmem:[%s3327 + $0x170] sm:$0xff]
    %v3352 = vld [vmem:[%s3327 + $0x180] sm:$0xff]
    %v3353 = vld [vmem:[%s3327 + $0x190] sm:$0xff]
    %v3354 = vld [vmem:[%s3327 + $0x1a0] sm:$0xff]
    %v3355 = vld [vmem:[%s3327 + $0x1b0] sm:$0xff]
    %s3356 = scalar_lea.vmem %s3, 128
    %v3357 = vld [vmem:[%s3356] sm:$0xff]
    %v3358 = vmul.f32 %v3328, %v3357
    %v3359 = vmul.f32 %v3329, %v3357
    %v3360 = vmul.f32 %v3330, %v3357
    %v3361 = vmul.f32 %v3331, %v3357
    %v3362 = vmul.f32 %v3332, %v3357
    %v3363 = vmul.f32 %v3333, %v3357
    %v3364 = vmul.f32 %v3334, %v3357
    %v3365 = vmul.f32 %v3335, %v3357
    %v3366 = vmul.f32 %v3336, %v3357
    %v3367 = vmul.f32 %v3337, %v3357
    %v3368 = vmul.f32 %v3338, %v3357
    %v3369 = vmul.f32 %v3339, %v3357
    %v3370 = vmul.f32 %v3340, %v3357
    %v3371 = vmul.f32 %v3341, %v3357
    %v3372 = vmul.f32 %v3342, %v3357
    %v3373 = vmul.f32 %v3343, %v3357
    %v3374 = vmul.f32 %v3344, %v3357
    %v3375 = vmul.f32 %v3345, %v3357
    %v3376 = vmul.f32 %v3346, %v3357
    %v3377 = vmul.f32 %v3347, %v3357
    %v3378 = vmul.f32 %v3348, %v3357
    %v3379 = vmul.f32 %v3349, %v3357
    %v3380 = vmul.f32 %v3350, %v3357
    %v3381 = vmul.f32 %v3351, %v3357
    %v3382 = vmul.f32 %v3352, %v3357
    %v3383 = vmul.f32 %v3353, %v3357
    %v3384 = vmul.f32 %v3354, %v3357
    %v3385 = vmul.f32 %v3355, %v3357
    %v3386 = vadd.f32 %v3298, %v3358
    %v3387 = vadd.f32 %v3299, %v3359
    %v3388 = vadd.f32 %v3300, %v3360
    %v3389 = vadd.f32 %v3301, %v3361
    %v3390 = vadd.f32 %v3302, %v3362
    %v3391 = vadd.f32 %v3303, %v3363
    %v3392 = vadd.f32 %v3304, %v3364
    %v3393 = vadd.f32 %v3305, %v3365
    %v3394 = vadd.f32 %v3306, %v3366
    %v3395 = vadd.f32 %v3307, %v3367
    %v3396 = vadd.f32 %v3308, %v3368
    %v3397 = vadd.f32 %v3309, %v3369
    %v3398 = vadd.f32 %v3310, %v3370
    %v3399 = vadd.f32 %v3311, %v3371
    %v3400 = vadd.f32 %v3312, %v3372
    %v3401 = vadd.f32 %v3313, %v3373
    %v3402 = vadd.f32 %v3314, %v3374
    %v3403 = vadd.f32 %v3315, %v3375
    %v3404 = vadd.f32 %v3316, %v3376
    %v3405 = vadd.f32 %v3317, %v3377
    %v3406 = vadd.f32 %v3318, %v3378
    %v3407 = vadd.f32 %v3319, %v3379
    %v3408 = vadd.f32 %v3320, %v3380
    %v3409 = vadd.f32 %v3321, %v3381
    %v3410 = vadd.f32 %v3322, %v3382
    %v3411 = vadd.f32 %v3323, %v3383
    %v3412 = vadd.f32 %v3324, %v3384
    %v3413 = vadd.f32 %v3325, %v3385
    %v3414 = vld [vmem:[%s3327 + $0x8] sm:$0xff]
    %v3415 = vld [vmem:[%s3327 + $0x18] sm:$0xff]
    %v3416 = vld [vmem:[%s3327 + $0x28] sm:$0xff]
    %v3417 = vld [vmem:[%s3327 + $0x38] sm:$0xff]
    %v3418 = vld [vmem:[%s3327 + $0x48] sm:$0xff]
    %v3419 = vld [vmem:[%s3327 + $0x58] sm:$0xff]
    %v3420 = vld [vmem:[%s3327 + $0x68] sm:$0xff]
    %v3421 = vld [vmem:[%s3327 + $0x78] sm:$0xff]
    %v3422 = vld [vmem:[%s3327 + $0x88] sm:$0xff]
    %v3423 = vld [vmem:[%s3327 + $0x98] sm:$0xff]
    %v3424 = vld [vmem:[%s3327 + $0xa8] sm:$0xff]
    %v3425 = vld [vmem:[%s3327 + $0xb8] sm:$0xff]
    %v3426 = vld [vmem:[%s3327 + $0xc8] sm:$0xff]
    %v3427 = vld [vmem:[%s3327 + $0xd8] sm:$0xff]
    %v3428 = vld [vmem:[%s3327 + $0xe8] sm:$0xff]
    %v3429 = vld [vmem:[%s3327 + $0xf8] sm:$0xff]
    %v3430 = vld [vmem:[%s3327 + $0x108] sm:$0xff]
    %v3431 = vld [vmem:[%s3327 + $0x118] sm:$0xff]
    %v3432 = vld [vmem:[%s3327 + $0x128] sm:$0xff]
    %v3433 = vld [vmem:[%s3327 + $0x138] sm:$0xff]
    %v3434 = vld [vmem:[%s3327 + $0x148] sm:$0xff]
    %v3435 = vld [vmem:[%s3327 + $0x158] sm:$0xff]
    %v3436 = vld [vmem:[%s3327 + $0x168] sm:$0xff]
    %v3437 = vld [vmem:[%s3327 + $0x178] sm:$0xff]
    %v3438 = vld [vmem:[%s3327 + $0x188] sm:$0xff]
    %v3439 = vld [vmem:[%s3327 + $0x198] sm:$0xff]
    %v3440 = vld [vmem:[%s3327 + $0x1a8] sm:$0xff]
    %v3441 = vld [vmem:[%s3327 + $0x1b8] sm:$0xff]
    %s3442 = scalar_lea.vmem %s3, 136
    %v3443 = vld [vmem:[%s3442] sm:$0xff]
    %v3444 = vmul.f32 %v3414, %v3443
    %v3445 = vmul.f32 %v3415, %v3443
    %v3446 = vmul.f32 %v3416, %v3443
    %v3447 = vmul.f32 %v3417, %v3443
    %v3448 = vmul.f32 %v3418, %v3443
    %v3449 = vmul.f32 %v3419, %v3443
    %v3450 = vmul.f32 %v3420, %v3443
    %v3451 = vmul.f32 %v3421, %v3443
    %v3452 = vmul.f32 %v3422, %v3443
    %v3453 = vmul.f32 %v3423, %v3443
    %v3454 = vmul.f32 %v3424, %v3443
    %v3455 = vmul.f32 %v3425, %v3443
    %v3456 = vmul.f32 %v3426, %v3443
    %v3457 = vmul.f32 %v3427, %v3443
    %v3458 = vmul.f32 %v3428, %v3443
    %v3459 = vmul.f32 %v3429, %v3443
    %v3460 = vmul.f32 %v3430, %v3443
    %v3461 = vmul.f32 %v3431, %v3443
    %v3462 = vmul.f32 %v3432, %v3443
    %v3463 = vmul.f32 %v3433, %v3443
    %v3464 = vmul.f32 %v3434, %v3443
    %v3465 = vmul.f32 %v3435, %v3443
    %v3466 = vmul.f32 %v3436, %v3443
    %v3467 = vmul.f32 %v3437, %v3443
    %v3468 = vmul.f32 %v3438, %v3443
    %v3469 = vmul.f32 %v3439, %v3443
    %v3470 = vmul.f32 %v3440, %v3443
    %v3471 = vmul.f32 %v3441, %v3443
    %v3472 = vadd.f32 %v3386, %v3444
    %v3473 = vadd.f32 %v3387, %v3445
    %v3474 = vadd.f32 %v3388, %v3446
    %v3475 = vadd.f32 %v3389, %v3447
    %v3476 = vadd.f32 %v3390, %v3448
    %v3477 = vadd.f32 %v3391, %v3449
    %v3478 = vadd.f32 %v3392, %v3450
    %v3479 = vadd.f32 %v3393, %v3451
    %v3480 = vadd.f32 %v3394, %v3452
    %v3481 = vadd.f32 %v3395, %v3453
    %v3482 = vadd.f32 %v3396, %v3454
    %v3483 = vadd.f32 %v3397, %v3455
    %v3484 = vadd.f32 %v3398, %v3456
    %v3485 = vadd.f32 %v3399, %v3457
    %v3486 = vadd.f32 %v3400, %v3458
    %v3487 = vadd.f32 %v3401, %v3459
    %v3488 = vadd.f32 %v3402, %v3460
    %v3489 = vadd.f32 %v3403, %v3461
    %v3490 = vadd.f32 %v3404, %v3462
    %v3491 = vadd.f32 %v3405, %v3463
    %v3492 = vadd.f32 %v3406, %v3464
    %v3493 = vadd.f32 %v3407, %v3465
    %v3494 = vadd.f32 %v3408, %v3466
    %v3495 = vadd.f32 %v3409, %v3467
    %v3496 = vadd.f32 %v3410, %v3468
    %v3497 = vadd.f32 %v3411, %v3469
    %v3498 = vadd.f32 %v3412, %v3470
    %v3499 = vadd.f32 %v3413, %v3471
    %v3500 = vrot.slane %v3472, 4
    %v3501 = vadd.f32 %v3472, %v3500
    %v3502 = vrot.slane %v3501, 2
    %v3503 = vadd.f32 %v3501, %v3502
    %v3504 = vrot.slane %v3503, 1
    %v3505 = vadd.f32 %v3503, %v3504
    %v3506 = vrot.slane %v3473, 4
    %v3507 = vadd.f32 %v3473, %v3506
    %v3508 = vrot.slane %v3507, 2
    %v3509 = vadd.f32 %v3507, %v3508
    %v3510 = vrot.slane %v3509, 1
    %v3511 = vadd.f32 %v3509, %v3510
    %v3512 = vrot.slane %v3474, 4
    %v3513 = vadd.f32 %v3474, %v3512
    %v3514 = vrot.slane %v3513, 2
    %v3515 = vadd.f32 %v3513, %v3514
    %v3516 = vrot.slane %v3515, 1
    %v3517 = vadd.f32 %v3515, %v3516
    %v3518 = vrot.slane %v3475, 4
    %v3519 = vadd.f32 %v3475, %v3518
    %v3520 = vrot.slane %v3519, 2
    %v3521 = vadd.f32 %v3519, %v3520
    %v3522 = vrot.slane %v3521, 1
    %v3523 = vadd.f32 %v3521, %v3522
    %v3524 = vrot.slane %v3476, 4
    %v3525 = vadd.f32 %v3476, %v3524
    %v3526 = vrot.slane %v3525, 2
    %v3527 = vadd.f32 %v3525, %v3526
    %v3528 = vrot.slane %v3527, 1
    %v3529 = vadd.f32 %v3527, %v3528
    %v3530 = vrot.slane %v3477, 4
    %v3531 = vadd.f32 %v3477, %v3530
    %v3532 = vrot.slane %v3531, 2
    %v3533 = vadd.f32 %v3531, %v3532
    %v3534 = vrot.slane %v3533, 1
    %v3535 = vadd.f32 %v3533, %v3534
    %v3536 = vrot.slane %v3478, 4
    %v3537 = vadd.f32 %v3478, %v3536
    %v3538 = vrot.slane %v3537, 2
    %v3539 = vadd.f32 %v3537, %v3538
    %v3540 = vrot.slane %v3539, 1
    %v3541 = vadd.f32 %v3539, %v3540
    %v3542 = vrot.slane %v3479, 4
    %v3543 = vadd.f32 %v3479, %v3542
    %v3544 = vrot.slane %v3543, 2
    %v3545 = vadd.f32 %v3543, %v3544
    %v3546 = vrot.slane %v3545, 1
    %v3547 = vadd.f32 %v3545, %v3546
    %v3548 = vrot.slane %v3480, 4
    %v3549 = vadd.f32 %v3480, %v3548
    %v3550 = vrot.slane %v3549, 2
    %v3551 = vadd.f32 %v3549, %v3550
    %v3552 = vrot.slane %v3551, 1
    %v3553 = vadd.f32 %v3551, %v3552
    %v3554 = vrot.slane %v3481, 4
    %v3555 = vadd.f32 %v3481, %v3554
    %v3556 = vrot.slane %v3555, 2
    %v3557 = vadd.f32 %v3555, %v3556
    %v3558 = vrot.slane %v3557, 1
    %v3559 = vadd.f32 %v3557, %v3558
    %v3560 = vrot.slane %v3482, 4
    %v3561 = vadd.f32 %v3482, %v3560
    %v3562 = vrot.slane %v3561, 2
    %v3563 = vadd.f32 %v3561, %v3562
    %v3564 = vrot.slane %v3563, 1
    %v3565 = vadd.f32 %v3563, %v3564
    %v3566 = vrot.slane %v3483, 4
    %v3567 = vadd.f32 %v3483, %v3566
    %v3568 = vrot.slane %v3567, 2
    %v3569 = vadd.f32 %v3567, %v3568
    %v3570 = vrot.slane %v3569, 1
    %v3571 = vadd.f32 %v3569, %v3570
    %v3572 = vrot.slane %v3484, 4
    %v3573 = vadd.f32 %v3484, %v3572
    %v3574 = vrot.slane %v3573, 2
    %v3575 = vadd.f32 %v3573, %v3574
    %v3576 = vrot.slane %v3575, 1
    %v3577 = vadd.f32 %v3575, %v3576
    %v3578 = vrot.slane %v3485, 4
    %v3579 = vadd.f32 %v3485, %v3578
    %v3580 = vrot.slane %v3579, 2
    %v3581 = vadd.f32 %v3579, %v3580
    %v3582 = vrot.slane %v3581, 1
    %v3583 = vadd.f32 %v3581, %v3582
    %v3584 = vrot.slane %v3486, 4
    %v3585 = vadd.f32 %v3486, %v3584
    %v3586 = vrot.slane %v3585, 2
    %v3587 = vadd.f32 %v3585, %v3586
    %v3588 = vrot.slane %v3587, 1
    %v3589 = vadd.f32 %v3587, %v3588
    %v3590 = vrot.slane %v3487, 4
    %v3591 = vadd.f32 %v3487, %v3590
    %v3592 = vrot.slane %v3591, 2
    %v3593 = vadd.f32 %v3591, %v3592
    %v3594 = vrot.slane %v3593, 1
    %v3595 = vadd.f32 %v3593, %v3594
    %v3596 = vrot.slane %v3488, 4
    %v3597 = vadd.f32 %v3488, %v3596
    %v3598 = vrot.slane %v3597, 2
    %v3599 = vadd.f32 %v3597, %v3598
    %v3600 = vrot.slane %v3599, 1
    %v3601 = vadd.f32 %v3599, %v3600
    %v3602 = vrot.slane %v3489, 4
    %v3603 = vadd.f32 %v3489, %v3602
    %v3604 = vrot.slane %v3603, 2
    %v3605 = vadd.f32 %v3603, %v3604
    %v3606 = vrot.slane %v3605, 1
    %v3607 = vadd.f32 %v3605, %v3606
    %v3608 = vrot.slane %v3490, 4
    %v3609 = vadd.f32 %v3490, %v3608
    %v3610 = vrot.slane %v3609, 2
    %v3611 = vadd.f32 %v3609, %v3610
    %v3612 = vrot.slane %v3611, 1
    %v3613 = vadd.f32 %v3611, %v3612
    %v3614 = vrot.slane %v3491, 4
    %v3615 = vadd.f32 %v3491, %v3614
    %v3616 = vrot.slane %v3615, 2
    %v3617 = vadd.f32 %v3615, %v3616
    %v3618 = vrot.slane %v3617, 1
    %v3619 = vadd.f32 %v3617, %v3618
    %v3620 = vrot.slane %v3492, 4
    %v3621 = vadd.f32 %v3492, %v3620
    %v3622 = vrot.slane %v3621, 2
    %v3623 = vadd.f32 %v3621, %v3622
    %v3624 = vrot.slane %v3623, 1
    %v3625 = vadd.f32 %v3623, %v3624
    %v3626 = vrot.slane %v3493, 4
    %v3627 = vadd.f32 %v3493, %v3626
    %v3628 = vrot.slane %v3627, 2
    %v3629 = vadd.f32 %v3627, %v3628
    %v3630 = vrot.slane %v3629, 1
    %v3631 = vadd.f32 %v3629, %v3630
    %v3632 = vrot.slane %v3494, 4
    %v3633 = vadd.f32 %v3494, %v3632
    %v3634 = vrot.slane %v3633, 2
    %v3635 = vadd.f32 %v3633, %v3634
    %v3636 = vrot.slane %v3635, 1
    %v3637 = vadd.f32 %v3635, %v3636
    %v3638 = vrot.slane %v3495, 4
    %v3639 = vadd.f32 %v3495, %v3638
    %v3640 = vrot.slane %v3639, 2
    %v3641 = vadd.f32 %v3639, %v3640
    %v3642 = vrot.slane %v3641, 1
    %v3643 = vadd.f32 %v3641, %v3642
    %v3644 = vrot.slane %v3496, 4
    %v3645 = vadd.f32 %v3496, %v3644
    %v3646 = vrot.slane %v3645, 2
    %v3647 = vadd.f32 %v3645, %v3646
    %v3648 = vrot.slane %v3647, 1
    %v3649 = vadd.f32 %v3647, %v3648
    %v3650 = vrot.slane %v3497, 4
    %v3651 = vadd.f32 %v3497, %v3650
    %v3652 = vrot.slane %v3651, 2
    %v3653 = vadd.f32 %v3651, %v3652
    %v3654 = vrot.slane %v3653, 1
    %v3655 = vadd.f32 %v3653, %v3654
    %v3656 = vrot.slane %v3498, 4
    %v3657 = vadd.f32 %v3498, %v3656
    %v3658 = vrot.slane %v3657, 2
    %v3659 = vadd.f32 %v3657, %v3658
    %v3660 = vrot.slane %v3659, 1
    %v3661 = vadd.f32 %v3659, %v3660
    %v3662 = vrot.slane %v3499, 4
    %v3663 = vadd.f32 %v3499, %v3662
    %v3664 = vrot.slane %v3663, 2
    %v3665 = vadd.f32 %v3663, %v3664
    %v3666 = vrot.slane %v3665, 1
    %v3667 = vadd.f32 %v3665, %v3666
    %v3668 = vstv %s21
    %v3669 = vadd.f32 %v3505, %v3668
    %v3670 = vadd.f32 %v3511, %v3668
    %v3671 = vadd.f32 %v3517, %v3668
    %v3672 = vadd.f32 %v3523, %v3668
    %v3673 = vadd.f32 %v3529, %v3668
    %v3674 = vadd.f32 %v3535, %v3668
    %v3675 = vadd.f32 %v3541, %v3668
    %v3676 = vadd.f32 %v3547, %v3668
    %v3677 = vadd.f32 %v3553, %v3668
    %v3678 = vadd.f32 %v3559, %v3668
    %v3679 = vadd.f32 %v3565, %v3668
    %v3680 = vadd.f32 %v3571, %v3668
    %v3681 = vadd.f32 %v3577, %v3668
    %v3682 = vadd.f32 %v3583, %v3668
    %v3683 = vadd.f32 %v3589, %v3668
    %v3684 = vadd.f32 %v3595, %v3668
    %v3685 = vadd.f32 %v3601, %v3668
    %v3686 = vadd.f32 %v3607, %v3668
    %v3687 = vadd.f32 %v3613, %v3668
    %v3688 = vadd.f32 %v3619, %v3668
    %v3689 = vadd.f32 %v3625, %v3668
    %v3690 = vadd.f32 %v3631, %v3668
    %v3691 = vadd.f32 %v3637, %v3668
    %v3692 = vadd.f32 %v3643, %v3668
    %v3693 = vadd.f32 %v3649, %v3668
    %v3694 = vadd.f32 %v3655, %v3668
    %v3695 = vadd.f32 %v3661, %v3668
    %v3696 = vadd.f32 %v3667, %v3668
    %v3697 = vmax.f32 %v3669, 0.0
    %v3698 = vmax.f32 %v3670, 0.0
    %v3699 = vmax.f32 %v3671, 0.0
    %v3700 = vmax.f32 %v3672, 0.0
    %v3701 = vmax.f32 %v3673, 0.0
    %v3702 = vmax.f32 %v3674, 0.0
    %v3703 = vmax.f32 %v3675, 0.0
    %v3704 = vmax.f32 %v3676, 0.0
    %v3705 = vmax.f32 %v3677, 0.0
    %v3706 = vmax.f32 %v3678, 0.0
    %v3707 = vmax.f32 %v3679, 0.0
    %v3708 = vmax.f32 %v3680, 0.0
    %v3709 = vmax.f32 %v3681, 0.0
    %v3710 = vmax.f32 %v3682, 0.0
    %v3711 = vmax.f32 %v3683, 0.0
    %v3712 = vmax.f32 %v3684, 0.0
    %v3713 = vmax.f32 %v3685, 0.0
    %v3714 = vmax.f32 %v3686, 0.0
    %v3715 = vmax.f32 %v3687, 0.0
    %v3716 = vmax.f32 %v3688, 0.0
    %v3717 = vmax.f32 %v3689, 0.0
    %v3718 = vmax.f32 %v3690, 0.0
    %v3719 = vmax.f32 %v3691, 0.0
    %v3720 = vmax.f32 %v3692, 0.0
    %v3721 = vmax.f32 %v3693, 0.0
    %v3722 = vmax.f32 %v3694, 0.0
    %v3723 = vmax.f32 %v3695, 0.0
    %v3724 = vmax.f32 %v3696, 0.0
    %vm3753 = vcmask 1041409
    %v3754 = vsel %vm3753, %v3698, %v3697
    %vm3755 = vcmask 1042434
    %v3756 = vsel %vm3755, %v3699, %v3754
    %vm3757 = vcmask 1043459
    %v3758 = vsel %vm3757, %v3700, %v3756
    %vm3759 = vcmask 1044484
    %v3760 = vsel %vm3759, %v3701, %v3758
    %vm3761 = vcmask 1045509
    %v3762 = vsel %vm3761, %v3702, %v3760
    %vm3763 = vcmask 1046534
    %v3764 = vsel %vm3763, %v3703, %v3762
    %vm3765 = vcmask 1047559
    %v3766 = vsel %vm3765, %v3704, %v3764
    %v3767 = vsel %vm3753, %v3706, %v3705
    %v3768 = vsel %vm3755, %v3707, %v3767
    %v3769 = vsel %vm3757, %v3708, %v3768
    %v3770 = vsel %vm3759, %v3709, %v3769
    %v3771 = vsel %vm3761, %v3710, %v3770
    %v3772 = vsel %vm3763, %v3711, %v3771
    %v3773 = vsel %vm3765, %v3712, %v3772
    %v3774 = vsel %vm3753, %v3714, %v3713
    %v3775 = vsel %vm3755, %v3715, %v3774
    %v3776 = vsel %vm3757, %v3716, %v3775
    %v3777 = vsel %vm3759, %v3717, %v3776
    %v3778 = vsel %vm3761, %v3718, %v3777
    %v3779 = vsel %vm3763, %v3719, %v3778
    %v3780 = vsel %vm3765, %v3720, %v3779
    %v3781 = vsel %vm3753, %v3722, %v3721
    %v3782 = vsel %vm3755, %v3723, %v3781
    %v3783 = vsel %vm3757, %v3724, %v3782
    %s3788 = smul.u32 %s1956, 32
    %s3789 = scalar_lea.vmem %s5, %s3788
    %3790 = vst [vmem:[%s3789] sm:$0xff] %v3766
    %3791 = vst [vmem:[%s3789 + $0x8] sm:$0xff] %v3773
    %3792 = vst [vmem:[%s3789 + $0x10] sm:$0xff] %v3780
    %3793 = vst [vmem:[%s3789 + $0x18] sm:$0xf] %v3783
  $region33: #{neuralnet_forward.1} parent=0 // loop_footer
    %s1960 = sadd.s32 1, %s1956
  $region34: #{neuralnet_forward.1} parent=0 // loop_footer_branch
    %1955 = sbr.rel target = $region30
  $region35: #{neuralnet_forward.1} parent=0 // loop_exit
    _
  // Predicated region
  $region36: #{neuralnet_forward.1} parent=0 // pred_check
    _
  $region37: #{neuralnet_forward.1} parent=0 // pred_check_branch
    %3795 = sbr.rel (0) target = $region39
  $region38: #{neuralnet_forward.1} parent=0 // pred_region
    _
  $region39: #{neuralnet_forward.1} parent=0 // pred_fallthru
    _
  // Predicated region
  $region40: #{neuralnet_forward.1} parent=0 // pred_check
    _
  $region41: #{neuralnet_forward.1} parent=0 // pred_check_branch
    %3797 = sbr.rel (0) target = $region43
  $region42: #{neuralnet_forward.1} parent=0 // pred_region
    _
  $region43: #{neuralnet_forward.1} parent=0 // pred_fallthru
    _

</llo_original>
